<compile_context>
chip_gen: v7x
topology: tpu7x:2x2x1
jax: 0.10.0
libtpu: 0.0.40
codegen_flags: <defaults>
</compile_context>

<pallas_src>
import jax
import jax.numpy as jnp
from jax import lax
from jax.experimental import pallas as pl
from jax.experimental.pallas import tpu as pltpu

_EPS = 1e-5
# Tap order matches a (3, 3, Cin, Cout) HWIO weight reshaped to (9, Cin, Cout):
# t = (dy + 1) * 3 + (dx + 1).
_TAPS = tuple((dy, dx) for dy in (-1, 0, 1) for dx in (-1, 0, 1))


def _vmem_capacity_bytes():
    try:
        return int(pltpu.get_tpu_info().vmem_capacity_bytes)
    except Exception:
        return 64 * 1024 * 1024          # conservative (v7x-sized) default


def _pick_block_images(N, C, keep_grid_ge2):
    """Images per grid block: prefer Nb*C a multiple of 8 (fill sublanes); optionally
    keep the batch grid length >= 2 so both v7x TensorCores get work."""
    divs = [d for d in range(1, N + 1) if N % d == 0]
    filled = [d for d in divs if (d * C) % 8 == 0]
    if filled and (not keep_grid_ge2 or N // filled[0] >= 2):
        return filled[0]
    if keep_grid_ge2 and N >= 2:
        ok = [d for d in divs if N // d >= 2]
        filled_ok = [d for d in ok if (d * C) % 8 == 0]
        return filled_ok[0] if filled_ok else max(ok)
    return filled[0] if filled else 1


def _make_image_ops(C, H, W):
    """Per-image helpers shared by the fused and two-pass kernels (all on (C, HW))."""
    HW = H * W
    inv_hw = 1.0 / float(HW)

    def build_masks():
        # Validity masks (zero padding) for the 8 non-center taps, built from iota —
        # nothing DMA'd or kept resident.  Cyclic roll + mask is exact for a 3x3 /
        # stride-1 window: every wrapped lane (|dy*W + dx| <= W + 1 < H*W) is also an
        # out-of-image tap and hence masked to zero.
        pos = lax.broadcasted_iota(jnp.int32, (1, HW), 1)
        if (W & (W - 1)) == 0:
            col = jnp.bitwise_and(pos, W - 1)
        else:
            col = lax.rem(pos, jnp.int32(W))
        f32 = jnp.float32
        row_ok = {-1: (pos >= W).astype(f32), 0: None,
                  1: (pos < (H - 1) * W).astype(f32)}
        col_ok = {-1: (col != 0).astype(f32), 0: None,
                  1: (col != (W - 1)).astype(f32)}
        masks = []
        for dy, dx in _TAPS:
            r, c = row_ok[dy], col_ok[dx]
            if r is None and c is None:
                masks.append(None)
            elif r is None:
                masks.append(c)
            elif c is None:
                masks.append(r)
            else:
                masks.append(r * c)
        return masks

    def conv3x3(xn, w_ref, b_col, masks):
        # xn: (C, HW) f32;  w_ref: (9, Cin, Cout, 1) VMEM ref so w_ref[t, ci] is a
        # (Cout, 1) column;  b_col: (C, 1).
        # One broadcasted FMA per (tap, input channel): 9*C vector ops on (C, HW)
        # operands instead of 9*C*C scalar-weighted (1, HW) ops.
        acc = None
        for t, (dy, dx) in enumerate(_TAPS):
            k = dy * W + dx
            s = xn if k == 0 else pltpu.roll(xn, shift=(-k) % HW, axis=1)
            m = masks[t]
            if m is not None:
                s = s * m
            for ci in range(C):
                term = s[ci:ci + 1, :] * w_ref[t, ci]
                acc = term if acc is None else acc + term
        return acc + b_col

    def image_forward(xn, w1_ref, b1_col, w2_ref, b2_col, masks):
        # conv1 -> InstanceNorm (centered two-pass variance) -> conv2 (+ BN partials)
        out1 = conv3x3(xn, w1_ref, b1_col, masks)
        m1 = jnp.sum(out1, axis=1, keepdims=True) * inv_hw
        d1 = out1 - m1
        v1 = jnp.sum(d1 * d1, axis=1, keepdims=True) * inv_hw
        out1 = d1 * lax.rsqrt(v1 + _EPS)
        out2 = conv3x3(out1, w2_ref, b2_col, masks)
        s = jnp.sum(out2, axis=1, keepdims=True)           # (C, 1) BN partial sum
        q = jnp.sum(out2 * out2, axis=1, keepdims=True)    # (C, 1) BN partial sumsq
        return out2, s, q

    return build_masks, image_forward


# ----------------------------- fused single-call path -----------------------------

def _make_fused_kernel(N, C, H, W, Nb):
    HW = H * W
    inv_cnt = 1.0 / float(N * HW)
    build_masks, image_forward = _make_image_ops(C, H, W)

    def kernel(x_ref, w1_ref, b1_ref, w2_ref, b2_ref, g_ref, bt_ref,
               o_ref, y_scr, stat_scr, aff_scr):
        # x_ref / o_ref : (Nb, C, HW) block for images [n*Nb, (n+1)*Nb)
        # y_scr         : (N, C, HW) persistent VMEM — pre-BN conv2 activations
        # stat_scr      : (2, C, 1)  running BN sum / sum-of-squares
        # aff_scr       : (2, C, 1)  finalized BN scale / shift
        p = pl.program_id(0)           # 0: compute + stats, 1: BN finalize + apply
        n = pl.program_id(1)

        @pl.when(p == 0)
        def _compute_phase():
            @pl.when(n == 0)
            def _():
                stat_scr[...] = jnp.zeros_like(stat_scr)

            masks = build_masks()
            b1c = b1_ref[...]
            b2c = b2_ref[...]
            s_tot = None
            q_tot = None
            for j in range(Nb):
                xj = x_ref[j].astype(jnp.float32)
                out2, s, q = image_forward(xj, w1_ref, b1c, w2_ref, b2c, masks)
                y_scr[n * Nb + j] = out2
                s_tot = s if s_tot is None else s_tot + s
                q_tot = q if q_tot is None else q_tot + q
            stat_scr[0] = stat_scr[0] + s_tot
            stat_scr[1] = stat_scr[1] + q_tot

        @pl.when(p == 1)
        def _apply_phase():
            @pl.when(n == 0)
            def _():
                mean = stat_scr[0] * inv_cnt
                var = stat_scr[1] * inv_cnt - mean * mean
                scale = g_ref[...] * lax.rsqrt(var + _EPS)
                aff_scr[0] = scale
                aff_scr[1] = bt_ref[...] - mean * scale
            scale = aff_scr[0]
            shift = aff_scr[1]
            for j in range(Nb):
                res = x_ref[j].astype(jnp.float32)
                o_ref[j] = (y_scr[n * Nb + j] * scale + shift + res).astype(o_ref.dtype)

    return kernel


@jax.jit
def _forward_fused(x_nchw, w1, b1, w2, b2, gamma, beta):
    N, C, H, W = x_nchw.shape
    HW = H * W
    Nb = _pick_block_images(N, C, keep_grid_ge2=False)
    NB = N // Nb

    x = x_nchw.reshape(N, C, HW)                            # no-op view, stays NCHW
    w1k = w1.reshape(9, C, C, 1).astype(jnp.float32)        # (t, ci, co, 1)
    w2k = w2.reshape(9, C, C, 1).astype(jnp.float32)
    b1k = b1.reshape(C, 1).astype(jnp.float32)
    b2k = b2.reshape(C, 1).astype(jnp.float32)
    gk = gamma.reshape(C, 1).astype(jnp.float32)
    btk = beta.reshape(C, 1).astype(jnp.float32)

    cap = _vmem_capacity_bytes()
    cparams = pltpu.CompilerParams(
        # BN statistics cross grid steps and the phase axis is ordered -> arbitrary.
        dimension_semantics=("arbitrary", "arbitrary"),
        vmem_limit_bytes=min(int(0.70 * cap), 100 * 1024 * 1024))

    wspec = pl.BlockSpec((9, C, C, 1), lambda p, n: (0, 0, 0, 0))
    cspec = pl.BlockSpec((C, 1), lambda p, n: (0, 0))

    out = pl.pallas_call(
        _make_fused_kernel(N, C, H, W, Nb),
        grid=(2, NB),
        in_specs=[
            pl.BlockSpec((Nb, C, HW), lambda p, n: (n, 0, 0)),   # x
            wspec, cspec, wspec, cspec,                          # w1 b1 w2 b2
            cspec, cspec,                                        # gamma beta
        ],
        # n*p keeps the output block pinned to 0 during phase 0 (never written there),
        # so only the real phase-1 data is ever written back to HBM.
        out_specs=pl.BlockSpec((Nb, C, HW), lambda p, n: (n * p, 0, 0)),
        out_shape=jax.ShapeDtypeStruct((N, C, HW), x_nchw.dtype),
        scratch_shapes=[
            pltpu.VMEM((N, C, HW), jnp.float32),   # resident pre-BN activations
            pltpu.VMEM((2, C, 1), jnp.float32),    # BN sum / sumsq
            pltpu.VMEM((2, C, 1), jnp.float32),    # BN scale / shift
        ],
        compiler_params=cparams,
    )(x, w1k, b1k, w2k, b2k, gk, btk)

    return out.reshape(N, C, H, W)


# ------------------------------- two-pass fallback --------------------------------

def _make_pass1_kernel(C, H, W, Nb):
    build_masks, image_forward = _make_image_ops(C, H, W)

    def kernel(x_ref, w1_ref, b1_ref, w2_ref, b2_ref, y_ref, stat_ref):
        # x_ref/y_ref: (Nb, C, HW); stat_ref: (2, C, 1) packed (sum, sumsq)
        masks = build_masks()
        b1c = b1_ref[...]
        b2c = b2_ref[...]
        s_tot = None
        q_tot = None
        for j in range(Nb):
            out2, s, q = image_forward(x_ref[j].astype(jnp.float32),
                                       w1_ref, b1c, w2_ref, b2c, masks)
            y_ref[j] = out2
            s_tot = s if s_tot is None else s_tot + s
            q_tot = q if q_tot is None else q_tot + q
        stat_ref[0] = s_tot
        stat_ref[1] = q_tot

    return kernel


def _pass2_kernel(y_ref, x_ref, sc_ref, sh_ref, o_ref):
    # Pure streaming: o = y * scale + shift + x (runs at HBM roofline).
    o_ref[...] = (y_ref[...] * sc_ref[...] + sh_ref[...]
                  + x_ref[...].astype(jnp.float32)).astype(o_ref.dtype)


@jax.jit
def _forward_two_pass(x_nchw, w1, b1, w2, b2, gamma, beta):
    N, C, H, W = x_nchw.shape
    HW = H * W
    Nb = _pick_block_images(N, C, keep_grid_ge2=True)   # keep both v7x TCs busy
    NB = N // Nb

    x = x_nchw.reshape(N, C, HW)
    w1k = w1.reshape(9, C, C, 1).astype(jnp.float32)
    w2k = w2.reshape(9, C, C, 1).astype(jnp.float32)
    b1k = b1.reshape(C, 1).astype(jnp.float32)
    b2k = b2.reshape(C, 1).astype(jnp.float32)

    cap = _vmem_capacity_bytes()
    cparams = pltpu.CompilerParams(
        dimension_semantics=("parallel",),
        vmem_limit_bytes=min(int(0.70 * cap), 64 * 1024 * 1024))

    wspec = pl.BlockSpec((9, C, C, 1), lambda n: (0, 0, 0, 0))
    cspec = pl.BlockSpec((C, 1), lambda n: (0, 0))

    # ---- pass 1: conv1 -> IN -> conv2 per block + packed partial BN stats ----
    y, stats = pl.pallas_call(
        _make_pass1_kernel(C, H, W, Nb),
        grid=(NB,),
        in_specs=[
            pl.BlockSpec((Nb, C, HW), lambda n: (n, 0, 0)),
            wspec, cspec, wspec, cspec,
        ],
        out_specs=[
            pl.BlockSpec((Nb, C, HW), lambda n: (n, 0, 0)),
            pl.BlockSpec((None, 2, C, 1), lambda n: (n, 0, 0, 0)),
        ],
        out_shape=[
            jax.ShapeDtypeStruct((N, C, HW), jnp.float32),
            jax.ShapeDtypeStruct((NB, 2, C, 1), jnp.float32),
        ],
        compiler_params=cparams,
    )(x, w1k, b1k, w2k, b2k)

    # ---- finalize global BatchNorm scale/shift ONCE (tiny reduction, wrapper side) ----
    count = float(N * HW)
    s = jnp.sum(stats[:, 0, :, 0], axis=0)
    q = jnp.sum(stats[:, 1, :, 0], axis=0)
    mean = s / count
    var = q / count - mean * mean
    scale = gamma.astype(jnp.float32) * lax.rsqrt(var + _EPS)
    shift = beta.astype(jnp.float32) - mean * scale
    sck = scale.reshape(C, 1)
    shk = shift.reshape(C, 1)

    # ---- pass 2: streaming affine + residual; dead y aliased to the output ----
    out_dtype = x_nchw.dtype
    io_alias = {0: 0} if out_dtype == jnp.float32 else {}
    out = pl.pallas_call(
        _pass2_kernel,
        grid=(NB,),
        in_specs=[
            pl.BlockSpec((Nb, C, HW), lambda n: (n, 0, 0)),   # y (pre-BN, dead after)
            pl.BlockSpec((Nb, C, HW), lambda n: (n, 0, 0)),   # x (residual)
            cspec, cspec,                                     # scale, shift
        ],
        out_specs=pl.BlockSpec((Nb, C, HW), lambda n: (n, 0, 0)),
        out_shape=jax.ShapeDtypeStruct((N, C, HW), out_dtype),
        input_output_aliases=io_alias,
        compiler_params=cparams,
    )(y, x, sck, shk)

    return out.reshape(N, C, H, W)


# ---------------------------------- dispatcher -------------------------------------

def residual_block_forward(x_nchw, w1, b1, w2, b2, gamma, beta, force_two_pass=False):
    """x_nchw: (N, C, H, W); conv weights in HWIO (3, 3, Cin, Cout). Returns NCHW."""
    N, C, H, W = x_nchw.shape
    HW = H * W
    Nb = _pick_block_images(N, C, keep_grid_ge2=False)
    # Fused-path residency: pre-BN VMEM scratch + double-buffered x/out blocks + slack.
    resident = 4 * N * C * HW + 4 * (4 * Nb * C * HW) + (2 << 20)
    budget = int(0.45 * _vmem_capacity_bytes())
    if force_two_pass or resident > budget:
        return _forward_two_pass(x_nchw, w1, b1, w2, b2, gamma, beta)
    return _forward_fused(x_nchw, w1, b1, w2, b2, gamma, beta)


# ----------------------------------- reference -------------------------------------

def residual_block_reference(x_nchw, w1, b1, w2, b2, gamma, beta):
    """Pure-JAX reference (same math) for a correctness cross-check."""
    x = jnp.transpose(x_nchw, (0, 2, 3, 1))
    dn = ('NHWC', 'HWIO', 'NHWC')
    out = lax.conv_general_dilated(x, w1, (1, 1), 'SAME', dimension_numbers=dn) + b1
    m = out.mean(axis=(1, 2), keepdims=True)
    v = ((out - m) ** 2).mean(axis=(1, 2), keepdims=True)
    out = (out - m) / jnp.sqrt(v + _EPS)
    out = lax.conv_general_dilated(out, w2, (1, 1), 'SAME', dimension_numbers=dn) + b2
    m = out.mean(axis=(0, 1, 2), keepdims=True)
    v = ((out - m) ** 2).mean(axis=(0, 1, 2), keepdims=True)
    out = (out - m) / jnp.sqrt(v + _EPS) * gamma + beta
    out = out + x
    return jnp.transpose(out, (0, 3, 1, 2))


if __name__ == "__main__":
    N, C, H, W = 2, 4, 16, 16          # in_channels == out_channels, stride == 1

    key = jax.random.PRNGKey(0)
    kx, kw1, kb1, kw2, kb2 = jax.random.split(key, 5)

    x = jax.random.normal(kx, (N, C, H, W), jnp.float32)
    w1 = jax.random.normal(kw1, (3, 3, C, C), jnp.float32) * 0.1   # HWIO
    b1 = jax.random.normal(kb1, (C,), jnp.float32) * 0.1
    w2 = jax.random.normal(kw2, (3, 3, C, C), jnp.float32) * 0.1   # HWIO
    b2 = jax.random.normal(kb2, (C,), jnp.float32) * 0.1
    gamma = jnp.ones((C,), jnp.float32)
    beta = jnp.zeros((C,), jnp.float32)

    ref = jax.block_until_ready(
        residual_block_reference(x, w1, b1, w2, b2, gamma, beta))

    # Default (fused) path.
    out_fused = jax.block_until_ready(
        residual_block_forward(x, w1, b1, w2, b2, gamma, beta))
    assert out_fused.shape == (N, C, H, W)
    assert jnp.allclose(out_fused, ref, atol=2e-4, rtol=2e-4), "fused path mismatch"

    # Two-pass fallback path (exercised explicitly so it stays correct).
    out_2p = jax.block_until_ready(
        residual_block_forward(x, w1, b1, w2, b2, gamma, beta, force_two_pass=True))
    assert jnp.allclose(out_2p, ref, atol=2e-4, rtol=2e-4), "two-pass path mismatch"

    print("KERNEL_OK")
</pallas_src>

<mosaic_0001>
module attributes {stable_mosaic.version = 11 : i64} {
  func.func @kernel(%arg0: i32, %arg1: i32, %arg2: memref<2x4x256xf32, #tpu.memory_space<vmem>>, %arg3: memref<9x4x4x1xf32, #tpu.memory_space<vmem>>, %arg4: memref<4x1xf32, #tpu.memory_space<vmem>>, %arg5: memref<9x4x4x1xf32, #tpu.memory_space<vmem>>, %arg6: memref<4x1xf32, #tpu.memory_space<vmem>>, %arg7: memref<4x1xf32, #tpu.memory_space<vmem>>, %arg8: memref<4x1xf32, #tpu.memory_space<vmem>>, %arg9: memref<2x4x256xf32, #tpu.memory_space<vmem>>, %arg10: memref<2x4x256xf32, #tpu.memory_space<vmem>>, %arg11: memref<2x4x1xf32, #tpu.memory_space<vmem>>, %arg12: memref<2x4x1xf32, #tpu.memory_space<vmem>>) attributes {dimension_semantics = [#tpu.dimension_semantics<arbitrary>, #tpu.dimension_semantics<arbitrary>], iteration_bounds = array<i64: 2, 1>, scalar_prefetch = 0 : i64, scratch_operands = 3 : i64, tpu.core_type = #tpu.core_type<tc>, window_params = [{transform_indices = @transform_0, window_bounds = array<i64: 2, 4, 256>}, {pipeline_mode = #tpu.pipeline_mode<synchronous>, transform_indices = @transform_1, window_bounds = array<i64: 9, 4, 4, 1>}, {pipeline_mode = #tpu.pipeline_mode<synchronous>, transform_indices = @transform_2, window_bounds = array<i64: 4, 1>}, {pipeline_mode = #tpu.pipeline_mode<synchronous>, transform_indices = @transform_3, window_bounds = array<i64: 9, 4, 4, 1>}, {pipeline_mode = #tpu.pipeline_mode<synchronous>, transform_indices = @transform_4, window_bounds = array<i64: 4, 1>}, {pipeline_mode = #tpu.pipeline_mode<synchronous>, transform_indices = @transform_5, window_bounds = array<i64: 4, 1>}, {pipeline_mode = #tpu.pipeline_mode<synchronous>, transform_indices = @transform_6, window_bounds = array<i64: 4, 1>}, {transform_indices = @transform_7, window_bounds = array<i64: 2, 4, 256>}]} {
    %c0_i32 = arith.constant 0 : i32
    %0 = arith.cmpi eq, %arg0, %c0_i32 : i32
    %1 = arith.extui %0 : i1 to i32
    %c0_i32_0 = arith.constant 0 : i32
    %2 = arith.cmpi ne, %1, %c0_i32_0 : i32
    scf.if %2 {
      %c0_i32_2 = arith.constant 0 : i32
      %6 = arith.cmpi eq, %arg1, %c0_i32_2 : i32
      %7 = arith.extui %6 : i1 to i32
      %c0_i32_3 = arith.constant 0 : i32
      %8 = arith.cmpi ne, %7, %c0_i32_3 : i32
      scf.if %8 {
        %cst_643 = arith.constant 0.000000e+00 : f32
        %1214 = vector.broadcast %cst_643 : f32 to vector<2x4x1xf32>
        %c0_644 = arith.constant 0 : index
        %c0_645 = arith.constant 0 : index
        %c0_646 = arith.constant 0 : index
        %1215 = vector.load %arg11[%c0_644, %c0_645, %c0_646] : memref<2x4x1xf32, #tpu.memory_space<vmem>>, vector<2x4x1xf32>
        tpu.vector_store %arg11[%c0_644, %c0_645, %c0_646], %1214 {strides = array<i32>} : memref<2x4x1xf32, #tpu.memory_space<vmem>>, vector<2x4x1xf32>,
      } else {
      }
      %9 = tpu.iota {dimensions = array<i32: 1>} : vector<1x256xi32>
      %c15_i32 = arith.constant 15 : i32
      %10 = vector.broadcast %c15_i32 : i32 to vector<1x256xi32>
      %11 = arith.andi %9, %10 : vector<1x256xi32>
      %c16_i32 = arith.constant 16 : i32
      %12 = vector.broadcast %c16_i32 : i32 to vector<1x256xi32>
      %13 = arith.cmpi sge, %9, %12 : vector<1x256xi32>
      %14 = arith.extui %13 : vector<1x256xi1> to vector<1x256xi32>
      %15 = arith.sitofp %14 : vector<1x256xi32> to vector<1x256xf32>
      %c240_i32 = arith.constant 240 : i32
      %16 = vector.broadcast %c240_i32 : i32 to vector<1x256xi32>
      %17 = arith.cmpi slt, %9, %16 : vector<1x256xi32>
      %18 = arith.extui %17 : vector<1x256xi1> to vector<1x256xi32>
      %19 = arith.sitofp %18 : vector<1x256xi32> to vector<1x256xf32>
      %c0_i32_4 = arith.constant 0 : i32
      %20 = vector.broadcast %c0_i32_4 : i32 to vector<1x256xi32>
      %21 = arith.cmpi ne, %11, %20 : vector<1x256xi32>
      %22 = arith.extui %21 : vector<1x256xi1> to vector<1x256xi32>
      %23 = arith.sitofp %22 : vector<1x256xi32> to vector<1x256xf32>
      %c15_i32_5 = arith.constant 15 : i32
      %24 = vector.broadcast %c15_i32_5 : i32 to vector<1x256xi32>
      %25 = arith.cmpi ne, %11, %24 : vector<1x256xi32>
      %26 = arith.extui %25 : vector<1x256xi1> to vector<1x256xi32>
      %27 = arith.sitofp %26 : vector<1x256xi32> to vector<1x256xf32>
      %28 = arith.mulf %15, %23 : vector<1x256xf32>
      %29 = arith.mulf %15, %27 : vector<1x256xf32>
      %30 = arith.mulf %19, %23 : vector<1x256xf32>
      %31 = arith.mulf %19, %27 : vector<1x256xf32>
      %c0 = arith.constant 0 : index
      %c0_6 = arith.constant 0 : index
      %32 = vector.load %arg4[%c0, %c0_6] : memref<4x1xf32, #tpu.memory_space<vmem>>, vector<4x1xf32>
      %c0_7 = arith.constant 0 : index
      %c0_8 = arith.constant 0 : index
      %33 = vector.load %arg6[%c0_7, %c0_8] : memref<4x1xf32, #tpu.memory_space<vmem>>, vector<4x1xf32>
      %c0_9 = arith.constant 0 : index
      %c0_10 = arith.constant 0 : index
      %c0_11 = arith.constant 0 : index
      %34 = vector.load %arg2[%c0_9, %c0_10, %c0_11] : memref<2x4x256xf32, #tpu.memory_space<vmem>>, vector<1x4x256xf32>
      %35 = vector.shape_cast %34 : vector<1x4x256xf32> to vector<4x256xf32>
      %c17_i32 = arith.constant 17 : i32
      %36 = tpu.dynamic_rotate %35 by %c17_i32 dim 1 : vector<4x256xf32>, i32 -> vector<4x256xf32>
      %37 = vector.broadcast %28 : vector<1x256xf32> to vector<4x256xf32>
      %38 = arith.mulf %36, %37 : vector<4x256xf32>
      %39 = vector.extract_strided_slice %38 {offsets = [0, 0], sizes = [1, 256], strides = [1, 1]} : vector<4x256xf32> to vector<1x256xf32>
      %c0_12 = arith.constant 0 : index
      %c0_13 = arith.constant 0 : index
      %c0_14 = arith.constant 0 : index
      %c0_15 = arith.constant 0 : index
      %40 = vector.load %arg3[%c0_12, %c0_13, %c0_14, %c0_15] : memref<9x4x4x1xf32, #tpu.memory_space<vmem>>, vector<1x1x4x1xf32>
      %41 = vector.shape_cast %40 : vector<1x1x4x1xf32> to vector<4x1xf32>
      %42 = vector.broadcast %39 : vector<1x256xf32> to vector<4x256xf32>
      %43 = vector.broadcast %41 : vector<4x1xf32> to vector<4x256xf32>
      %44 = arith.mulf %42, %43 : vector<4x256xf32>
      %45 = vector.extract_strided_slice %38 {offsets = [1, 0], sizes = [1, 256], strides = [1, 1]} : vector<4x256xf32> to vector<1x256xf32>
      %c0_16 = arith.constant 0 : index
      %c1 = arith.constant 1 : index
      %c0_17 = arith.constant 0 : index
      %c0_18 = arith.constant 0 : index
      %46 = vector.load %arg3[%c0_16, %c1, %c0_17, %c0_18] : memref<9x4x4x1xf32, #tpu.memory_space<vmem>>, vector<1x1x4x1xf32>
      %47 = vector.shape_cast %46 : vector<1x1x4x1xf32> to vector<4x1xf32>
      %48 = vector.broadcast %45 : vector<1x256xf32> to vector<4x256xf32>
      %49 = vector.broadcast %47 : vector<4x1xf32> to vector<4x256xf32>
      %50 = arith.mulf %48, %49 : vector<4x256xf32>
      %51 = arith.addf %44, %50 : vector<4x256xf32>
      %52 = vector.extract_strided_slice %38 {offsets = [2, 0], sizes = [1, 256], strides = [1, 1]} : vector<4x256xf32> to vector<1x256xf32>
      %c0_19 = arith.constant 0 : index
      %c2 = arith.constant 2 : index
      %c0_20 = arith.constant 0 : index
      %c0_21 = arith.constant 0 : index
      %53 = vector.load %arg3[%c0_19, %c2, %c0_20, %c0_21] : memref<9x4x4x1xf32, #tpu.memory_space<vmem>>, vector<1x1x4x1xf32>
      %54 = vector.shape_cast %53 : vector<1x1x4x1xf32> to vector<4x1xf32>
      %55 = vector.broadcast %52 : vector<1x256xf32> to vector<4x256xf32>
      %56 = vector.broadcast %54 : vector<4x1xf32> to vector<4x256xf32>
      %57 = arith.mulf %55, %56 : vector<4x256xf32>
      %58 = arith.addf %51, %57 : vector<4x256xf32>
      %59 = vector.extract_strided_slice %38 {offsets = [3, 0], sizes = [1, 256], strides = [1, 1]} : vector<4x256xf32> to vector<1x256xf32>
      %c0_22 = arith.constant 0 : index
      %c3 = arith.constant 3 : index
      %c0_23 = arith.constant 0 : index
      %c0_24 = arith.constant 0 : index
      %60 = vector.load %arg3[%c0_22, %c3, %c0_23, %c0_24] : memref<9x4x4x1xf32, #tpu.memory_space<vmem>>, vector<1x1x4x1xf32>
      %61 = vector.shape_cast %60 : vector<1x1x4x1xf32> to vector<4x1xf32>
      %62 = vector.broadcast %59 : vector<1x256xf32> to vector<4x256xf32>
      %63 = vector.broadcast %61 : vector<4x1xf32> to vector<4x256xf32>
      %64 = arith.mulf %62, %63 : vector<4x256xf32>
      %65 = arith.addf %58, %64 : vector<4x256xf32>
      %c16_i32_25 = arith.constant 16 : i32
      %66 = tpu.dynamic_rotate %35 by %c16_i32_25 dim 1 : vector<4x256xf32>, i32 -> vector<4x256xf32>
      %67 = vector.broadcast %15 : vector<1x256xf32> to vector<4x256xf32>
      %68 = arith.mulf %66, %67 : vector<4x256xf32>
      %69 = vector.extract_strided_slice %68 {offsets = [0, 0], sizes = [1, 256], strides = [1, 1]} : vector<4x256xf32> to vector<1x256xf32>
      %c1_26 = arith.constant 1 : index
      %c0_27 = arith.constant 0 : index
      %c0_28 = arith.constant 0 : index
      %c0_29 = arith.constant 0 : index
      %70 = vector.load %arg3[%c1_26, %c0_27, %c0_28, %c0_29] : memref<9x4x4x1xf32, #tpu.memory_space<vmem>>, vector<1x1x4x1xf32>
      %71 = vector.shape_cast %70 : vector<1x1x4x1xf32> to vector<4x1xf32>
      %72 = vector.broadcast %69 : vector<1x256xf32> to vector<4x256xf32>
      %73 = vector.broadcast %71 : vector<4x1xf32> to vector<4x256xf32>
      %74 = arith.mulf %72, %73 : vector<4x256xf32>
      %75 = arith.addf %65, %74 : vector<4x256xf32>
      %76 = vector.extract_strided_slice %68 {offsets = [1, 0], sizes = [1, 256], strides = [1, 1]} : vector<4x256xf32> to vector<1x256xf32>
      %c1_30 = arith.constant 1 : index
      %c1_31 = arith.constant 1 : index
      %c0_32 = arith.constant 0 : index
      %c0_33 = arith.constant 0 : index
      %77 = vector.load %arg3[%c1_30, %c1_31, %c0_32, %c0_33] : memref<9x4x4x1xf32, #tpu.memory_space<vmem>>, vector<1x1x4x1xf32>
      %78 = vector.shape_cast %77 : vector<1x1x4x1xf32> to vector<4x1xf32>
      %79 = vector.broadcast %76 : vector<1x256xf32> to vector<4x256xf32>
      %80 = vector.broadcast %78 : vector<4x1xf32> to vector<4x256xf32>
      %81 = arith.mulf %79, %80 : vector<4x256xf32>
      %82 = arith.addf %75, %81 : vector<4x256xf32>
      %83 = vector.extract_strided_slice %68 {offsets = [2, 0], sizes = [1, 256], strides = [1, 1]} : vector<4x256xf32> to vector<1x256xf32>
      %c1_34 = arith.constant 1 : index
      %c2_35 = arith.constant 2 : index
      %c0_36 = arith.constant 0 : index
      %c0_37 = arith.constant 0 : index
      %84 = vector.load %arg3[%c1_34, %c2_35, %c0_36, %c0_37] : memref<9x4x4x1xf32, #tpu.memory_space<vmem>>, vector<1x1x4x1xf32>
      %85 = vector.shape_cast %84 : vector<1x1x4x1xf32> to vector<4x1xf32>
      %86 = vector.broadcast %83 : vector<1x256xf32> to vector<4x256xf32>
      %87 = vector.broadcast %85 : vector<4x1xf32> to vector<4x256xf32>
      %88 = arith.mulf %86, %87 : vector<4x256xf32>
      %89 = arith.addf %82, %88 : vector<4x256xf32>
      %90 = vector.extract_strided_slice %68 {offsets = [3, 0], sizes = [1, 256], strides = [1, 1]} : vector<4x256xf32> to vector<1x256xf32>
      %c1_38 = arith.constant 1 : index
      %c3_39 = arith.constant 3 : index
      %c0_40 = arith.constant 0 : index
      %c0_41 = arith.constant 0 : index
      %91 = vector.load %arg3[%c1_38, %c3_39, %c0_40, %c0_41] : memref<9x4x4x1xf32, #tpu.memory_space<vmem>>, vector<1x1x4x1xf32>
      %92 = vector.shape_cast %91 : vector<1x1x4x1xf32> to vector<4x1xf32>
      %93 = vector.broadcast %90 : vector<1x256xf32> to vector<4x256xf32>
      %94 = vector.broadcast %92 : vector<4x1xf32> to vector<4x256xf32>
      %95 = arith.mulf %93, %94 : vector<4x256xf32>
      %96 = arith.addf %89, %95 : vector<4x256xf32>
      %c15_i32_42 = arith.constant 15 : i32
      %97 = tpu.dynamic_rotate %35 by %c15_i32_42 dim 1 : vector<4x256xf32>, i32 -> vector<4x256xf32>
      %98 = vector.broadcast %29 : vector<1x256xf32> to vector<4x256xf32>
      %99 = arith.mulf %97, %98 : vector<4x256xf32>
      %100 = vector.extract_strided_slice %99 {offsets = [0, 0], sizes = [1, 256], strides = [1, 1]} : vector<4x256xf32> to vector<1x256xf32>
      %c2_43 = arith.constant 2 : index
      %c0_44 = arith.constant 0 : index
      %c0_45 = arith.constant 0 : index
      %c0_46 = arith.constant 0 : index
      %101 = vector.load %arg3[%c2_43, %c0_44, %c0_45, %c0_46] : memref<9x4x4x1xf32, #tpu.memory_space<vmem>>, vector<1x1x4x1xf32>
      %102 = vector.shape_cast %101 : vector<1x1x4x1xf32> to vector<4x1xf32>
      %103 = vector.broadcast %100 : vector<1x256xf32> to vector<4x256xf32>
      %104 = vector.broadcast %102 : vector<4x1xf32> to vector<4x256xf32>
      %105 = arith.mulf %103, %104 : vector<4x256xf32>
      %106 = arith.addf %96, %105 : vector<4x256xf32>
      %107 = vector.extract_strided_slice %99 {offsets = [1, 0], sizes = [1, 256], strides = [1, 1]} : vector<4x256xf32> to vector<1x256xf32>
      %c2_47 = arith.constant 2 : index
      %c1_48 = arith.constant 1 : index
      %c0_49 = arith.constant 0 : index
      %c0_50 = arith.constant 0 : index
      %108 = vector.load %arg3[%c2_47, %c1_48, %c0_49, %c0_50] : memref<9x4x4x1xf32, #tpu.memory_space<vmem>>, vector<1x1x4x1xf32>
      %109 = vector.shape_cast %108 : vector<1x1x4x1xf32> to vector<4x1xf32>
      %110 = vector.broadcast %107 : vector<1x256xf32> to vector<4x256xf32>
      %111 = vector.broadcast %109 : vector<4x1xf32> to vector<4x256xf32>
      %112 = arith.mulf %110, %111 : vector<4x256xf32>
      %113 = arith.addf %106, %112 : vector<4x256xf32>
      %114 = vector.extract_strided_slice %99 {offsets = [2, 0], sizes = [1, 256], strides = [1, 1]} : vector<4x256xf32> to vector<1x256xf32>
      %c2_51 = arith.constant 2 : index
      %c2_52 = arith.constant 2 : index
      %c0_53 = arith.constant 0 : index
      %c0_54 = arith.constant 0 : index
      %115 = vector.load %arg3[%c2_51, %c2_52, %c0_53, %c0_54] : memref<9x4x4x1xf32, #tpu.memory_space<vmem>>, vector<1x1x4x1xf32>
      %116 = vector.shape_cast %115 : vector<1x1x4x1xf32> to vector<4x1xf32>
      %117 = vector.broadcast %114 : vector<1x256xf32> to vector<4x256xf32>
      %118 = vector.broadcast %116 : vector<4x1xf32> to vector<4x256xf32>
      %119 = arith.mulf %117, %118 : vector<4x256xf32>
      %120 = arith.addf %113, %119 : vector<4x256xf32>
      %121 = vector.extract_strided_slice %99 {offsets = [3, 0], sizes = [1, 256], strides = [1, 1]} : vector<4x256xf32> to vector<1x256xf32>
      %c2_55 = arith.constant 2 : index
      %c3_56 = arith.constant 3 : index
      %c0_57 = arith.constant 0 : index
      %c0_58 = arith.constant 0 : index
      %122 = vector.load %arg3[%c2_55, %c3_56, %c0_57, %c0_58] : memref<9x4x4x1xf32, #tpu.memory_space<vmem>>, vector<1x1x4x1xf32>
      %123 = vector.shape_cast %122 : vector<1x1x4x1xf32> to vector<4x1xf32>
      %124 = vector.broadcast %121 : vector<1x256xf32> to vector<4x256xf32>
      %125 = vector.broadcast %123 : vector<4x1xf32> to vector<4x256xf32>
      %126 = arith.mulf %124, %125 : vector<4x256xf32>
      %127 = arith.addf %120, %126 : vector<4x256xf32>
      %c1_i32_59 = arith.constant 1 : i32
      %128 = tpu.dynamic_rotate %35 by %c1_i32_59 dim 1 : vector<4x256xf32>, i32 -> vector<4x256xf32>
      %129 = vector.broadcast %23 : vector<1x256xf32> to vector<4x256xf32>
      %130 = arith.mulf %128, %129 : vector<4x256xf32>
      %131 = vector.extract_strided_slice %130 {offsets = [0, 0], sizes = [1, 256], strides = [1, 1]} : vector<4x256xf32> to vector<1x256xf32>
      %c3_60 = arith.constant 3 : index
      %c0_61 = arith.constant 0 : index
      %c0_62 = arith.constant 0 : index
      %c0_63 = arith.constant 0 : index
      %132 = vector.load %arg3[%c3_60, %c0_61, %c0_62, %c0_63] : memref<9x4x4x1xf32, #tpu.memory_space<vmem>>, vector<1x1x4x1xf32>
      %133 = vector.shape_cast %132 : vector<1x1x4x1xf32> to vector<4x1xf32>
      %134 = vector.broadcast %131 : vector<1x256xf32> to vector<4x256xf32>
      %135 = vector.broadcast %133 : vector<4x1xf32> to vector<4x256xf32>
      %136 = arith.mulf %134, %135 : vector<4x256xf32>
      %137 = arith.addf %127, %136 : vector<4x256xf32>
      %138 = vector.extract_strided_slice %130 {offsets = [1, 0], sizes = [1, 256], strides = [1, 1]} : vector<4x256xf32> to vector<1x256xf32>
      %c3_64 = arith.constant 3 : index
      %c1_65 = arith.constant 1 : index
      %c0_66 = arith.constant 0 : index
      %c0_67 = arith.constant 0 : index
      %139 = vector.load %arg3[%c3_64, %c1_65, %c0_66, %c0_67] : memref<9x4x4x1xf32, #tpu.memory_space<vmem>>, vector<1x1x4x1xf32>
      %140 = vector.shape_cast %139 : vector<1x1x4x1xf32> to vector<4x1xf32>
      %141 = vector.broadcast %138 : vector<1x256xf32> to vector<4x256xf32>
      %142 = vector.broadcast %140 : vector<4x1xf32> to vector<4x256xf32>
      %143 = arith.mulf %141, %142 : vector<4x256xf32>
      %144 = arith.addf %137, %143 : vector<4x256xf32>
      %145 = vector.extract_strided_slice %130 {offsets = [2, 0], sizes = [1, 256], strides = [1, 1]} : vector<4x256xf32> to vector<1x256xf32>
      %c3_68 = arith.constant 3 : index
      %c2_69 = arith.constant 2 : index
      %c0_70 = arith.constant 0 : index
      %c0_71 = arith.constant 0 : index
      %146 = vector.load %arg3[%c3_68, %c2_69, %c0_70, %c0_71] : memref<9x4x4x1xf32, #tpu.memory_space<vmem>>, vector<1x1x4x1xf32>
      %147 = vector.shape_cast %146 : vector<1x1x4x1xf32> to vector<4x1xf32>
      %148 = vector.broadcast %145 : vector<1x256xf32> to vector<4x256xf32>
      %149 = vector.broadcast %147 : vector<4x1xf32> to vector<4x256xf32>
      %150 = arith.mulf %148, %149 : vector<4x256xf32>
      %151 = arith.addf %144, %150 : vector<4x256xf32>
      %152 = vector.extract_strided_slice %130 {offsets = [3, 0], sizes = [1, 256], strides = [1, 1]} : vector<4x256xf32> to vector<1x256xf32>
      %c3_72 = arith.constant 3 : index
      %c3_73 = arith.constant 3 : index
      %c0_74 = arith.constant 0 : index
      %c0_75 = arith.constant 0 : index
      %153 = vector.load %arg3[%c3_72, %c3_73, %c0_74, %c0_75] : memref<9x4x4x1xf32, #tpu.memory_space<vmem>>, vector<1x1x4x1xf32>
      %154 = vector.shape_cast %153 : vector<1x1x4x1xf32> to vector<4x1xf32>
      %155 = vector.broadcast %152 : vector<1x256xf32> to vector<4x256xf32>
      %156 = vector.broadcast %154 : vector<4x1xf32> to vector<4x256xf32>
      %157 = arith.mulf %155, %156 : vector<4x256xf32>
      %158 = arith.addf %151, %157 : vector<4x256xf32>
      %159 = vector.extract_strided_slice %35 {offsets = [0, 0], sizes = [1, 256], strides = [1, 1]} : vector<4x256xf32> to vector<1x256xf32>
      %c4 = arith.constant 4 : index
      %c0_76 = arith.constant 0 : index
      %c0_77 = arith.constant 0 : index
      %c0_78 = arith.constant 0 : index
      %160 = vector.load %arg3[%c4, %c0_76, %c0_77, %c0_78] : memref<9x4x4x1xf32, #tpu.memory_space<vmem>>, vector<1x1x4x1xf32>
      %161 = vector.shape_cast %160 : vector<1x1x4x1xf32> to vector<4x1xf32>
      %162 = vector.broadcast %159 : vector<1x256xf32> to vector<4x256xf32>
      %163 = vector.broadcast %161 : vector<4x1xf32> to vector<4x256xf32>
      %164 = arith.mulf %162, %163 : vector<4x256xf32>
      %165 = arith.addf %158, %164 : vector<4x256xf32>
      %166 = vector.extract_strided_slice %35 {offsets = [1, 0], sizes = [1, 256], strides = [1, 1]} : vector<4x256xf32> to vector<1x256xf32>
      %c4_79 = arith.constant 4 : index
      %c1_80 = arith.constant 1 : index
      %c0_81 = arith.constant 0 : index
      %c0_82 = arith.constant 0 : index
      %167 = vector.load %arg3[%c4_79, %c1_80, %c0_81, %c0_82] : memref<9x4x4x1xf32, #tpu.memory_space<vmem>>, vector<1x1x4x1xf32>
      %168 = vector.shape_cast %167 : vector<1x1x4x1xf32> to vector<4x1xf32>
      %169 = vector.broadcast %166 : vector<1x256xf32> to vector<4x256xf32>
      %170 = vector.broadcast %168 : vector<4x1xf32> to vector<4x256xf32>
      %171 = arith.mulf %169, %170 : vector<4x256xf32>
      %172 = arith.addf %165, %171 : vector<4x256xf32>
      %173 = vector.extract_strided_slice %35 {offsets = [2, 0], sizes = [1, 256], strides = [1, 1]} : vector<4x256xf32> to vector<1x256xf32>
      %c4_83 = arith.constant 4 : index
      %c2_84 = arith.constant 2 : index
      %c0_85 = arith.constant 0 : index
      %c0_86 = arith.constant 0 : index
      %174 = vector.load %arg3[%c4_83, %c2_84, %c0_85, %c0_86] : memref<9x4x4x1xf32, #tpu.memory_space<vmem>>, vector<1x1x4x1xf32>
      %175 = vector.shape_cast %174 : vector<1x1x4x1xf32> to vector<4x1xf32>
      %176 = vector.broadcast %173 : vector<1x256xf32> to vector<4x256xf32>
      %177 = vector.broadcast %175 : vector<4x1xf32> to vector<4x256xf32>
      %178 = arith.mulf %176, %177 : vector<4x256xf32>
      %179 = arith.addf %172, %178 : vector<4x256xf32>
      %180 = vector.extract_strided_slice %35 {offsets = [3, 0], sizes = [1, 256], strides = [1, 1]} : vector<4x256xf32> to vector<1x256xf32>
      %c4_87 = arith.constant 4 : index
      %c3_88 = arith.constant 3 : index
      %c0_89 = arith.constant 0 : index
      %c0_90 = arith.constant 0 : index
      %181 = vector.load %arg3[%c4_87, %c3_88, %c0_89, %c0_90] : memref<9x4x4x1xf32, #tpu.memory_space<vmem>>, vector<1x1x4x1xf32>
      %182 = vector.shape_cast %181 : vector<1x1x4x1xf32> to vector<4x1xf32>
      %183 = vector.broadcast %180 : vector<1x256xf32> to vector<4x256xf32>
      %184 = vector.broadcast %182 : vector<4x1xf32> to vector<4x256xf32>
      %185 = arith.mulf %183, %184 : vector<4x256xf32>
      %186 = arith.addf %179, %185 : vector<4x256xf32>
      %c255_i32 = arith.constant 255 : i32
      %187 = tpu.dynamic_rotate %35 by %c255_i32 dim 1 : vector<4x256xf32>, i32 -> vector<4x256xf32>
      %188 = vector.broadcast %27 : vector<1x256xf32> to vector<4x256xf32>
      %189 = arith.mulf %187, %188 : vector<4x256xf32>
      %190 = vector.extract_strided_slice %189 {offsets = [0, 0], sizes = [1, 256], strides = [1, 1]} : vector<4x256xf32> to vector<1x256xf32>
      %c5 = arith.constant 5 : index
      %c0_91 = arith.constant 0 : index
      %c0_92 = arith.constant 0 : index
      %c0_93 = arith.constant 0 : index
      %191 = vector.load %arg3[%c5, %c0_91, %c0_92, %c0_93] : memref<9x4x4x1xf32, #tpu.memory_space<vmem>>, vector<1x1x4x1xf32>
      %192 = vector.shape_cast %191 : vector<1x1x4x1xf32> to vector<4x1xf32>
      %193 = vector.broadcast %190 : vector<1x256xf32> to vector<4x256xf32>
      %194 = vector.broadcast %192 : vector<4x1xf32> to vector<4x256xf32>
      %195 = arith.mulf %193, %194 : vector<4x256xf32>
      %196 = arith.addf %186, %195 : vector<4x256xf32>
      %197 = vector.extract_strided_slice %189 {offsets = [1, 0], sizes = [1, 256], strides = [1, 1]} : vector<4x256xf32> to vector<1x256xf32>
      %c5_94 = arith.constant 5 : index
      %c1_95 = arith.constant 1 : index
      %c0_96 = arith.constant 0 : index
      %c0_97 = arith.constant 0 : index
      %198 = vector.load %arg3[%c5_94, %c1_95, %c0_96, %c0_97] : memref<9x4x4x1xf32, #tpu.memory_space<vmem>>, vector<1x1x4x1xf32>
      %199 = vector.shape_cast %198 : vector<1x1x4x1xf32> to vector<4x1xf32>
      %200 = vector.broadcast %197 : vector<1x256xf32> to vector<4x256xf32>
      %201 = vector.broadcast %199 : vector<4x1xf32> to vector<4x256xf32>
      %202 = arith.mulf %200, %201 : vector<4x256xf32>
      %203 = arith.addf %196, %202 : vector<4x256xf32>
      %204 = vector.extract_strided_slice %189 {offsets = [2, 0], sizes = [1, 256], strides = [1, 1]} : vector<4x256xf32> to vector<1x256xf32>
      %c5_98 = arith.constant 5 : index
      %c2_99 = arith.constant 2 : index
      %c0_100 = arith.constant 0 : index
      %c0_101 = arith.constant 0 : index
      %205 = vector.load %arg3[%c5_98, %c2_99, %c0_100, %c0_101] : memref<9x4x4x1xf32, #tpu.memory_space<vmem>>, vector<1x1x4x1xf32>
      %206 = vector.shape_cast %205 : vector<1x1x4x1xf32> to vector<4x1xf32>
      %207 = vector.broadcast %204 : vector<1x256xf32> to vector<4x256xf32>
      %208 = vector.broadcast %206 : vector<4x1xf32> to vector<4x256xf32>
      %209 = arith.mulf %207, %208 : vector<4x256xf32>
      %210 = arith.addf %203, %209 : vector<4x256xf32>
      %211 = vector.extract_strided_slice %189 {offsets = [3, 0], sizes = [1, 256], strides = [1, 1]} : vector<4x256xf32> to vector<1x256xf32>
      %c5_102 = arith.constant 5 : index
      %c3_103 = arith.constant 3 : index
      %c0_104 = arith.constant 0 : index
      %c0_105 = arith.constant 0 : index
      %212 = vector.load %arg3[%c5_102, %c3_103, %c0_104, %c0_105] : memref<9x4x4x1xf32, #tpu.memory_space<vmem>>, vector<1x1x4x1xf32>
      %213 = vector.shape_cast %212 : vector<1x1x4x1xf32> to vector<4x1xf32>
      %214 = vector.broadcast %211 : vector<1x256xf32> to vector<4x256xf32>
      %215 = vector.broadcast %213 : vector<4x1xf32> to vector<4x256xf32>
      %216 = arith.mulf %214, %215 : vector<4x256xf32>
      %217 = arith.addf %210, %216 : vector<4x256xf32>
      %c241_i32 = arith.constant 241 : i32
      %218 = tpu.dynamic_rotate %35 by %c241_i32 dim 1 : vector<4x256xf32>, i32 -> vector<4x256xf32>
      %219 = vector.broadcast %30 : vector<1x256xf32> to vector<4x256xf32>
      %220 = arith.mulf %218, %219 : vector<4x256xf32>
      %221 = vector.extract_strided_slice %220 {offsets = [0, 0], sizes = [1, 256], strides = [1, 1]} : vector<4x256xf32> to vector<1x256xf32>
      %c6 = arith.constant 6 : index
      %c0_106 = arith.constant 0 : index
      %c0_107 = arith.constant 0 : index
      %c0_108 = arith.constant 0 : index
      %222 = vector.load %arg3[%c6, %c0_106, %c0_107, %c0_108] : memref<9x4x4x1xf32, #tpu.memory_space<vmem>>, vector<1x1x4x1xf32>
      %223 = vector.shape_cast %222 : vector<1x1x4x1xf32> to vector<4x1xf32>
      %224 = vector.broadcast %221 : vector<1x256xf32> to vector<4x256xf32>
      %225 = vector.broadcast %223 : vector<4x1xf32> to vector<4x256xf32>
      %226 = arith.mulf %224, %225 : vector<4x256xf32>
      %227 = arith.addf %217, %226 : vector<4x256xf32>
      %228 = vector.extract_strided_slice %220 {offsets = [1, 0], sizes = [1, 256], strides = [1, 1]} : vector<4x256xf32> to vector<1x256xf32>
      %c6_109 = arith.constant 6 : index
      %c1_110 = arith.constant 1 : index
      %c0_111 = arith.constant 0 : index
      %c0_112 = arith.constant 0 : index
      %229 = vector.load %arg3[%c6_109, %c1_110, %c0_111, %c0_112] : memref<9x4x4x1xf32, #tpu.memory_space<vmem>>, vector<1x1x4x1xf32>
      %230 = vector.shape_cast %229 : vector<1x1x4x1xf32> to vector<4x1xf32>
      %231 = vector.broadcast %228 : vector<1x256xf32> to vector<4x256xf32>
      %232 = vector.broadcast %230 : vector<4x1xf32> to vector<4x256xf32>
      %233 = arith.mulf %231, %232 : vector<4x256xf32>
      %234 = arith.addf %227, %233 : vector<4x256xf32>
      %235 = vector.extract_strided_slice %220 {offsets = [2, 0], sizes = [1, 256], strides = [1, 1]} : vector<4x256xf32> to vector<1x256xf32>
      %c6_113 = arith.constant 6 : index
      %c2_114 = arith.constant 2 : index
      %c0_115 = arith.constant 0 : index
      %c0_116 = arith.constant 0 : index
      %236 = vector.load %arg3[%c6_113, %c2_114, %c0_115, %c0_116] : memref<9x4x4x1xf32, #tpu.memory_space<vmem>>, vector<1x1x4x1xf32>
      %237 = vector.shape_cast %236 : vector<1x1x4x1xf32> to vector<4x1xf32>
      %238 = vector.broadcast %235 : vector<1x256xf32> to vector<4x256xf32>
      %239 = vector.broadcast %237 : vector<4x1xf32> to vector<4x256xf32>
      %240 = arith.mulf %238, %239 : vector<4x256xf32>
      %241 = arith.addf %234, %240 : vector<4x256xf32>
      %242 = vector.extract_strided_slice %220 {offsets = [3, 0], sizes = [1, 256], strides = [1, 1]} : vector<4x256xf32> to vector<1x256xf32>
      %c6_117 = arith.constant 6 : index
      %c3_118 = arith.constant 3 : index
      %c0_119 = arith.constant 0 : index
      %c0_120 = arith.constant 0 : index
      %243 = vector.load %arg3[%c6_117, %c3_118, %c0_119, %c0_120] : memref<9x4x4x1xf32, #tpu.memory_space<vmem>>, vector<1x1x4x1xf32>
      %244 = vector.shape_cast %243 : vector<1x1x4x1xf32> to vector<4x1xf32>
      %245 = vector.broadcast %242 : vector<1x256xf32> to vector<4x256xf32>
      %246 = vector.broadcast %244 : vector<4x1xf32> to vector<4x256xf32>
      %247 = arith.mulf %245, %246 : vector<4x256xf32>
      %248 = arith.addf %241, %247 : vector<4x256xf32>
      %c240_i32_121 = arith.constant 240 : i32
      %249 = tpu.dynamic_rotate %35 by %c240_i32_121 dim 1 : vector<4x256xf32>, i32 -> vector<4x256xf32>
      %250 = vector.broadcast %19 : vector<1x256xf32> to vector<4x256xf32>
      %251 = arith.mulf %249, %250 : vector<4x256xf32>
      %252 = vector.extract_strided_slice %251 {offsets = [0, 0], sizes = [1, 256], strides = [1, 1]} : vector<4x256xf32> to vector<1x256xf32>
      %c7 = arith.constant 7 : index
      %c0_122 = arith.constant 0 : index
      %c0_123 = arith.constant 0 : index
      %c0_124 = arith.constant 0 : index
      %253 = vector.load %arg3[%c7, %c0_122, %c0_123, %c0_124] : memref<9x4x4x1xf32, #tpu.memory_space<vmem>>, vector<1x1x4x1xf32>
      %254 = vector.shape_cast %253 : vector<1x1x4x1xf32> to vector<4x1xf32>
      %255 = vector.broadcast %252 : vector<1x256xf32> to vector<4x256xf32>
      %256 = vector.broadcast %254 : vector<4x1xf32> to vector<4x256xf32>
      %257 = arith.mulf %255, %256 : vector<4x256xf32>
      %258 = arith.addf %248, %257 : vector<4x256xf32>
      %259 = vector.extract_strided_slice %251 {offsets = [1, 0], sizes = [1, 256], strides = [1, 1]} : vector<4x256xf32> to vector<1x256xf32>
      %c7_125 = arith.constant 7 : index
      %c1_126 = arith.constant 1 : index
      %c0_127 = arith.constant 0 : index
      %c0_128 = arith.constant 0 : index
      %260 = vector.load %arg3[%c7_125, %c1_126, %c0_127, %c0_128] : memref<9x4x4x1xf32, #tpu.memory_space<vmem>>, vector<1x1x4x1xf32>
      %261 = vector.shape_cast %260 : vector<1x1x4x1xf32> to vector<4x1xf32>
      %262 = vector.broadcast %259 : vector<1x256xf32> to vector<4x256xf32>
      %263 = vector.broadcast %261 : vector<4x1xf32> to vector<4x256xf32>
      %264 = arith.mulf %262, %263 : vector<4x256xf32>
      %265 = arith.addf %258, %264 : vector<4x256xf32>
      %266 = vector.extract_strided_slice %251 {offsets = [2, 0], sizes = [1, 256], strides = [1, 1]} : vector<4x256xf32> to vector<1x256xf32>
      %c7_129 = arith.constant 7 : index
      %c2_130 = arith.constant 2 : index
      %c0_131 = arith.constant 0 : index
      %c0_132 = arith.constant 0 : index
      %267 = vector.load %arg3[%c7_129, %c2_130, %c0_131, %c0_132] : memref<9x4x4x1xf32, #tpu.memory_space<vmem>>, vector<1x1x4x1xf32>
      %268 = vector.shape_cast %267 : vector<1x1x4x1xf32> to vector<4x1xf32>
      %269 = vector.broadcast %266 : vector<1x256xf32> to vector<4x256xf32>
      %270 = vector.broadcast %268 : vector<4x1xf32> to vector<4x256xf32>
      %271 = arith.mulf %269, %270 : vector<4x256xf32>
      %272 = arith.addf %265, %271 : vector<4x256xf32>
      %273 = vector.extract_strided_slice %251 {offsets = [3, 0], sizes = [1, 256], strides = [1, 1]} : vector<4x256xf32> to vector<1x256xf32>
      %c7_133 = arith.constant 7 : index
      %c3_134 = arith.constant 3 : index
      %c0_135 = arith.constant 0 : index
      %c0_136 = arith.constant 0 : index
      %274 = vector.load %arg3[%c7_133, %c3_134, %c0_135, %c0_136] : memref<9x4x4x1xf32, #tpu.memory_space<vmem>>, vector<1x1x4x1xf32>
      %275 = vector.shape_cast %274 : vector<1x1x4x1xf32> to vector<4x1xf32>
      %276 = vector.broadcast %273 : vector<1x256xf32> to vector<4x256xf32>
      %277 = vector.broadcast %275 : vector<4x1xf32> to vector<4x256xf32>
      %278 = arith.mulf %276, %277 : vector<4x256xf32>
      %279 = arith.addf %272, %278 : vector<4x256xf32>
      %c239_i32 = arith.constant 239 : i32
      %280 = tpu.dynamic_rotate %35 by %c239_i32 dim 1 : vector<4x256xf32>, i32 -> vector<4x256xf32>
      %281 = vector.broadcast %31 : vector<1x256xf32> to vector<4x256xf32>
      %282 = arith.mulf %280, %281 : vector<4x256xf32>
      %283 = vector.extract_strided_slice %282 {offsets = [0, 0], sizes = [1, 256], strides = [1, 1]} : vector<4x256xf32> to vector<1x256xf32>
      %c8 = arith.constant 8 : index
      %c0_137 = arith.constant 0 : index
      %c0_138 = arith.constant 0 : index
      %c0_139 = arith.constant 0 : index
      %284 = vector.load %arg3[%c8, %c0_137, %c0_138, %c0_139] : memref<9x4x4x1xf32, #tpu.memory_space<vmem>>, vector<1x1x4x1xf32>
      %285 = vector.shape_cast %284 : vector<1x1x4x1xf32> to vector<4x1xf32>
      %286 = vector.broadcast %283 : vector<1x256xf32> to vector<4x256xf32>
      %287 = vector.broadcast %285 : vector<4x1xf32> to vector<4x256xf32>
      %288 = arith.mulf %286, %287 : vector<4x256xf32>
      %289 = arith.addf %279, %288 : vector<4x256xf32>
      %290 = vector.extract_strided_slice %282 {offsets = [1, 0], sizes = [1, 256], strides = [1, 1]} : vector<4x256xf32> to vector<1x256xf32>
      %c8_140 = arith.constant 8 : index
      %c1_141 = arith.constant 1 : index
      %c0_142 = arith.constant 0 : index
      %c0_143 = arith.constant 0 : index
      %291 = vector.load %arg3[%c8_140, %c1_141, %c0_142, %c0_143] : memref<9x4x4x1xf32, #tpu.memory_space<vmem>>, vector<1x1x4x1xf32>
      %292 = vector.shape_cast %291 : vector<1x1x4x1xf32> to vector<4x1xf32>
      %293 = vector.broadcast %290 : vector<1x256xf32> to vector<4x256xf32>
      %294 = vector.broadcast %292 : vector<4x1xf32> to vector<4x256xf32>
      %295 = arith.mulf %293, %294 : vector<4x256xf32>
      %296 = arith.addf %289, %295 : vector<4x256xf32>
      %297 = vector.extract_strided_slice %282 {offsets = [2, 0], sizes = [1, 256], strides = [1, 1]} : vector<4x256xf32> to vector<1x256xf32>
      %c8_144 = arith.constant 8 : index
      %c2_145 = arith.constant 2 : index
      %c0_146 = arith.constant 0 : index
      %c0_147 = arith.constant 0 : index
      %298 = vector.load %arg3[%c8_144, %c2_145, %c0_146, %c0_147] : memref<9x4x4x1xf32, #tpu.memory_space<vmem>>, vector<1x1x4x1xf32>
      %299 = vector.shape_cast %298 : vector<1x1x4x1xf32> to vector<4x1xf32>
      %300 = vector.broadcast %297 : vector<1x256xf32> to vector<4x256xf32>
      %301 = vector.broadcast %299 : vector<4x1xf32> to vector<4x256xf32>
      %302 = arith.mulf %300, %301 : vector<4x256xf32>
      %303 = arith.addf %296, %302 : vector<4x256xf32>
      %304 = vector.extract_strided_slice %282 {offsets = [3, 0], sizes = [1, 256], strides = [1, 1]} : vector<4x256xf32> to vector<1x256xf32>
      %c8_148 = arith.constant 8 : index
      %c3_149 = arith.constant 3 : index
      %c0_150 = arith.constant 0 : index
      %c0_151 = arith.constant 0 : index
      %305 = vector.load %arg3[%c8_148, %c3_149, %c0_150, %c0_151] : memref<9x4x4x1xf32, #tpu.memory_space<vmem>>, vector<1x1x4x1xf32>
      %306 = vector.shape_cast %305 : vector<1x1x4x1xf32> to vector<4x1xf32>
      %307 = vector.broadcast %304 : vector<1x256xf32> to vector<4x256xf32>
      %308 = vector.broadcast %306 : vector<4x1xf32> to vector<4x256xf32>
      %309 = arith.mulf %307, %308 : vector<4x256xf32>
      %310 = arith.addf %303, %309 : vector<4x256xf32>
      %311 = vector.broadcast %32 : vector<4x1xf32> to vector<4x256xf32>
      %312 = arith.addf %310, %311 : vector<4x256xf32>
      %cst = arith.constant dense<0.000000e+00> : vector<4xf32>
      %313 = vector.multi_reduction <add>, %312, %cst [1] : vector<4x256xf32> to vector<4xf32>
      %314 = vector.shape_cast %313 : vector<4xf32> to vector<4x1xf32>
      %cst_152 = arith.constant 3.906250e-03 : f32
      %315 = vector.broadcast %cst_152 : f32 to vector<4x1xf32>
      %316 = arith.mulf %314, %315 : vector<4x1xf32>
      %317 = vector.broadcast %316 : vector<4x1xf32> to vector<4x256xf32>
      %318 = arith.subf %312, %317 : vector<4x256xf32>
      %319 = arith.mulf %318, %318 : vector<4x256xf32>
      %cst_153 = arith.constant dense<0.000000e+00> : vector<4xf32>
      %320 = vector.multi_reduction <add>, %319, %cst_153 [1] : vector<4x256xf32> to vector<4xf32>
      %321 = vector.shape_cast %320 : vector<4xf32> to vector<4x1xf32>
      %cst_154 = arith.constant 3.906250e-03 : f32
      %322 = vector.broadcast %cst_154 : f32 to vector<4x1xf32>
      %323 = arith.mulf %321, %322 : vector<4x1xf32>
      %cst_155 = arith.constant 9.99999974E-6 : f32
      %324 = vector.broadcast %cst_155 : f32 to vector<4x1xf32>
      %325 = arith.addf %323, %324 : vector<4x1xf32>
      %326 = math.rsqrt %325 : vector<4x1xf32>
      %327 = vector.broadcast %326 : vector<4x1xf32> to vector<4x256xf32>
      %328 = arith.mulf %318, %327 : vector<4x256xf32>
      %c17_i32_156 = arith.constant 17 : i32
      %329 = tpu.dynamic_rotate %328 by %c17_i32_156 dim 1 : vector<4x256xf32>, i32 -> vector<4x256xf32>
      %330 = vector.broadcast %28 : vector<1x256xf32> to vector<4x256xf32>
      %331 = arith.mulf %329, %330 : vector<4x256xf32>
      %332 = vector.extract_strided_slice %331 {offsets = [0, 0], sizes = [1, 256], strides = [1, 1]} : vector<4x256xf32> to vector<1x256xf32>
      %c0_157 = arith.constant 0 : index
      %c0_158 = arith.constant 0 : index
      %c0_159 = arith.constant 0 : index
      %c0_160 = arith.constant 0 : index
      %333 = vector.load %arg5[%c0_157, %c0_158, %c0_159, %c0_160] : memref<9x4x4x1xf32, #tpu.memory_space<vmem>>, vector<1x1x4x1xf32>
      %334 = vector.shape_cast %333 : vector<1x1x4x1xf32> to vector<4x1xf32>
      %335 = vector.broadcast %332 : vector<1x256xf32> to vector<4x256xf32>
      %336 = vector.broadcast %334 : vector<4x1xf32> to vector<4x256xf32>
      %337 = arith.mulf %335, %336 : vector<4x256xf32>
      %338 = vector.extract_strided_slice %331 {offsets = [1, 0], sizes = [1, 256], strides = [1, 1]} : vector<4x256xf32> to vector<1x256xf32>
      %c0_161 = arith.constant 0 : index
      %c1_162 = arith.constant 1 : index
      %c0_163 = arith.constant 0 : index
      %c0_164 = arith.constant 0 : index
      %339 = vector.load %arg5[%c0_161, %c1_162, %c0_163, %c0_164] : memref<9x4x4x1xf32, #tpu.memory_space<vmem>>, vector<1x1x4x1xf32>
      %340 = vector.shape_cast %339 : vector<1x1x4x1xf32> to vector<4x1xf32>
      %341 = vector.broadcast %338 : vector<1x256xf32> to vector<4x256xf32>
      %342 = vector.broadcast %340 : vector<4x1xf32> to vector<4x256xf32>
      %343 = arith.mulf %341, %342 : vector<4x256xf32>
      %344 = arith.addf %337, %343 : vector<4x256xf32>
      %345 = vector.extract_strided_slice %331 {offsets = [2, 0], sizes = [1, 256], strides = [1, 1]} : vector<4x256xf32> to vector<1x256xf32>
      %c0_165 = arith.constant 0 : index
      %c2_166 = arith.constant 2 : index
      %c0_167 = arith.constant 0 : index
      %c0_168 = arith.constant 0 : index
      %346 = vector.load %arg5[%c0_165, %c2_166, %c0_167, %c0_168] : memref<9x4x4x1xf32, #tpu.memory_space<vmem>>, vector<1x1x4x1xf32>
      %347 = vector.shape_cast %346 : vector<1x1x4x1xf32> to vector<4x1xf32>
      %348 = vector.broadcast %345 : vector<1x256xf32> to vector<4x256xf32>
      %349 = vector.broadcast %347 : vector<4x1xf32> to vector<4x256xf32>
      %350 = arith.mulf %348, %349 : vector<4x256xf32>
      %351 = arith.addf %344, %350 : vector<4x256xf32>
      %352 = vector.extract_strided_slice %331 {offsets = [3, 0], sizes = [1, 256], strides = [1, 1]} : vector<4x256xf32> to vector<1x256xf32>
      %c0_169 = arith.constant 0 : index
      %c3_170 = arith.constant 3 : index
      %c0_171 = arith.constant 0 : index
      %c0_172 = arith.constant 0 : index
      %353 = vector.load %arg5[%c0_169, %c3_170, %c0_171, %c0_172] : memref<9x4x4x1xf32, #tpu.memory_space<vmem>>, vector<1x1x4x1xf32>
      %354 = vector.shape_cast %353 : vector<1x1x4x1xf32> to vector<4x1xf32>
      %355 = vector.broadcast %352 : vector<1x256xf32> to vector<4x256xf32>
      %356 = vector.broadcast %354 : vector<4x1xf32> to vector<4x256xf32>
      %357 = arith.mulf %355, %356 : vector<4x256xf32>
      %358 = arith.addf %351, %357 : vector<4x256xf32>
      %c16_i32_173 = arith.constant 16 : i32
      %359 = tpu.dynamic_rotate %328 by %c16_i32_173 dim 1 : vector<4x256xf32>, i32 -> vector<4x256xf32>
      %360 = vector.broadcast %15 : vector<1x256xf32> to vector<4x256xf32>
      %361 = arith.mulf %359, %360 : vector<4x256xf32>
      %362 = vector.extract_strided_slice %361 {offsets = [0, 0], sizes = [1, 256], strides = [1, 1]} : vector<4x256xf32> to vector<1x256xf32>
      %c1_174 = arith.constant 1 : index
      %c0_175 = arith.constant 0 : index
      %c0_176 = arith.constant 0 : index
      %c0_177 = arith.constant 0 : index
      %363 = vector.load %arg5[%c1_174, %c0_175, %c0_176, %c0_177] : memref<9x4x4x1xf32, #tpu.memory_space<vmem>>, vector<1x1x4x1xf32>
      %364 = vector.shape_cast %363 : vector<1x1x4x1xf32> to vector<4x1xf32>
      %365 = vector.broadcast %362 : vector<1x256xf32> to vector<4x256xf32>
      %366 = vector.broadcast %364 : vector<4x1xf32> to vector<4x256xf32>
      %367 = arith.mulf %365, %366 : vector<4x256xf32>
      %368 = arith.addf %358, %367 : vector<4x256xf32>
      %369 = vector.extract_strided_slice %361 {offsets = [1, 0], sizes = [1, 256], strides = [1, 1]} : vector<4x256xf32> to vector<1x256xf32>
      %c1_178 = arith.constant 1 : index
      %c1_179 = arith.constant 1 : index
      %c0_180 = arith.constant 0 : index
      %c0_181 = arith.constant 0 : index
      %370 = vector.load %arg5[%c1_178, %c1_179, %c0_180, %c0_181] : memref<9x4x4x1xf32, #tpu.memory_space<vmem>>, vector<1x1x4x1xf32>
      %371 = vector.shape_cast %370 : vector<1x1x4x1xf32> to vector<4x1xf32>
      %372 = vector.broadcast %369 : vector<1x256xf32> to vector<4x256xf32>
      %373 = vector.broadcast %371 : vector<4x1xf32> to vector<4x256xf32>
      %374 = arith.mulf %372, %373 : vector<4x256xf32>
      %375 = arith.addf %368, %374 : vector<4x256xf32>
      %376 = vector.extract_strided_slice %361 {offsets = [2, 0], sizes = [1, 256], strides = [1, 1]} : vector<4x256xf32> to vector<1x256xf32>
      %c1_182 = arith.constant 1 : index
      %c2_183 = arith.constant 2 : index
      %c0_184 = arith.constant 0 : index
      %c0_185 = arith.constant 0 : index
      %377 = vector.load %arg5[%c1_182, %c2_183, %c0_184, %c0_185] : memref<9x4x4x1xf32, #tpu.memory_space<vmem>>, vector<1x1x4x1xf32>
      %378 = vector.shape_cast %377 : vector<1x1x4x1xf32> to vector<4x1xf32>
      %379 = vector.broadcast %376 : vector<1x256xf32> to vector<4x256xf32>
      %380 = vector.broadcast %378 : vector<4x1xf32> to vector<4x256xf32>
      %381 = arith.mulf %379, %380 : vector<4x256xf32>
      %382 = arith.addf %375, %381 : vector<4x256xf32>
      %383 = vector.extract_strided_slice %361 {offsets = [3, 0], sizes = [1, 256], strides = [1, 1]} : vector<4x256xf32> to vector<1x256xf32>
      %c1_186 = arith.constant 1 : index
      %c3_187 = arith.constant 3 : index
      %c0_188 = arith.constant 0 : index
      %c0_189 = arith.constant 0 : index
      %384 = vector.load %arg5[%c1_186, %c3_187, %c0_188, %c0_189] : memref<9x4x4x1xf32, #tpu.memory_space<vmem>>, vector<1x1x4x1xf32>
      %385 = vector.shape_cast %384 : vector<1x1x4x1xf32> to vector<4x1xf32>
      %386 = vector.broadcast %383 : vector<1x256xf32> to vector<4x256xf32>
      %387 = vector.broadcast %385 : vector<4x1xf32> to vector<4x256xf32>
      %388 = arith.mulf %386, %387 : vector<4x256xf32>
      %389 = arith.addf %382, %388 : vector<4x256xf32>
      %c15_i32_190 = arith.constant 15 : i32
      %390 = tpu.dynamic_rotate %328 by %c15_i32_190 dim 1 : vector<4x256xf32>, i32 -> vector<4x256xf32>
      %391 = vector.broadcast %29 : vector<1x256xf32> to vector<4x256xf32>
      %392 = arith.mulf %390, %391 : vector<4x256xf32>
      %393 = vector.extract_strided_slice %392 {offsets = [0, 0], sizes = [1, 256], strides = [1, 1]} : vector<4x256xf32> to vector<1x256xf32>
      %c2_191 = arith.constant 2 : index
      %c0_192 = arith.constant 0 : index
      %c0_193 = arith.constant 0 : index
      %c0_194 = arith.constant 0 : index
      %394 = vector.load %arg5[%c2_191, %c0_192, %c0_193, %c0_194] : memref<9x4x4x1xf32, #tpu.memory_space<vmem>>, vector<1x1x4x1xf32>
      %395 = vector.shape_cast %394 : vector<1x1x4x1xf32> to vector<4x1xf32>
      %396 = vector.broadcast %393 : vector<1x256xf32> to vector<4x256xf32>
      %397 = vector.broadcast %395 : vector<4x1xf32> to vector<4x256xf32>
      %398 = arith.mulf %396, %397 : vector<4x256xf32>
      %399 = arith.addf %389, %398 : vector<4x256xf32>
      %400 = vector.extract_strided_slice %392 {offsets = [1, 0], sizes = [1, 256], strides = [1, 1]} : vector<4x256xf32> to vector<1x256xf32>
      %c2_195 = arith.constant 2 : index
      %c1_196 = arith.constant 1 : index
      %c0_197 = arith.constant 0 : index
      %c0_198 = arith.constant 0 : index
      %401 = vector.load %arg5[%c2_195, %c1_196, %c0_197, %c0_198] : memref<9x4x4x1xf32, #tpu.memory_space<vmem>>, vector<1x1x4x1xf32>
      %402 = vector.shape_cast %401 : vector<1x1x4x1xf32> to vector<4x1xf32>
      %403 = vector.broadcast %400 : vector<1x256xf32> to vector<4x256xf32>
      %404 = vector.broadcast %402 : vector<4x1xf32> to vector<4x256xf32>
      %405 = arith.mulf %403, %404 : vector<4x256xf32>
      %406 = arith.addf %399, %405 : vector<4x256xf32>
      %407 = vector.extract_strided_slice %392 {offsets = [2, 0], sizes = [1, 256], strides = [1, 1]} : vector<4x256xf32> to vector<1x256xf32>
      %c2_199 = arith.constant 2 : index
      %c2_200 = arith.constant 2 : index
      %c0_201 = arith.constant 0 : index
      %c0_202 = arith.constant 0 : index
      %408 = vector.load %arg5[%c2_199, %c2_200, %c0_201, %c0_202] : memref<9x4x4x1xf32, #tpu.memory_space<vmem>>, vector<1x1x4x1xf32>
      %409 = vector.shape_cast %408 : vector<1x1x4x1xf32> to vector<4x1xf32>
      %410 = vector.broadcast %407 : vector<1x256xf32> to vector<4x256xf32>
      %411 = vector.broadcast %409 : vector<4x1xf32> to vector<4x256xf32>
      %412 = arith.mulf %410, %411 : vector<4x256xf32>
      %413 = arith.addf %406, %412 : vector<4x256xf32>
      %414 = vector.extract_strided_slice %392 {offsets = [3, 0], sizes = [1, 256], strides = [1, 1]} : vector<4x256xf32> to vector<1x256xf32>
      %c2_203 = arith.constant 2 : index
      %c3_204 = arith.constant 3 : index
      %c0_205 = arith.constant 0 : index
      %c0_206 = arith.constant 0 : index
      %415 = vector.load %arg5[%c2_203, %c3_204, %c0_205, %c0_206] : memref<9x4x4x1xf32, #tpu.memory_space<vmem>>, vector<1x1x4x1xf32>
      %416 = vector.shape_cast %415 : vector<1x1x4x1xf32> to vector<4x1xf32>
      %417 = vector.broadcast %414 : vector<1x256xf32> to vector<4x256xf32>
      %418 = vector.broadcast %416 : vector<4x1xf32> to vector<4x256xf32>
      %419 = arith.mulf %417, %418 : vector<4x256xf32>
      %420 = arith.addf %413, %419 : vector<4x256xf32>
      %c1_i32_207 = arith.constant 1 : i32
      %421 = tpu.dynamic_rotate %328 by %c1_i32_207 dim 1 : vector<4x256xf32>, i32 -> vector<4x256xf32>
      %422 = vector.broadcast %23 : vector<1x256xf32> to vector<4x256xf32>
      %423 = arith.mulf %421, %422 : vector<4x256xf32>
      %424 = vector.extract_strided_slice %423 {offsets = [0, 0], sizes = [1, 256], strides = [1, 1]} : vector<4x256xf32> to vector<1x256xf32>
      %c3_208 = arith.constant 3 : index
      %c0_209 = arith.constant 0 : index
      %c0_210 = arith.constant 0 : index
      %c0_211 = arith.constant 0 : index
      %425 = vector.load %arg5[%c3_208, %c0_209, %c0_210, %c0_211] : memref<9x4x4x1xf32, #tpu.memory_space<vmem>>, vector<1x1x4x1xf32>
      %426 = vector.shape_cast %425 : vector<1x1x4x1xf32> to vector<4x1xf32>
      %427 = vector.broadcast %424 : vector<1x256xf32> to vector<4x256xf32>
      %428 = vector.broadcast %426 : vector<4x1xf32> to vector<4x256xf32>
      %429 = arith.mulf %427, %428 : vector<4x256xf32>
      %430 = arith.addf %420, %429 : vector<4x256xf32>
      %431 = vector.extract_strided_slice %423 {offsets = [1, 0], sizes = [1, 256], strides = [1, 1]} : vector<4x256xf32> to vector<1x256xf32>
      %c3_212 = arith.constant 3 : index
      %c1_213 = arith.constant 1 : index
      %c0_214 = arith.constant 0 : index
      %c0_215 = arith.constant 0 : index
      %432 = vector.load %arg5[%c3_212, %c1_213, %c0_214, %c0_215] : memref<9x4x4x1xf32, #tpu.memory_space<vmem>>, vector<1x1x4x1xf32>
      %433 = vector.shape_cast %432 : vector<1x1x4x1xf32> to vector<4x1xf32>
      %434 = vector.broadcast %431 : vector<1x256xf32> to vector<4x256xf32>
      %435 = vector.broadcast %433 : vector<4x1xf32> to vector<4x256xf32>
      %436 = arith.mulf %434, %435 : vector<4x256xf32>
      %437 = arith.addf %430, %436 : vector<4x256xf32>
      %438 = vector.extract_strided_slice %423 {offsets = [2, 0], sizes = [1, 256], strides = [1, 1]} : vector<4x256xf32> to vector<1x256xf32>
      %c3_216 = arith.constant 3 : index
      %c2_217 = arith.constant 2 : index
      %c0_218 = arith.constant 0 : index
      %c0_219 = arith.constant 0 : index
      %439 = vector.load %arg5[%c3_216, %c2_217, %c0_218, %c0_219] : memref<9x4x4x1xf32, #tpu.memory_space<vmem>>, vector<1x1x4x1xf32>
      %440 = vector.shape_cast %439 : vector<1x1x4x1xf32> to vector<4x1xf32>
      %441 = vector.broadcast %438 : vector<1x256xf32> to vector<4x256xf32>
      %442 = vector.broadcast %440 : vector<4x1xf32> to vector<4x256xf32>
      %443 = arith.mulf %441, %442 : vector<4x256xf32>
      %444 = arith.addf %437, %443 : vector<4x256xf32>
      %445 = vector.extract_strided_slice %423 {offsets = [3, 0], sizes = [1, 256], strides = [1, 1]} : vector<4x256xf32> to vector<1x256xf32>
      %c3_220 = arith.constant 3 : index
      %c3_221 = arith.constant 3 : index
      %c0_222 = arith.constant 0 : index
      %c0_223 = arith.constant 0 : index
      %446 = vector.load %arg5[%c3_220, %c3_221, %c0_222, %c0_223] : memref<9x4x4x1xf32, #tpu.memory_space<vmem>>, vector<1x1x4x1xf32>
      %447 = vector.shape_cast %446 : vector<1x1x4x1xf32> to vector<4x1xf32>
      %448 = vector.broadcast %445 : vector<1x256xf32> to vector<4x256xf32>
      %449 = vector.broadcast %447 : vector<4x1xf32> to vector<4x256xf32>
      %450 = arith.mulf %448, %449 : vector<4x256xf32>
      %451 = arith.addf %444, %450 : vector<4x256xf32>
      %452 = vector.extract_strided_slice %328 {offsets = [0, 0], sizes = [1, 256], strides = [1, 1]} : vector<4x256xf32> to vector<1x256xf32>
      %c4_224 = arith.constant 4 : index
      %c0_225 = arith.constant 0 : index
      %c0_226 = arith.constant 0 : index
      %c0_227 = arith.constant 0 : index
      %453 = vector.load %arg5[%c4_224, %c0_225, %c0_226, %c0_227] : memref<9x4x4x1xf32, #tpu.memory_space<vmem>>, vector<1x1x4x1xf32>
      %454 = vector.shape_cast %453 : vector<1x1x4x1xf32> to vector<4x1xf32>
      %455 = vector.broadcast %452 : vector<1x256xf32> to vector<4x256xf32>
      %456 = vector.broadcast %454 : vector<4x1xf32> to vector<4x256xf32>
      %457 = arith.mulf %455, %456 : vector<4x256xf32>
      %458 = arith.addf %451, %457 : vector<4x256xf32>
      %459 = vector.extract_strided_slice %328 {offsets = [1, 0], sizes = [1, 256], strides = [1, 1]} : vector<4x256xf32> to vector<1x256xf32>
      %c4_228 = arith.constant 4 : index
      %c1_229 = arith.constant 1 : index
      %c0_230 = arith.constant 0 : index
      %c0_231 = arith.constant 0 : index
      %460 = vector.load %arg5[%c4_228, %c1_229, %c0_230, %c0_231] : memref<9x4x4x1xf32, #tpu.memory_space<vmem>>, vector<1x1x4x1xf32>
      %461 = vector.shape_cast %460 : vector<1x1x4x1xf32> to vector<4x1xf32>
      %462 = vector.broadcast %459 : vector<1x256xf32> to vector<4x256xf32>
      %463 = vector.broadcast %461 : vector<4x1xf32> to vector<4x256xf32>
      %464 = arith.mulf %462, %463 : vector<4x256xf32>
      %465 = arith.addf %458, %464 : vector<4x256xf32>
      %466 = vector.extract_strided_slice %328 {offsets = [2, 0], sizes = [1, 256], strides = [1, 1]} : vector<4x256xf32> to vector<1x256xf32>
      %c4_232 = arith.constant 4 : index
      %c2_233 = arith.constant 2 : index
      %c0_234 = arith.constant 0 : index
      %c0_235 = arith.constant 0 : index
      %467 = vector.load %arg5[%c4_232, %c2_233, %c0_234, %c0_235] : memref<9x4x4x1xf32, #tpu.memory_space<vmem>>, vector<1x1x4x1xf32>
      %468 = vector.shape_cast %467 : vector<1x1x4x1xf32> to vector<4x1xf32>
      %469 = vector.broadcast %466 : vector<1x256xf32> to vector<4x256xf32>
      %470 = vector.broadcast %468 : vector<4x1xf32> to vector<4x256xf32>
      %471 = arith.mulf %469, %470 : vector<4x256xf32>
      %472 = arith.addf %465, %471 : vector<4x256xf32>
      %473 = vector.extract_strided_slice %328 {offsets = [3, 0], sizes = [1, 256], strides = [1, 1]} : vector<4x256xf32> to vector<1x256xf32>
      %c4_236 = arith.constant 4 : index
      %c3_237 = arith.constant 3 : index
      %c0_238 = arith.constant 0 : index
      %c0_239 = arith.constant 0 : index
      %474 = vector.load %arg5[%c4_236, %c3_237, %c0_238, %c0_239] : memref<9x4x4x1xf32, #tpu.memory_space<vmem>>, vector<1x1x4x1xf32>
      %475 = vector.shape_cast %474 : vector<1x1x4x1xf32> to vector<4x1xf32>
      %476 = vector.broadcast %473 : vector<1x256xf32> to vector<4x256xf32>
      %477 = vector.broadcast %475 : vector<4x1xf32> to vector<4x256xf32>
      %478 = arith.mulf %476, %477 : vector<4x256xf32>
      %479 = arith.addf %472, %478 : vector<4x256xf32>
      %c255_i32_240 = arith.constant 255 : i32
      %480 = tpu.dynamic_rotate %328 by %c255_i32_240 dim 1 : vector<4x256xf32>, i32 -> vector<4x256xf32>
      %481 = vector.broadcast %27 : vector<1x256xf32> to vector<4x256xf32>
      %482 = arith.mulf %480, %481 : vector<4x256xf32>
      %483 = vector.extract_strided_slice %482 {offsets = [0, 0], sizes = [1, 256], strides = [1, 1]} : vector<4x256xf32> to vector<1x256xf32>
      %c5_241 = arith.constant 5 : index
      %c0_242 = arith.constant 0 : index
      %c0_243 = arith.constant 0 : index
      %c0_244 = arith.constant 0 : index
      %484 = vector.load %arg5[%c5_241, %c0_242, %c0_243, %c0_244] : memref<9x4x4x1xf32, #tpu.memory_space<vmem>>, vector<1x1x4x1xf32>
      %485 = vector.shape_cast %484 : vector<1x1x4x1xf32> to vector<4x1xf32>
      %486 = vector.broadcast %483 : vector<1x256xf32> to vector<4x256xf32>
      %487 = vector.broadcast %485 : vector<4x1xf32> to vector<4x256xf32>
      %488 = arith.mulf %486, %487 : vector<4x256xf32>
      %489 = arith.addf %479, %488 : vector<4x256xf32>
      %490 = vector.extract_strided_slice %482 {offsets = [1, 0], sizes = [1, 256], strides = [1, 1]} : vector<4x256xf32> to vector<1x256xf32>
      %c5_245 = arith.constant 5 : index
      %c1_246 = arith.constant 1 : index
      %c0_247 = arith.constant 0 : index
      %c0_248 = arith.constant 0 : index
      %491 = vector.load %arg5[%c5_245, %c1_246, %c0_247, %c0_248] : memref<9x4x4x1xf32, #tpu.memory_space<vmem>>, vector<1x1x4x1xf32>
      %492 = vector.shape_cast %491 : vector<1x1x4x1xf32> to vector<4x1xf32>
      %493 = vector.broadcast %490 : vector<1x256xf32> to vector<4x256xf32>
      %494 = vector.broadcast %492 : vector<4x1xf32> to vector<4x256xf32>
      %495 = arith.mulf %493, %494 : vector<4x256xf32>
      %496 = arith.addf %489, %495 : vector<4x256xf32>
      %497 = vector.extract_strided_slice %482 {offsets = [2, 0], sizes = [1, 256], strides = [1, 1]} : vector<4x256xf32> to vector<1x256xf32>
      %c5_249 = arith.constant 5 : index
      %c2_250 = arith.constant 2 : index
      %c0_251 = arith.constant 0 : index
      %c0_252 = arith.constant 0 : index
      %498 = vector.load %arg5[%c5_249, %c2_250, %c0_251, %c0_252] : memref<9x4x4x1xf32, #tpu.memory_space<vmem>>, vector<1x1x4x1xf32>
      %499 = vector.shape_cast %498 : vector<1x1x4x1xf32> to vector<4x1xf32>
      %500 = vector.broadcast %497 : vector<1x256xf32> to vector<4x256xf32>
      %501 = vector.broadcast %499 : vector<4x1xf32> to vector<4x256xf32>
      %502 = arith.mulf %500, %501 : vector<4x256xf32>
      %503 = arith.addf %496, %502 : vector<4x256xf32>
      %504 = vector.extract_strided_slice %482 {offsets = [3, 0], sizes = [1, 256], strides = [1, 1]} : vector<4x256xf32> to vector<1x256xf32>
      %c5_253 = arith.constant 5 : index
      %c3_254 = arith.constant 3 : index
      %c0_255 = arith.constant 0 : index
      %c0_256 = arith.constant 0 : index
      %505 = vector.load %arg5[%c5_253, %c3_254, %c0_255, %c0_256] : memref<9x4x4x1xf32, #tpu.memory_space<vmem>>, vector<1x1x4x1xf32>
      %506 = vector.shape_cast %505 : vector<1x1x4x1xf32> to vector<4x1xf32>
      %507 = vector.broadcast %504 : vector<1x256xf32> to vector<4x256xf32>
      %508 = vector.broadcast %506 : vector<4x1xf32> to vector<4x256xf32>
      %509 = arith.mulf %507, %508 : vector<4x256xf32>
      %510 = arith.addf %503, %509 : vector<4x256xf32>
      %c241_i32_257 = arith.constant 241 : i32
      %511 = tpu.dynamic_rotate %328 by %c241_i32_257 dim 1 : vector<4x256xf32>, i32 -> vector<4x256xf32>
      %512 = vector.broadcast %30 : vector<1x256xf32> to vector<4x256xf32>
      %513 = arith.mulf %511, %512 : vector<4x256xf32>
      %514 = vector.extract_strided_slice %513 {offsets = [0, 0], sizes = [1, 256], strides = [1, 1]} : vector<4x256xf32> to vector<1x256xf32>
      %c6_258 = arith.constant 6 : index
      %c0_259 = arith.constant 0 : index
      %c0_260 = arith.constant 0 : index
      %c0_261 = arith.constant 0 : index
      %515 = vector.load %arg5[%c6_258, %c0_259, %c0_260, %c0_261] : memref<9x4x4x1xf32, #tpu.memory_space<vmem>>, vector<1x1x4x1xf32>
      %516 = vector.shape_cast %515 : vector<1x1x4x1xf32> to vector<4x1xf32>
      %517 = vector.broadcast %514 : vector<1x256xf32> to vector<4x256xf32>
      %518 = vector.broadcast %516 : vector<4x1xf32> to vector<4x256xf32>
      %519 = arith.mulf %517, %518 : vector<4x256xf32>
      %520 = arith.addf %510, %519 : vector<4x256xf32>
      %521 = vector.extract_strided_slice %513 {offsets = [1, 0], sizes = [1, 256], strides = [1, 1]} : vector<4x256xf32> to vector<1x256xf32>
      %c6_262 = arith.constant 6 : index
      %c1_263 = arith.constant 1 : index
      %c0_264 = arith.constant 0 : index
      %c0_265 = arith.constant 0 : index
      %522 = vector.load %arg5[%c6_262, %c1_263, %c0_264, %c0_265] : memref<9x4x4x1xf32, #tpu.memory_space<vmem>>, vector<1x1x4x1xf32>
      %523 = vector.shape_cast %522 : vector<1x1x4x1xf32> to vector<4x1xf32>
      %524 = vector.broadcast %521 : vector<1x256xf32> to vector<4x256xf32>
      %525 = vector.broadcast %523 : vector<4x1xf32> to vector<4x256xf32>
      %526 = arith.mulf %524, %525 : vector<4x256xf32>
      %527 = arith.addf %520, %526 : vector<4x256xf32>
      %528 = vector.extract_strided_slice %513 {offsets = [2, 0], sizes = [1, 256], strides = [1, 1]} : vector<4x256xf32> to vector<1x256xf32>
      %c6_266 = arith.constant 6 : index
      %c2_267 = arith.constant 2 : index
      %c0_268 = arith.constant 0 : index
      %c0_269 = arith.constant 0 : index
      %529 = vector.load %arg5[%c6_266, %c2_267, %c0_268, %c0_269] : memref<9x4x4x1xf32, #tpu.memory_space<vmem>>, vector<1x1x4x1xf32>
      %530 = vector.shape_cast %529 : vector<1x1x4x1xf32> to vector<4x1xf32>
      %531 = vector.broadcast %528 : vector<1x256xf32> to vector<4x256xf32>
      %532 = vector.broadcast %530 : vector<4x1xf32> to vector<4x256xf32>
      %533 = arith.mulf %531, %532 : vector<4x256xf32>
      %534 = arith.addf %527, %533 : vector<4x256xf32>
      %535 = vector.extract_strided_slice %513 {offsets = [3, 0], sizes = [1, 256], strides = [1, 1]} : vector<4x256xf32> to vector<1x256xf32>
      %c6_270 = arith.constant 6 : index
      %c3_271 = arith.constant 3 : index
      %c0_272 = arith.constant 0 : index
      %c0_273 = arith.constant 0 : index
      %536 = vector.load %arg5[%c6_270, %c3_271, %c0_272, %c0_273] : memref<9x4x4x1xf32, #tpu.memory_space<vmem>>, vector<1x1x4x1xf32>
      %537 = vector.shape_cast %536 : vector<1x1x4x1xf32> to vector<4x1xf32>
      %538 = vector.broadcast %535 : vector<1x256xf32> to vector<4x256xf32>
      %539 = vector.broadcast %537 : vector<4x1xf32> to vector<4x256xf32>
      %540 = arith.mulf %538, %539 : vector<4x256xf32>
      %541 = arith.addf %534, %540 : vector<4x256xf32>
      %c240_i32_274 = arith.constant 240 : i32
      %542 = tpu.dynamic_rotate %328 by %c240_i32_274 dim 1 : vector<4x256xf32>, i32 -> vector<4x256xf32>
      %543 = vector.broadcast %19 : vector<1x256xf32> to vector<4x256xf32>
      %544 = arith.mulf %542, %543 : vector<4x256xf32>
      %545 = vector.extract_strided_slice %544 {offsets = [0, 0], sizes = [1, 256], strides = [1, 1]} : vector<4x256xf32> to vector<1x256xf32>
      %c7_275 = arith.constant 7 : index
      %c0_276 = arith.constant 0 : index
      %c0_277 = arith.constant 0 : index
      %c0_278 = arith.constant 0 : index
      %546 = vector.load %arg5[%c7_275, %c0_276, %c0_277, %c0_278] : memref<9x4x4x1xf32, #tpu.memory_space<vmem>>, vector<1x1x4x1xf32>
      %547 = vector.shape_cast %546 : vector<1x1x4x1xf32> to vector<4x1xf32>
      %548 = vector.broadcast %545 : vector<1x256xf32> to vector<4x256xf32>
      %549 = vector.broadcast %547 : vector<4x1xf32> to vector<4x256xf32>
      %550 = arith.mulf %548, %549 : vector<4x256xf32>
      %551 = arith.addf %541, %550 : vector<4x256xf32>
      %552 = vector.extract_strided_slice %544 {offsets = [1, 0], sizes = [1, 256], strides = [1, 1]} : vector<4x256xf32> to vector<1x256xf32>
      %c7_279 = arith.constant 7 : index
      %c1_280 = arith.constant 1 : index
      %c0_281 = arith.constant 0 : index
      %c0_282 = arith.constant 0 : index
      %553 = vector.load %arg5[%c7_279, %c1_280, %c0_281, %c0_282] : memref<9x4x4x1xf32, #tpu.memory_space<vmem>>, vector<1x1x4x1xf32>
      %554 = vector.shape_cast %553 : vector<1x1x4x1xf32> to vector<4x1xf32>
      %555 = vector.broadcast %552 : vector<1x256xf32> to vector<4x256xf32>
      %556 = vector.broadcast %554 : vector<4x1xf32> to vector<4x256xf32>
      %557 = arith.mulf %555, %556 : vector<4x256xf32>
      %558 = arith.addf %551, %557 : vector<4x256xf32>
      %559 = vector.extract_strided_slice %544 {offsets = [2, 0], sizes = [1, 256], strides = [1, 1]} : vector<4x256xf32> to vector<1x256xf32>
      %c7_283 = arith.constant 7 : index
      %c2_284 = arith.constant 2 : index
      %c0_285 = arith.constant 0 : index
      %c0_286 = arith.constant 0 : index
      %560 = vector.load %arg5[%c7_283, %c2_284, %c0_285, %c0_286] : memref<9x4x4x1xf32, #tpu.memory_space<vmem>>, vector<1x1x4x1xf32>
      %561 = vector.shape_cast %560 : vector<1x1x4x1xf32> to vector<4x1xf32>
      %562 = vector.broadcast %559 : vector<1x256xf32> to vector<4x256xf32>
      %563 = vector.broadcast %561 : vector<4x1xf32> to vector<4x256xf32>
      %564 = arith.mulf %562, %563 : vector<4x256xf32>
      %565 = arith.addf %558, %564 : vector<4x256xf32>
      %566 = vector.extract_strided_slice %544 {offsets = [3, 0], sizes = [1, 256], strides = [1, 1]} : vector<4x256xf32> to vector<1x256xf32>
      %c7_287 = arith.constant 7 : index
      %c3_288 = arith.constant 3 : index
      %c0_289 = arith.constant 0 : index
      %c0_290 = arith.constant 0 : index
      %567 = vector.load %arg5[%c7_287, %c3_288, %c0_289, %c0_290] : memref<9x4x4x1xf32, #tpu.memory_space<vmem>>, vector<1x1x4x1xf32>
      %568 = vector.shape_cast %567 : vector<1x1x4x1xf32> to vector<4x1xf32>
      %569 = vector.broadcast %566 : vector<1x256xf32> to vector<4x256xf32>
      %570 = vector.broadcast %568 : vector<4x1xf32> to vector<4x256xf32>
      %571 = arith.mulf %569, %570 : vector<4x256xf32>
      %572 = arith.addf %565, %571 : vector<4x256xf32>
      %c239_i32_291 = arith.constant 239 : i32
      %573 = tpu.dynamic_rotate %328 by %c239_i32_291 dim 1 : vector<4x256xf32>, i32 -> vector<4x256xf32>
      %574 = vector.broadcast %31 : vector<1x256xf32> to vector<4x256xf32>
      %575 = arith.mulf %573, %574 : vector<4x256xf32>
      %576 = vector.extract_strided_slice %575 {offsets = [0, 0], sizes = [1, 256], strides = [1, 1]} : vector<4x256xf32> to vector<1x256xf32>
      %c8_292 = arith.constant 8 : index
      %c0_293 = arith.constant 0 : index
      %c0_294 = arith.constant 0 : index
      %c0_295 = arith.constant 0 : index
      %577 = vector.load %arg5[%c8_292, %c0_293, %c0_294, %c0_295] : memref<9x4x4x1xf32, #tpu.memory_space<vmem>>, vector<1x1x4x1xf32>
      %578 = vector.shape_cast %577 : vector<1x1x4x1xf32> to vector<4x1xf32>
      %579 = vector.broadcast %576 : vector<1x256xf32> to vector<4x256xf32>
      %580 = vector.broadcast %578 : vector<4x1xf32> to vector<4x256xf32>
      %581 = arith.mulf %579, %580 : vector<4x256xf32>
      %582 = arith.addf %572, %581 : vector<4x256xf32>
      %583 = vector.extract_strided_slice %575 {offsets = [1, 0], sizes = [1, 256], strides = [1, 1]} : vector<4x256xf32> to vector<1x256xf32>
      %c8_296 = arith.constant 8 : index
      %c1_297 = arith.constant 1 : index
      %c0_298 = arith.constant 0 : index
      %c0_299 = arith.constant 0 : index
      %584 = vector.load %arg5[%c8_296, %c1_297, %c0_298, %c0_299] : memref<9x4x4x1xf32, #tpu.memory_space<vmem>>, vector<1x1x4x1xf32>
      %585 = vector.shape_cast %584 : vector<1x1x4x1xf32> to vector<4x1xf32>
      %586 = vector.broadcast %583 : vector<1x256xf32> to vector<4x256xf32>
      %587 = vector.broadcast %585 : vector<4x1xf32> to vector<4x256xf32>
      %588 = arith.mulf %586, %587 : vector<4x256xf32>
      %589 = arith.addf %582, %588 : vector<4x256xf32>
      %590 = vector.extract_strided_slice %575 {offsets = [2, 0], sizes = [1, 256], strides = [1, 1]} : vector<4x256xf32> to vector<1x256xf32>
      %c8_300 = arith.constant 8 : index
      %c2_301 = arith.constant 2 : index
      %c0_302 = arith.constant 0 : index
      %c0_303 = arith.constant 0 : index
      %591 = vector.load %arg5[%c8_300, %c2_301, %c0_302, %c0_303] : memref<9x4x4x1xf32, #tpu.memory_space<vmem>>, vector<1x1x4x1xf32>
      %592 = vector.shape_cast %591 : vector<1x1x4x1xf32> to vector<4x1xf32>
      %593 = vector.broadcast %590 : vector<1x256xf32> to vector<4x256xf32>
      %594 = vector.broadcast %592 : vector<4x1xf32> to vector<4x256xf32>
      %595 = arith.mulf %593, %594 : vector<4x256xf32>
      %596 = arith.addf %589, %595 : vector<4x256xf32>
      %597 = vector.extract_strided_slice %575 {offsets = [3, 0], sizes = [1, 256], strides = [1, 1]} : vector<4x256xf32> to vector<1x256xf32>
      %c8_304 = arith.constant 8 : index
      %c3_305 = arith.constant 3 : index
      %c0_306 = arith.constant 0 : index
      %c0_307 = arith.constant 0 : index
      %598 = vector.load %arg5[%c8_304, %c3_305, %c0_306, %c0_307] : memref<9x4x4x1xf32, #tpu.memory_space<vmem>>, vector<1x1x4x1xf32>
      %599 = vector.shape_cast %598 : vector<1x1x4x1xf32> to vector<4x1xf32>
      %600 = vector.broadcast %597 : vector<1x256xf32> to vector<4x256xf32>
      %601 = vector.broadcast %599 : vector<4x1xf32> to vector<4x256xf32>
      %602 = arith.mulf %600, %601 : vector<4x256xf32>
      %603 = arith.addf %596, %602 : vector<4x256xf32>
      %604 = vector.broadcast %33 : vector<4x1xf32> to vector<4x256xf32>
      %605 = arith.addf %603, %604 : vector<4x256xf32>
      %cst_308 = arith.constant dense<0.000000e+00> : vector<4xf32>
      %606 = vector.multi_reduction <add>, %605, %cst_308 [1] : vector<4x256xf32> to vector<4xf32>
      %607 = vector.shape_cast %606 : vector<4xf32> to vector<4x1xf32>
      %608 = arith.mulf %605, %605 : vector<4x256xf32>
      %cst_309 = arith.constant dense<0.000000e+00> : vector<4xf32>
      %609 = vector.multi_reduction <add>, %608, %cst_309 [1] : vector<4x256xf32> to vector<4xf32>
      %610 = vector.shape_cast %609 : vector<4xf32> to vector<4x1xf32>
      %c2_i32 = arith.constant 2 : i32
      %611 = arith.muli %arg1, %c2_i32 : i32
      %c0_i32_310 = arith.constant 0 : i32
      %612 = arith.addi %611, %c0_i32_310 : i32
      %613 = arith.index_cast %612 : i32 to index
      %c0_311 = arith.constant 0 : index
      %c0_312 = arith.constant 0 : index
      %614 = vector.load %arg10[%613, %c0_311, %c0_312] : memref<2x4x256xf32, #tpu.memory_space<vmem>>, vector<1x4x256xf32>
      %615 = vector.shape_cast %614 : vector<1x4x256xf32> to vector<4x256xf32>
      %616 = vector.shape_cast %605 : vector<4x256xf32> to vector<1x4x256xf32>
      tpu.vector_store %arg10[%613, %c0_311, %c0_312], %616 {strides = array<i32>} : memref<2x4x256xf32, #tpu.memory_space<vmem>>, vector<1x4x256xf32>,
      %c1_313 = arith.constant 1 : index
      %c0_314 = arith.constant 0 : index
      %c0_315 = arith.constant 0 : index
      %617 = vector.load %arg2[%c1_313, %c0_314, %c0_315] : memref<2x4x256xf32, #tpu.memory_space<vmem>>, vector<1x4x256xf32>
      %618 = vector.shape_cast %617 : vector<1x4x256xf32> to vector<4x256xf32>
      %c17_i32_316 = arith.constant 17 : i32
      %619 = tpu.dynamic_rotate %618 by %c17_i32_316 dim 1 : vector<4x256xf32>, i32 -> vector<4x256xf32>
      %620 = vector.broadcast %28 : vector<1x256xf32> to vector<4x256xf32>
      %621 = arith.mulf %619, %620 : vector<4x256xf32>
      %622 = vector.extract_strided_slice %621 {offsets = [0, 0], sizes = [1, 256], strides = [1, 1]} : vector<4x256xf32> to vector<1x256xf32>
      %c0_317 = arith.constant 0 : index
      %c0_318 = arith.constant 0 : index
      %c0_319 = arith.constant 0 : index
      %c0_320 = arith.constant 0 : index
      %623 = vector.load %arg3[%c0_317, %c0_318, %c0_319, %c0_320] : memref<9x4x4x1xf32, #tpu.memory_space<vmem>>, vector<1x1x4x1xf32>
      %624 = vector.shape_cast %623 : vector<1x1x4x1xf32> to vector<4x1xf32>
      %625 = vector.broadcast %622 : vector<1x256xf32> to vector<4x256xf32>
      %626 = vector.broadcast %624 : vector<4x1xf32> to vector<4x256xf32>
      %627 = arith.mulf %625, %626 : vector<4x256xf32>
      %628 = vector.extract_strided_slice %621 {offsets = [1, 0], sizes = [1, 256], strides = [1, 1]} : vector<4x256xf32> to vector<1x256xf32>
      %c0_321 = arith.constant 0 : index
      %c1_322 = arith.constant 1 : index
      %c0_323 = arith.constant 0 : index
      %c0_324 = arith.constant 0 : index
      %629 = vector.load %arg3[%c0_321, %c1_322, %c0_323, %c0_324] : memref<9x4x4x1xf32, #tpu.memory_space<vmem>>, vector<1x1x4x1xf32>
      %630 = vector.shape_cast %629 : vector<1x1x4x1xf32> to vector<4x1xf32>
      %631 = vector.broadcast %628 : vector<1x256xf32> to vector<4x256xf32>
      %632 = vector.broadcast %630 : vector<4x1xf32> to vector<4x256xf32>
      %633 = arith.mulf %631, %632 : vector<4x256xf32>
      %634 = arith.addf %627, %633 : vector<4x256xf32>
      %635 = vector.extract_strided_slice %621 {offsets = [2, 0], sizes = [1, 256], strides = [1, 1]} : vector<4x256xf32> to vector<1x256xf32>
      %c0_325 = arith.constant 0 : index
      %c2_326 = arith.constant 2 : index
      %c0_327 = arith.constant 0 : index
      %c0_328 = arith.constant 0 : index
      %636 = vector.load %arg3[%c0_325, %c2_326, %c0_327, %c0_328] : memref<9x4x4x1xf32, #tpu.memory_space<vmem>>, vector<1x1x4x1xf32>
      %637 = vector.shape_cast %636 : vector<1x1x4x1xf32> to vector<4x1xf32>
      %638 = vector.broadcast %635 : vector<1x256xf32> to vector<4x256xf32>
      %639 = vector.broadcast %637 : vector<4x1xf32> to vector<4x256xf32>
      %640 = arith.mulf %638, %639 : vector<4x256xf32>
      %641 = arith.addf %634, %640 : vector<4x256xf32>
      %642 = vector.extract_strided_slice %621 {offsets = [3, 0], sizes = [1, 256], strides = [1, 1]} : vector<4x256xf32> to vector<1x256xf32>
      %c0_329 = arith.constant 0 : index
      %c3_330 = arith.constant 3 : index
      %c0_331 = arith.constant 0 : index
      %c0_332 = arith.constant 0 : index
      %643 = vector.load %arg3[%c0_329, %c3_330, %c0_331, %c0_332] : memref<9x4x4x1xf32, #tpu.memory_space<vmem>>, vector<1x1x4x1xf32>
      %644 = vector.shape_cast %643 : vector<1x1x4x1xf32> to vector<4x1xf32>
      %645 = vector.broadcast %642 : vector<1x256xf32> to vector<4x256xf32>
      %646 = vector.broadcast %644 : vector<4x1xf32> to vector<4x256xf32>
      %647 = arith.mulf %645, %646 : vector<4x256xf32>
      %648 = arith.addf %641, %647 : vector<4x256xf32>
      %c16_i32_333 = arith.constant 16 : i32
      %649 = tpu.dynamic_rotate %618 by %c16_i32_333 dim 1 : vector<4x256xf32>, i32 -> vector<4x256xf32>
      %650 = vector.broadcast %15 : vector<1x256xf32> to vector<4x256xf32>
      %651 = arith.mulf %649, %650 : vector<4x256xf32>
      %652 = vector.extract_strided_slice %651 {offsets = [0, 0], sizes = [1, 256], strides = [1, 1]} : vector<4x256xf32> to vector<1x256xf32>
      %c1_334 = arith.constant 1 : index
      %c0_335 = arith.constant 0 : index
      %c0_336 = arith.constant 0 : index
      %c0_337 = arith.constant 0 : index
      %653 = vector.load %arg3[%c1_334, %c0_335, %c0_336, %c0_337] : memref<9x4x4x1xf32, #tpu.memory_space<vmem>>, vector<1x1x4x1xf32>
      %654 = vector.shape_cast %653 : vector<1x1x4x1xf32> to vector<4x1xf32>
      %655 = vector.broadcast %652 : vector<1x256xf32> to vector<4x256xf32>
      %656 = vector.broadcast %654 : vector<4x1xf32> to vector<4x256xf32>
      %657 = arith.mulf %655, %656 : vector<4x256xf32>
      %658 = arith.addf %648, %657 : vector<4x256xf32>
      %659 = vector.extract_strided_slice %651 {offsets = [1, 0], sizes = [1, 256], strides = [1, 1]} : vector<4x256xf32> to vector<1x256xf32>
      %c1_338 = arith.constant 1 : index
      %c1_339 = arith.constant 1 : index
      %c0_340 = arith.constant 0 : index
      %c0_341 = arith.constant 0 : index
      %660 = vector.load %arg3[%c1_338, %c1_339, %c0_340, %c0_341] : memref<9x4x4x1xf32, #tpu.memory_space<vmem>>, vector<1x1x4x1xf32>
      %661 = vector.shape_cast %660 : vector<1x1x4x1xf32> to vector<4x1xf32>
      %662 = vector.broadcast %659 : vector<1x256xf32> to vector<4x256xf32>
      %663 = vector.broadcast %661 : vector<4x1xf32> to vector<4x256xf32>
      %664 = arith.mulf %662, %663 : vector<4x256xf32>
      %665 = arith.addf %658, %664 : vector<4x256xf32>
      %666 = vector.extract_strided_slice %651 {offsets = [2, 0], sizes = [1, 256], strides = [1, 1]} : vector<4x256xf32> to vector<1x256xf32>
      %c1_342 = arith.constant 1 : index
      %c2_343 = arith.constant 2 : index
      %c0_344 = arith.constant 0 : index
      %c0_345 = arith.constant 0 : index
      %667 = vector.load %arg3[%c1_342, %c2_343, %c0_344, %c0_345] : memref<9x4x4x1xf32, #tpu.memory_space<vmem>>, vector<1x1x4x1xf32>
      %668 = vector.shape_cast %667 : vector<1x1x4x1xf32> to vector<4x1xf32>
      %669 = vector.broadcast %666 : vector<1x256xf32> to vector<4x256xf32>
      %670 = vector.broadcast %668 : vector<4x1xf32> to vector<4x256xf32>
      %671 = arith.mulf %669, %670 : vector<4x256xf32>
      %672 = arith.addf %665, %671 : vector<4x256xf32>
      %673 = vector.extract_strided_slice %651 {offsets = [3, 0], sizes = [1, 256], strides = [1, 1]} : vector<4x256xf32> to vector<1x256xf32>
      %c1_346 = arith.constant 1 : index
      %c3_347 = arith.constant 3 : index
      %c0_348 = arith.constant 0 : index
      %c0_349 = arith.constant 0 : index
      %674 = vector.load %arg3[%c1_346, %c3_347, %c0_348, %c0_349] : memref<9x4x4x1xf32, #tpu.memory_space<vmem>>, vector<1x1x4x1xf32>
      %675 = vector.shape_cast %674 : vector<1x1x4x1xf32> to vector<4x1xf32>
      %676 = vector.broadcast %673 : vector<1x256xf32> to vector<4x256xf32>
      %677 = vector.broadcast %675 : vector<4x1xf32> to vector<4x256xf32>
      %678 = arith.mulf %676, %677 : vector<4x256xf32>
      %679 = arith.addf %672, %678 : vector<4x256xf32>
      %c15_i32_350 = arith.constant 15 : i32
      %680 = tpu.dynamic_rotate %618 by %c15_i32_350 dim 1 : vector<4x256xf32>, i32 -> vector<4x256xf32>
      %681 = vector.broadcast %29 : vector<1x256xf32> to vector<4x256xf32>
      %682 = arith.mulf %680, %681 : vector<4x256xf32>
      %683 = vector.extract_strided_slice %682 {offsets = [0, 0], sizes = [1, 256], strides = [1, 1]} : vector<4x256xf32> to vector<1x256xf32>
      %c2_351 = arith.constant 2 : index
      %c0_352 = arith.constant 0 : index
      %c0_353 = arith.constant 0 : index
      %c0_354 = arith.constant 0 : index
      %684 = vector.load %arg3[%c2_351, %c0_352, %c0_353, %c0_354] : memref<9x4x4x1xf32, #tpu.memory_space<vmem>>, vector<1x1x4x1xf32>
      %685 = vector.shape_cast %684 : vector<1x1x4x1xf32> to vector<4x1xf32>
      %686 = vector.broadcast %683 : vector<1x256xf32> to vector<4x256xf32>
      %687 = vector.broadcast %685 : vector<4x1xf32> to vector<4x256xf32>
      %688 = arith.mulf %686, %687 : vector<4x256xf32>
      %689 = arith.addf %679, %688 : vector<4x256xf32>
      %690 = vector.extract_strided_slice %682 {offsets = [1, 0], sizes = [1, 256], strides = [1, 1]} : vector<4x256xf32> to vector<1x256xf32>
      %c2_355 = arith.constant 2 : index
      %c1_356 = arith.constant 1 : index
      %c0_357 = arith.constant 0 : index
      %c0_358 = arith.constant 0 : index
      %691 = vector.load %arg3[%c2_355, %c1_356, %c0_357, %c0_358] : memref<9x4x4x1xf32, #tpu.memory_space<vmem>>, vector<1x1x4x1xf32>
      %692 = vector.shape_cast %691 : vector<1x1x4x1xf32> to vector<4x1xf32>
      %693 = vector.broadcast %690 : vector<1x256xf32> to vector<4x256xf32>
      %694 = vector.broadcast %692 : vector<4x1xf32> to vector<4x256xf32>
      %695 = arith.mulf %693, %694 : vector<4x256xf32>
      %696 = arith.addf %689, %695 : vector<4x256xf32>
      %697 = vector.extract_strided_slice %682 {offsets = [2, 0], sizes = [1, 256], strides = [1, 1]} : vector<4x256xf32> to vector<1x256xf32>
      %c2_359 = arith.constant 2 : index
      %c2_360 = arith.constant 2 : index
      %c0_361 = arith.constant 0 : index
      %c0_362 = arith.constant 0 : index
      %698 = vector.load %arg3[%c2_359, %c2_360, %c0_361, %c0_362] : memref<9x4x4x1xf32, #tpu.memory_space<vmem>>, vector<1x1x4x1xf32>
      %699 = vector.shape_cast %698 : vector<1x1x4x1xf32> to vector<4x1xf32>
      %700 = vector.broadcast %697 : vector<1x256xf32> to vector<4x256xf32>
      %701 = vector.broadcast %699 : vector<4x1xf32> to vector<4x256xf32>
      %702 = arith.mulf %700, %701 : vector<4x256xf32>
      %703 = arith.addf %696, %702 : vector<4x256xf32>
      %704 = vector.extract_strided_slice %682 {offsets = [3, 0], sizes = [1, 256], strides = [1, 1]} : vector<4x256xf32> to vector<1x256xf32>
      %c2_363 = arith.constant 2 : index
      %c3_364 = arith.constant 3 : index
      %c0_365 = arith.constant 0 : index
      %c0_366 = arith.constant 0 : index
      %705 = vector.load %arg3[%c2_363, %c3_364, %c0_365, %c0_366] : memref<9x4x4x1xf32, #tpu.memory_space<vmem>>, vector<1x1x4x1xf32>
      %706 = vector.shape_cast %705 : vector<1x1x4x1xf32> to vector<4x1xf32>
      %707 = vector.broadcast %704 : vector<1x256xf32> to vector<4x256xf32>
      %708 = vector.broadcast %706 : vector<4x1xf32> to vector<4x256xf32>
      %709 = arith.mulf %707, %708 : vector<4x256xf32>
      %710 = arith.addf %703, %709 : vector<4x256xf32>
      %c1_i32_367 = arith.constant 1 : i32
      %711 = tpu.dynamic_rotate %618 by %c1_i32_367 dim 1 : vector<4x256xf32>, i32 -> vector<4x256xf32>
      %712 = vector.broadcast %23 : vector<1x256xf32> to vector<4x256xf32>
      %713 = arith.mulf %711, %712 : vector<4x256xf32>
      %714 = vector.extract_strided_slice %713 {offsets = [0, 0], sizes = [1, 256], strides = [1, 1]} : vector<4x256xf32> to vector<1x256xf32>
      %c3_368 = arith.constant 3 : index
      %c0_369 = arith.constant 0 : index
      %c0_370 = arith.constant 0 : index
      %c0_371 = arith.constant 0 : index
      %715 = vector.load %arg3[%c3_368, %c0_369, %c0_370, %c0_371] : memref<9x4x4x1xf32, #tpu.memory_space<vmem>>, vector<1x1x4x1xf32>
      %716 = vector.shape_cast %715 : vector<1x1x4x1xf32> to vector<4x1xf32>
      %717 = vector.broadcast %714 : vector<1x256xf32> to vector<4x256xf32>
      %718 = vector.broadcast %716 : vector<4x1xf32> to vector<4x256xf32>
      %719 = arith.mulf %717, %718 : vector<4x256xf32>
      %720 = arith.addf %710, %719 : vector<4x256xf32>
      %721 = vector.extract_strided_slice %713 {offsets = [1, 0], sizes = [1, 256], strides = [1, 1]} : vector<4x256xf32> to vector<1x256xf32>
      %c3_372 = arith.constant 3 : index
      %c1_373 = arith.constant 1 : index
      %c0_374 = arith.constant 0 : index
      %c0_375 = arith.constant 0 : index
      %722 = vector.load %arg3[%c3_372, %c1_373, %c0_374, %c0_375] : memref<9x4x4x1xf32, #tpu.memory_space<vmem>>, vector<1x1x4x1xf32>
      %723 = vector.shape_cast %722 : vector<1x1x4x1xf32> to vector<4x1xf32>
      %724 = vector.broadcast %721 : vector<1x256xf32> to vector<4x256xf32>
      %725 = vector.broadcast %723 : vector<4x1xf32> to vector<4x256xf32>
      %726 = arith.mulf %724, %725 : vector<4x256xf32>
      %727 = arith.addf %720, %726 : vector<4x256xf32>
      %728 = vector.extract_strided_slice %713 {offsets = [2, 0], sizes = [1, 256], strides = [1, 1]} : vector<4x256xf32> to vector<1x256xf32>
      %c3_376 = arith.constant 3 : index
      %c2_377 = arith.constant 2 : index
      %c0_378 = arith.constant 0 : index
      %c0_379 = arith.constant 0 : index
      %729 = vector.load %arg3[%c3_376, %c2_377, %c0_378, %c0_379] : memref<9x4x4x1xf32, #tpu.memory_space<vmem>>, vector<1x1x4x1xf32>
      %730 = vector.shape_cast %729 : vector<1x1x4x1xf32> to vector<4x1xf32>
      %731 = vector.broadcast %728 : vector<1x256xf32> to vector<4x256xf32>
      %732 = vector.broadcast %730 : vector<4x1xf32> to vector<4x256xf32>
      %733 = arith.mulf %731, %732 : vector<4x256xf32>
      %734 = arith.addf %727, %733 : vector<4x256xf32>
      %735 = vector.extract_strided_slice %713 {offsets = [3, 0], sizes = [1, 256], strides = [1, 1]} : vector<4x256xf32> to vector<1x256xf32>
      %c3_380 = arith.constant 3 : index
      %c3_381 = arith.constant 3 : index
      %c0_382 = arith.constant 0 : index
      %c0_383 = arith.constant 0 : index
      %736 = vector.load %arg3[%c3_380, %c3_381, %c0_382, %c0_383] : memref<9x4x4x1xf32, #tpu.memory_space<vmem>>, vector<1x1x4x1xf32>
      %737 = vector.shape_cast %736 : vector<1x1x4x1xf32> to vector<4x1xf32>
      %738 = vector.broadcast %735 : vector<1x256xf32> to vector<4x256xf32>
      %739 = vector.broadcast %737 : vector<4x1xf32> to vector<4x256xf32>
      %740 = arith.mulf %738, %739 : vector<4x256xf32>
      %741 = arith.addf %734, %740 : vector<4x256xf32>
      %742 = vector.extract_strided_slice %618 {offsets = [0, 0], sizes = [1, 256], strides = [1, 1]} : vector<4x256xf32> to vector<1x256xf32>
      %c4_384 = arith.constant 4 : index
      %c0_385 = arith.constant 0 : index
      %c0_386 = arith.constant 0 : index
      %c0_387 = arith.constant 0 : index
      %743 = vector.load %arg3[%c4_384, %c0_385, %c0_386, %c0_387] : memref<9x4x4x1xf32, #tpu.memory_space<vmem>>, vector<1x1x4x1xf32>
      %744 = vector.shape_cast %743 : vector<1x1x4x1xf32> to vector<4x1xf32>
      %745 = vector.broadcast %742 : vector<1x256xf32> to vector<4x256xf32>
      %746 = vector.broadcast %744 : vector<4x1xf32> to vector<4x256xf32>
      %747 = arith.mulf %745, %746 : vector<4x256xf32>
      %748 = arith.addf %741, %747 : vector<4x256xf32>
      %749 = vector.extract_strided_slice %618 {offsets = [1, 0], sizes = [1, 256], strides = [1, 1]} : vector<4x256xf32> to vector<1x256xf32>
      %c4_388 = arith.constant 4 : index
      %c1_389 = arith.constant 1 : index
      %c0_390 = arith.constant 0 : index
      %c0_391 = arith.constant 0 : index
      %750 = vector.load %arg3[%c4_388, %c1_389, %c0_390, %c0_391] : memref<9x4x4x1xf32, #tpu.memory_space<vmem>>, vector<1x1x4x1xf32>
      %751 = vector.shape_cast %750 : vector<1x1x4x1xf32> to vector<4x1xf32>
      %752 = vector.broadcast %749 : vector<1x256xf32> to vector<4x256xf32>
      %753 = vector.broadcast %751 : vector<4x1xf32> to vector<4x256xf32>
      %754 = arith.mulf %752, %753 : vector<4x256xf32>
      %755 = arith.addf %748, %754 : vector<4x256xf32>
      %756 = vector.extract_strided_slice %618 {offsets = [2, 0], sizes = [1, 256], strides = [1, 1]} : vector<4x256xf32> to vector<1x256xf32>
      %c4_392 = arith.constant 4 : index
      %c2_393 = arith.constant 2 : index
      %c0_394 = arith.constant 0 : index
      %c0_395 = arith.constant 0 : index
      %757 = vector.load %arg3[%c4_392, %c2_393, %c0_394, %c0_395] : memref<9x4x4x1xf32, #tpu.memory_space<vmem>>, vector<1x1x4x1xf32>
      %758 = vector.shape_cast %757 : vector<1x1x4x1xf32> to vector<4x1xf32>
      %759 = vector.broadcast %756 : vector<1x256xf32> to vector<4x256xf32>
      %760 = vector.broadcast %758 : vector<4x1xf32> to vector<4x256xf32>
      %761 = arith.mulf %759, %760 : vector<4x256xf32>
      %762 = arith.addf %755, %761 : vector<4x256xf32>
      %763 = vector.extract_strided_slice %618 {offsets = [3, 0], sizes = [1, 256], strides = [1, 1]} : vector<4x256xf32> to vector<1x256xf32>
      %c4_396 = arith.constant 4 : index
      %c3_397 = arith.constant 3 : index
      %c0_398 = arith.constant 0 : index
      %c0_399 = arith.constant 0 : index
      %764 = vector.load %arg3[%c4_396, %c3_397, %c0_398, %c0_399] : memref<9x4x4x1xf32, #tpu.memory_space<vmem>>, vector<1x1x4x1xf32>
      %765 = vector.shape_cast %764 : vector<1x1x4x1xf32> to vector<4x1xf32>
      %766 = vector.broadcast %763 : vector<1x256xf32> to vector<4x256xf32>
      %767 = vector.broadcast %765 : vector<4x1xf32> to vector<4x256xf32>
      %768 = arith.mulf %766, %767 : vector<4x256xf32>
      %769 = arith.addf %762, %768 : vector<4x256xf32>
      %c255_i32_400 = arith.constant 255 : i32
      %770 = tpu.dynamic_rotate %618 by %c255_i32_400 dim 1 : vector<4x256xf32>, i32 -> vector<4x256xf32>
      %771 = vector.broadcast %27 : vector<1x256xf32> to vector<4x256xf32>
      %772 = arith.mulf %770, %771 : vector<4x256xf32>
      %773 = vector.extract_strided_slice %772 {offsets = [0, 0], sizes = [1, 256], strides = [1, 1]} : vector<4x256xf32> to vector<1x256xf32>
      %c5_401 = arith.constant 5 : index
      %c0_402 = arith.constant 0 : index
      %c0_403 = arith.constant 0 : index
      %c0_404 = arith.constant 0 : index
      %774 = vector.load %arg3[%c5_401, %c0_402, %c0_403, %c0_404] : memref<9x4x4x1xf32, #tpu.memory_space<vmem>>, vector<1x1x4x1xf32>
      %775 = vector.shape_cast %774 : vector<1x1x4x1xf32> to vector<4x1xf32>
      %776 = vector.broadcast %773 : vector<1x256xf32> to vector<4x256xf32>
      %777 = vector.broadcast %775 : vector<4x1xf32> to vector<4x256xf32>
      %778 = arith.mulf %776, %777 : vector<4x256xf32>
      %779 = arith.addf %769, %778 : vector<4x256xf32>
      %780 = vector.extract_strided_slice %772 {offsets = [1, 0], sizes = [1, 256], strides = [1, 1]} : vector<4x256xf32> to vector<1x256xf32>
      %c5_405 = arith.constant 5 : index
      %c1_406 = arith.constant 1 : index
      %c0_407 = arith.constant 0 : index
      %c0_408 = arith.constant 0 : index
      %781 = vector.load %arg3[%c5_405, %c1_406, %c0_407, %c0_408] : memref<9x4x4x1xf32, #tpu.memory_space<vmem>>, vector<1x1x4x1xf32>
      %782 = vector.shape_cast %781 : vector<1x1x4x1xf32> to vector<4x1xf32>
      %783 = vector.broadcast %780 : vector<1x256xf32> to vector<4x256xf32>
      %784 = vector.broadcast %782 : vector<4x1xf32> to vector<4x256xf32>
      %785 = arith.mulf %783, %784 : vector<4x256xf32>
      %786 = arith.addf %779, %785 : vector<4x256xf32>
      %787 = vector.extract_strided_slice %772 {offsets = [2, 0], sizes = [1, 256], strides = [1, 1]} : vector<4x256xf32> to vector<1x256xf32>
      %c5_409 = arith.constant 5 : index
      %c2_410 = arith.constant 2 : index
      %c0_411 = arith.constant 0 : index
      %c0_412 = arith.constant 0 : index
      %788 = vector.load %arg3[%c5_409, %c2_410, %c0_411, %c0_412] : memref<9x4x4x1xf32, #tpu.memory_space<vmem>>, vector<1x1x4x1xf32>
      %789 = vector.shape_cast %788 : vector<1x1x4x1xf32> to vector<4x1xf32>
      %790 = vector.broadcast %787 : vector<1x256xf32> to vector<4x256xf32>
      %791 = vector.broadcast %789 : vector<4x1xf32> to vector<4x256xf32>
      %792 = arith.mulf %790, %791 : vector<4x256xf32>
      %793 = arith.addf %786, %792 : vector<4x256xf32>
      %794 = vector.extract_strided_slice %772 {offsets = [3, 0], sizes = [1, 256], strides = [1, 1]} : vector<4x256xf32> to vector<1x256xf32>
      %c5_413 = arith.constant 5 : index
      %c3_414 = arith.constant 3 : index
      %c0_415 = arith.constant 0 : index
      %c0_416 = arith.constant 0 : index
      %795 = vector.load %arg3[%c5_413, %c3_414, %c0_415, %c0_416] : memref<9x4x4x1xf32, #tpu.memory_space<vmem>>, vector<1x1x4x1xf32>
      %796 = vector.shape_cast %795 : vector<1x1x4x1xf32> to vector<4x1xf32>
      %797 = vector.broadcast %794 : vector<1x256xf32> to vector<4x256xf32>
      %798 = vector.broadcast %796 : vector<4x1xf32> to vector<4x256xf32>
      %799 = arith.mulf %797, %798 : vector<4x256xf32>
      %800 = arith.addf %793, %799 : vector<4x256xf32>
      %c241_i32_417 = arith.constant 241 : i32
      %801 = tpu.dynamic_rotate %618 by %c241_i32_417 dim 1 : vector<4x256xf32>, i32 -> vector<4x256xf32>
      %802 = vector.broadcast %30 : vector<1x256xf32> to vector<4x256xf32>
      %803 = arith.mulf %801, %802 : vector<4x256xf32>
      %804 = vector.extract_strided_slice %803 {offsets = [0, 0], sizes = [1, 256], strides = [1, 1]} : vector<4x256xf32> to vector<1x256xf32>
      %c6_418 = arith.constant 6 : index
      %c0_419 = arith.constant 0 : index
      %c0_420 = arith.constant 0 : index
      %c0_421 = arith.constant 0 : index
      %805 = vector.load %arg3[%c6_418, %c0_419, %c0_420, %c0_421] : memref<9x4x4x1xf32, #tpu.memory_space<vmem>>, vector<1x1x4x1xf32>
      %806 = vector.shape_cast %805 : vector<1x1x4x1xf32> to vector<4x1xf32>
      %807 = vector.broadcast %804 : vector<1x256xf32> to vector<4x256xf32>
      %808 = vector.broadcast %806 : vector<4x1xf32> to vector<4x256xf32>
      %809 = arith.mulf %807, %808 : vector<4x256xf32>
      %810 = arith.addf %800, %809 : vector<4x256xf32>
      %811 = vector.extract_strided_slice %803 {offsets = [1, 0], sizes = [1, 256], strides = [1, 1]} : vector<4x256xf32> to vector<1x256xf32>
      %c6_422 = arith.constant 6 : index
      %c1_423 = arith.constant 1 : index
      %c0_424 = arith.constant 0 : index
      %c0_425 = arith.constant 0 : index
      %812 = vector.load %arg3[%c6_422, %c1_423, %c0_424, %c0_425] : memref<9x4x4x1xf32, #tpu.memory_space<vmem>>, vector<1x1x4x1xf32>
      %813 = vector.shape_cast %812 : vector<1x1x4x1xf32> to vector<4x1xf32>
      %814 = vector.broadcast %811 : vector<1x256xf32> to vector<4x256xf32>
      %815 = vector.broadcast %813 : vector<4x1xf32> to vector<4x256xf32>
      %816 = arith.mulf %814, %815 : vector<4x256xf32>
      %817 = arith.addf %810, %816 : vector<4x256xf32>
      %818 = vector.extract_strided_slice %803 {offsets = [2, 0], sizes = [1, 256], strides = [1, 1]} : vector<4x256xf32> to vector<1x256xf32>
      %c6_426 = arith.constant 6 : index
      %c2_427 = arith.constant 2 : index
      %c0_428 = arith.constant 0 : index
      %c0_429 = arith.constant 0 : index
      %819 = vector.load %arg3[%c6_426, %c2_427, %c0_428, %c0_429] : memref<9x4x4x1xf32, #tpu.memory_space<vmem>>, vector<1x1x4x1xf32>
      %820 = vector.shape_cast %819 : vector<1x1x4x1xf32> to vector<4x1xf32>
      %821 = vector.broadcast %818 : vector<1x256xf32> to vector<4x256xf32>
      %822 = vector.broadcast %820 : vector<4x1xf32> to vector<4x256xf32>
      %823 = arith.mulf %821, %822 : vector<4x256xf32>
      %824 = arith.addf %817, %823 : vector<4x256xf32>
      %825 = vector.extract_strided_slice %803 {offsets = [3, 0], sizes = [1, 256], strides = [1, 1]} : vector<4x256xf32> to vector<1x256xf32>
      %c6_430 = arith.constant 6 : index
      %c3_431 = arith.constant 3 : index
      %c0_432 = arith.constant 0 : index
      %c0_433 = arith.constant 0 : index
      %826 = vector.load %arg3[%c6_430, %c3_431, %c0_432, %c0_433] : memref<9x4x4x1xf32, #tpu.memory_space<vmem>>, vector<1x1x4x1xf32>
      %827 = vector.shape_cast %826 : vector<1x1x4x1xf32> to vector<4x1xf32>
      %828 = vector.broadcast %825 : vector<1x256xf32> to vector<4x256xf32>
      %829 = vector.broadcast %827 : vector<4x1xf32> to vector<4x256xf32>
      %830 = arith.mulf %828, %829 : vector<4x256xf32>
      %831 = arith.addf %824, %830 : vector<4x256xf32>
      %c240_i32_434 = arith.constant 240 : i32
      %832 = tpu.dynamic_rotate %618 by %c240_i32_434 dim 1 : vector<4x256xf32>, i32 -> vector<4x256xf32>
      %833 = vector.broadcast %19 : vector<1x256xf32> to vector<4x256xf32>
      %834 = arith.mulf %832, %833 : vector<4x256xf32>
      %835 = vector.extract_strided_slice %834 {offsets = [0, 0], sizes = [1, 256], strides = [1, 1]} : vector<4x256xf32> to vector<1x256xf32>
      %c7_435 = arith.constant 7 : index
      %c0_436 = arith.constant 0 : index
      %c0_437 = arith.constant 0 : index
      %c0_438 = arith.constant 0 : index
      %836 = vector.load %arg3[%c7_435, %c0_436, %c0_437, %c0_438] : memref<9x4x4x1xf32, #tpu.memory_space<vmem>>, vector<1x1x4x1xf32>
      %837 = vector.shape_cast %836 : vector<1x1x4x1xf32> to vector<4x1xf32>
      %838 = vector.broadcast %835 : vector<1x256xf32> to vector<4x256xf32>
      %839 = vector.broadcast %837 : vector<4x1xf32> to vector<4x256xf32>
      %840 = arith.mulf %838, %839 : vector<4x256xf32>
      %841 = arith.addf %831, %840 : vector<4x256xf32>
      %842 = vector.extract_strided_slice %834 {offsets = [1, 0], sizes = [1, 256], strides = [1, 1]} : vector<4x256xf32> to vector<1x256xf32>
      %c7_439 = arith.constant 7 : index
      %c1_440 = arith.constant 1 : index
      %c0_441 = arith.constant 0 : index
      %c0_442 = arith.constant 0 : index
      %843 = vector.load %arg3[%c7_439, %c1_440, %c0_441, %c0_442] : memref<9x4x4x1xf32, #tpu.memory_space<vmem>>, vector<1x1x4x1xf32>
      %844 = vector.shape_cast %843 : vector<1x1x4x1xf32> to vector<4x1xf32>
      %845 = vector.broadcast %842 : vector<1x256xf32> to vector<4x256xf32>
      %846 = vector.broadcast %844 : vector<4x1xf32> to vector<4x256xf32>
      %847 = arith.mulf %845, %846 : vector<4x256xf32>
      %848 = arith.addf %841, %847 : vector<4x256xf32>
      %849 = vector.extract_strided_slice %834 {offsets = [2, 0], sizes = [1, 256], strides = [1, 1]} : vector<4x256xf32> to vector<1x256xf32>
      %c7_443 = arith.constant 7 : index
      %c2_444 = arith.constant 2 : index
      %c0_445 = arith.constant 0 : index
      %c0_446 = arith.constant 0 : index
      %850 = vector.load %arg3[%c7_443, %c2_444, %c0_445, %c0_446] : memref<9x4x4x1xf32, #tpu.memory_space<vmem>>, vector<1x1x4x1xf32>
      %851 = vector.shape_cast %850 : vector<1x1x4x1xf32> to vector<4x1xf32>
      %852 = vector.broadcast %849 : vector<1x256xf32> to vector<4x256xf32>
      %853 = vector.broadcast %851 : vector<4x1xf32> to vector<4x256xf32>
      %854 = arith.mulf %852, %853 : vector<4x256xf32>
      %855 = arith.addf %848, %854 : vector<4x256xf32>
      %856 = vector.extract_strided_slice %834 {offsets = [3, 0], sizes = [1, 256], strides = [1, 1]} : vector<4x256xf32> to vector<1x256xf32>
      %c7_447 = arith.constant 7 : index
      %c3_448 = arith.constant 3 : index
      %c0_449 = arith.constant 0 : index
      %c0_450 = arith.constant 0 : index
      %857 = vector.load %arg3[%c7_447, %c3_448, %c0_449, %c0_450] : memref<9x4x4x1xf32, #tpu.memory_space<vmem>>, vector<1x1x4x1xf32>
      %858 = vector.shape_cast %857 : vector<1x1x4x1xf32> to vector<4x1xf32>
      %859 = vector.broadcast %856 : vector<1x256xf32> to vector<4x256xf32>
      %860 = vector.broadcast %858 : vector<4x1xf32> to vector<4x256xf32>
      %861 = arith.mulf %859, %860 : vector<4x256xf32>
      %862 = arith.addf %855, %861 : vector<4x256xf32>
      %c239_i32_451 = arith.constant 239 : i32
      %863 = tpu.dynamic_rotate %618 by %c239_i32_451 dim 1 : vector<4x256xf32>, i32 -> vector<4x256xf32>
      %864 = vector.broadcast %31 : vector<1x256xf32> to vector<4x256xf32>
      %865 = arith.mulf %863, %864 : vector<4x256xf32>
      %866 = vector.extract_strided_slice %865 {offsets = [0, 0], sizes = [1, 256], strides = [1, 1]} : vector<4x256xf32> to vector<1x256xf32>
      %c8_452 = arith.constant 8 : index
      %c0_453 = arith.constant 0 : index
      %c0_454 = arith.constant 0 : index
      %c0_455 = arith.constant 0 : index
      %867 = vector.load %arg3[%c8_452, %c0_453, %c0_454, %c0_455] : memref<9x4x4x1xf32, #tpu.memory_space<vmem>>, vector<1x1x4x1xf32>
      %868 = vector.shape_cast %867 : vector<1x1x4x1xf32> to vector<4x1xf32>
      %869 = vector.broadcast %866 : vector<1x256xf32> to vector<4x256xf32>
      %870 = vector.broadcast %868 : vector<4x1xf32> to vector<4x256xf32>
      %871 = arith.mulf %869, %870 : vector<4x256xf32>
      %872 = arith.addf %862, %871 : vector<4x256xf32>
      %873 = vector.extract_strided_slice %865 {offsets = [1, 0], sizes = [1, 256], strides = [1, 1]} : vector<4x256xf32> to vector<1x256xf32>
      %c8_456 = arith.constant 8 : index
      %c1_457 = arith.constant 1 : index
      %c0_458 = arith.constant 0 : index
      %c0_459 = arith.constant 0 : index
      %874 = vector.load %arg3[%c8_456, %c1_457, %c0_458, %c0_459] : memref<9x4x4x1xf32, #tpu.memory_space<vmem>>, vector<1x1x4x1xf32>
      %875 = vector.shape_cast %874 : vector<1x1x4x1xf32> to vector<4x1xf32>
      %876 = vector.broadcast %873 : vector<1x256xf32> to vector<4x256xf32>
      %877 = vector.broadcast %875 : vector<4x1xf32> to vector<4x256xf32>
      %878 = arith.mulf %876, %877 : vector<4x256xf32>
      %879 = arith.addf %872, %878 : vector<4x256xf32>
      %880 = vector.extract_strided_slice %865 {offsets = [2, 0], sizes = [1, 256], strides = [1, 1]} : vector<4x256xf32> to vector<1x256xf32>
      %c8_460 = arith.constant 8 : index
      %c2_461 = arith.constant 2 : index
      %c0_462 = arith.constant 0 : index
      %c0_463 = arith.constant 0 : index
      %881 = vector.load %arg3[%c8_460, %c2_461, %c0_462, %c0_463] : memref<9x4x4x1xf32, #tpu.memory_space<vmem>>, vector<1x1x4x1xf32>
      %882 = vector.shape_cast %881 : vector<1x1x4x1xf32> to vector<4x1xf32>
      %883 = vector.broadcast %880 : vector<1x256xf32> to vector<4x256xf32>
      %884 = vector.broadcast %882 : vector<4x1xf32> to vector<4x256xf32>
      %885 = arith.mulf %883, %884 : vector<4x256xf32>
      %886 = arith.addf %879, %885 : vector<4x256xf32>
      %887 = vector.extract_strided_slice %865 {offsets = [3, 0], sizes = [1, 256], strides = [1, 1]} : vector<4x256xf32> to vector<1x256xf32>
      %c8_464 = arith.constant 8 : index
      %c3_465 = arith.constant 3 : index
      %c0_466 = arith.constant 0 : index
      %c0_467 = arith.constant 0 : index
      %888 = vector.load %arg3[%c8_464, %c3_465, %c0_466, %c0_467] : memref<9x4x4x1xf32, #tpu.memory_space<vmem>>, vector<1x1x4x1xf32>
      %889 = vector.shape_cast %888 : vector<1x1x4x1xf32> to vector<4x1xf32>
      %890 = vector.broadcast %887 : vector<1x256xf32> to vector<4x256xf32>
      %891 = vector.broadcast %889 : vector<4x1xf32> to vector<4x256xf32>
      %892 = arith.mulf %890, %891 : vector<4x256xf32>
      %893 = arith.addf %886, %892 : vector<4x256xf32>
      %894 = vector.broadcast %32 : vector<4x1xf32> to vector<4x256xf32>
      %895 = arith.addf %893, %894 : vector<4x256xf32>
      %cst_468 = arith.constant dense<0.000000e+00> : vector<4xf32>
      %896 = vector.multi_reduction <add>, %895, %cst_468 [1] : vector<4x256xf32> to vector<4xf32>
      %897 = vector.shape_cast %896 : vector<4xf32> to vector<4x1xf32>
      %cst_469 = arith.constant 3.906250e-03 : f32
      %898 = vector.broadcast %cst_469 : f32 to vector<4x1xf32>
      %899 = arith.mulf %897, %898 : vector<4x1xf32>
      %900 = vector.broadcast %899 : vector<4x1xf32> to vector<4x256xf32>
      %901 = arith.subf %895, %900 : vector<4x256xf32>
      %902 = arith.mulf %901, %901 : vector<4x256xf32>
      %cst_470 = arith.constant dense<0.000000e+00> : vector<4xf32>
      %903 = vector.multi_reduction <add>, %902, %cst_470 [1] : vector<4x256xf32> to vector<4xf32>
      %904 = vector.shape_cast %903 : vector<4xf32> to vector<4x1xf32>
      %cst_471 = arith.constant 3.906250e-03 : f32
      %905 = vector.broadcast %cst_471 : f32 to vector<4x1xf32>
      %906 = arith.mulf %904, %905 : vector<4x1xf32>
      %cst_472 = arith.constant 9.99999974E-6 : f32
      %907 = vector.broadcast %cst_472 : f32 to vector<4x1xf32>
      %908 = arith.addf %906, %907 : vector<4x1xf32>
      %909 = math.rsqrt %908 : vector<4x1xf32>
      %910 = vector.broadcast %909 : vector<4x1xf32> to vector<4x256xf32>
      %911 = arith.mulf %901, %910 : vector<4x256xf32>
      %c17_i32_473 = arith.constant 17 : i32
      %912 = tpu.dynamic_rotate %911 by %c17_i32_473 dim 1 : vector<4x256xf32>, i32 -> vector<4x256xf32>
      %913 = vector.broadcast %28 : vector<1x256xf32> to vector<4x256xf32>
      %914 = arith.mulf %912, %913 : vector<4x256xf32>
      %915 = vector.extract_strided_slice %914 {offsets = [0, 0], sizes = [1, 256], strides = [1, 1]} : vector<4x256xf32> to vector<1x256xf32>
      %c0_474 = arith.constant 0 : index
      %c0_475 = arith.constant 0 : index
      %c0_476 = arith.constant 0 : index
      %c0_477 = arith.constant 0 : index
      %916 = vector.load %arg5[%c0_474, %c0_475, %c0_476, %c0_477] : memref<9x4x4x1xf32, #tpu.memory_space<vmem>>, vector<1x1x4x1xf32>
      %917 = vector.shape_cast %916 : vector<1x1x4x1xf32> to vector<4x1xf32>
      %918 = vector.broadcast %915 : vector<1x256xf32> to vector<4x256xf32>
      %919 = vector.broadcast %917 : vector<4x1xf32> to vector<4x256xf32>
      %920 = arith.mulf %918, %919 : vector<4x256xf32>
      %921 = vector.extract_strided_slice %914 {offsets = [1, 0], sizes = [1, 256], strides = [1, 1]} : vector<4x256xf32> to vector<1x256xf32>
      %c0_478 = arith.constant 0 : index
      %c1_479 = arith.constant 1 : index
      %c0_480 = arith.constant 0 : index
      %c0_481 = arith.constant 0 : index
      %922 = vector.load %arg5[%c0_478, %c1_479, %c0_480, %c0_481] : memref<9x4x4x1xf32, #tpu.memory_space<vmem>>, vector<1x1x4x1xf32>
      %923 = vector.shape_cast %922 : vector<1x1x4x1xf32> to vector<4x1xf32>
      %924 = vector.broadcast %921 : vector<1x256xf32> to vector<4x256xf32>
      %925 = vector.broadcast %923 : vector<4x1xf32> to vector<4x256xf32>
      %926 = arith.mulf %924, %925 : vector<4x256xf32>
      %927 = arith.addf %920, %926 : vector<4x256xf32>
      %928 = vector.extract_strided_slice %914 {offsets = [2, 0], sizes = [1, 256], strides = [1, 1]} : vector<4x256xf32> to vector<1x256xf32>
      %c0_482 = arith.constant 0 : index
      %c2_483 = arith.constant 2 : index
      %c0_484 = arith.constant 0 : index
      %c0_485 = arith.constant 0 : index
      %929 = vector.load %arg5[%c0_482, %c2_483, %c0_484, %c0_485] : memref<9x4x4x1xf32, #tpu.memory_space<vmem>>, vector<1x1x4x1xf32>
      %930 = vector.shape_cast %929 : vector<1x1x4x1xf32> to vector<4x1xf32>
      %931 = vector.broadcast %928 : vector<1x256xf32> to vector<4x256xf32>
      %932 = vector.broadcast %930 : vector<4x1xf32> to vector<4x256xf32>
      %933 = arith.mulf %931, %932 : vector<4x256xf32>
      %934 = arith.addf %927, %933 : vector<4x256xf32>
      %935 = vector.extract_strided_slice %914 {offsets = [3, 0], sizes = [1, 256], strides = [1, 1]} : vector<4x256xf32> to vector<1x256xf32>
      %c0_486 = arith.constant 0 : index
      %c3_487 = arith.constant 3 : index
      %c0_488 = arith.constant 0 : index
      %c0_489 = arith.constant 0 : index
      %936 = vector.load %arg5[%c0_486, %c3_487, %c0_488, %c0_489] : memref<9x4x4x1xf32, #tpu.memory_space<vmem>>, vector<1x1x4x1xf32>
      %937 = vector.shape_cast %936 : vector<1x1x4x1xf32> to vector<4x1xf32>
      %938 = vector.broadcast %935 : vector<1x256xf32> to vector<4x256xf32>
      %939 = vector.broadcast %937 : vector<4x1xf32> to vector<4x256xf32>
      %940 = arith.mulf %938, %939 : vector<4x256xf32>
      %941 = arith.addf %934, %940 : vector<4x256xf32>
      %c16_i32_490 = arith.constant 16 : i32
      %942 = tpu.dynamic_rotate %911 by %c16_i32_490 dim 1 : vector<4x256xf32>, i32 -> vector<4x256xf32>
      %943 = vector.broadcast %15 : vector<1x256xf32> to vector<4x256xf32>
      %944 = arith.mulf %942, %943 : vector<4x256xf32>
      %945 = vector.extract_strided_slice %944 {offsets = [0, 0], sizes = [1, 256], strides = [1, 1]} : vector<4x256xf32> to vector<1x256xf32>
      %c1_491 = arith.constant 1 : index
      %c0_492 = arith.constant 0 : index
      %c0_493 = arith.constant 0 : index
      %c0_494 = arith.constant 0 : index
      %946 = vector.load %arg5[%c1_491, %c0_492, %c0_493, %c0_494] : memref<9x4x4x1xf32, #tpu.memory_space<vmem>>, vector<1x1x4x1xf32>
      %947 = vector.shape_cast %946 : vector<1x1x4x1xf32> to vector<4x1xf32>
      %948 = vector.broadcast %945 : vector<1x256xf32> to vector<4x256xf32>
      %949 = vector.broadcast %947 : vector<4x1xf32> to vector<4x256xf32>
      %950 = arith.mulf %948, %949 : vector<4x256xf32>
      %951 = arith.addf %941, %950 : vector<4x256xf32>
      %952 = vector.extract_strided_slice %944 {offsets = [1, 0], sizes = [1, 256], strides = [1, 1]} : vector<4x256xf32> to vector<1x256xf32>
      %c1_495 = arith.constant 1 : index
      %c1_496 = arith.constant 1 : index
      %c0_497 = arith.constant 0 : index
      %c0_498 = arith.constant 0 : index
      %953 = vector.load %arg5[%c1_495, %c1_496, %c0_497, %c0_498] : memref<9x4x4x1xf32, #tpu.memory_space<vmem>>, vector<1x1x4x1xf32>
      %954 = vector.shape_cast %953 : vector<1x1x4x1xf32> to vector<4x1xf32>
      %955 = vector.broadcast %952 : vector<1x256xf32> to vector<4x256xf32>
      %956 = vector.broadcast %954 : vector<4x1xf32> to vector<4x256xf32>
      %957 = arith.mulf %955, %956 : vector<4x256xf32>
      %958 = arith.addf %951, %957 : vector<4x256xf32>
      %959 = vector.extract_strided_slice %944 {offsets = [2, 0], sizes = [1, 256], strides = [1, 1]} : vector<4x256xf32> to vector<1x256xf32>
      %c1_499 = arith.constant 1 : index
      %c2_500 = arith.constant 2 : index
      %c0_501 = arith.constant 0 : index
      %c0_502 = arith.constant 0 : index
      %960 = vector.load %arg5[%c1_499, %c2_500, %c0_501, %c0_502] : memref<9x4x4x1xf32, #tpu.memory_space<vmem>>, vector<1x1x4x1xf32>
      %961 = vector.shape_cast %960 : vector<1x1x4x1xf32> to vector<4x1xf32>
      %962 = vector.broadcast %959 : vector<1x256xf32> to vector<4x256xf32>
      %963 = vector.broadcast %961 : vector<4x1xf32> to vector<4x256xf32>
      %964 = arith.mulf %962, %963 : vector<4x256xf32>
      %965 = arith.addf %958, %964 : vector<4x256xf32>
      %966 = vector.extract_strided_slice %944 {offsets = [3, 0], sizes = [1, 256], strides = [1, 1]} : vector<4x256xf32> to vector<1x256xf32>
      %c1_503 = arith.constant 1 : index
      %c3_504 = arith.constant 3 : index
      %c0_505 = arith.constant 0 : index
      %c0_506 = arith.constant 0 : index
      %967 = vector.load %arg5[%c1_503, %c3_504, %c0_505, %c0_506] : memref<9x4x4x1xf32, #tpu.memory_space<vmem>>, vector<1x1x4x1xf32>
      %968 = vector.shape_cast %967 : vector<1x1x4x1xf32> to vector<4x1xf32>
      %969 = vector.broadcast %966 : vector<1x256xf32> to vector<4x256xf32>
      %970 = vector.broadcast %968 : vector<4x1xf32> to vector<4x256xf32>
      %971 = arith.mulf %969, %970 : vector<4x256xf32>
      %972 = arith.addf %965, %971 : vector<4x256xf32>
      %c15_i32_507 = arith.constant 15 : i32
      %973 = tpu.dynamic_rotate %911 by %c15_i32_507 dim 1 : vector<4x256xf32>, i32 -> vector<4x256xf32>
      %974 = vector.broadcast %29 : vector<1x256xf32> to vector<4x256xf32>
      %975 = arith.mulf %973, %974 : vector<4x256xf32>
      %976 = vector.extract_strided_slice %975 {offsets = [0, 0], sizes = [1, 256], strides = [1, 1]} : vector<4x256xf32> to vector<1x256xf32>
      %c2_508 = arith.constant 2 : index
      %c0_509 = arith.constant 0 : index
      %c0_510 = arith.constant 0 : index
      %c0_511 = arith.constant 0 : index
      %977 = vector.load %arg5[%c2_508, %c0_509, %c0_510, %c0_511] : memref<9x4x4x1xf32, #tpu.memory_space<vmem>>, vector<1x1x4x1xf32>
      %978 = vector.shape_cast %977 : vector<1x1x4x1xf32> to vector<4x1xf32>
      %979 = vector.broadcast %976 : vector<1x256xf32> to vector<4x256xf32>
      %980 = vector.broadcast %978 : vector<4x1xf32> to vector<4x256xf32>
      %981 = arith.mulf %979, %980 : vector<4x256xf32>
      %982 = arith.addf %972, %981 : vector<4x256xf32>
      %983 = vector.extract_strided_slice %975 {offsets = [1, 0], sizes = [1, 256], strides = [1, 1]} : vector<4x256xf32> to vector<1x256xf32>
      %c2_512 = arith.constant 2 : index
      %c1_513 = arith.constant 1 : index
      %c0_514 = arith.constant 0 : index
      %c0_515 = arith.constant 0 : index
      %984 = vector.load %arg5[%c2_512, %c1_513, %c0_514, %c0_515] : memref<9x4x4x1xf32, #tpu.memory_space<vmem>>, vector<1x1x4x1xf32>
      %985 = vector.shape_cast %984 : vector<1x1x4x1xf32> to vector<4x1xf32>
      %986 = vector.broadcast %983 : vector<1x256xf32> to vector<4x256xf32>
      %987 = vector.broadcast %985 : vector<4x1xf32> to vector<4x256xf32>
      %988 = arith.mulf %986, %987 : vector<4x256xf32>
      %989 = arith.addf %982, %988 : vector<4x256xf32>
      %990 = vector.extract_strided_slice %975 {offsets = [2, 0], sizes = [1, 256], strides = [1, 1]} : vector<4x256xf32> to vector<1x256xf32>
      %c2_516 = arith.constant 2 : index
      %c2_517 = arith.constant 2 : index
      %c0_518 = arith.constant 0 : index
      %c0_519 = arith.constant 0 : index
      %991 = vector.load %arg5[%c2_516, %c2_517, %c0_518, %c0_519] : memref<9x4x4x1xf32, #tpu.memory_space<vmem>>, vector<1x1x4x1xf32>
      %992 = vector.shape_cast %991 : vector<1x1x4x1xf32> to vector<4x1xf32>
      %993 = vector.broadcast %990 : vector<1x256xf32> to vector<4x256xf32>
      %994 = vector.broadcast %992 : vector<4x1xf32> to vector<4x256xf32>
      %995 = arith.mulf %993, %994 : vector<4x256xf32>
      %996 = arith.addf %989, %995 : vector<4x256xf32>
      %997 = vector.extract_strided_slice %975 {offsets = [3, 0], sizes = [1, 256], strides = [1, 1]} : vector<4x256xf32> to vector<1x256xf32>
      %c2_520 = arith.constant 2 : index
      %c3_521 = arith.constant 3 : index
      %c0_522 = arith.constant 0 : index
      %c0_523 = arith.constant 0 : index
      %998 = vector.load %arg5[%c2_520, %c3_521, %c0_522, %c0_523] : memref<9x4x4x1xf32, #tpu.memory_space<vmem>>, vector<1x1x4x1xf32>
      %999 = vector.shape_cast %998 : vector<1x1x4x1xf32> to vector<4x1xf32>
      %1000 = vector.broadcast %997 : vector<1x256xf32> to vector<4x256xf32>
      %1001 = vector.broadcast %999 : vector<4x1xf32> to vector<4x256xf32>
      %1002 = arith.mulf %1000, %1001 : vector<4x256xf32>
      %1003 = arith.addf %996, %1002 : vector<4x256xf32>
      %c1_i32_524 = arith.constant 1 : i32
      %1004 = tpu.dynamic_rotate %911 by %c1_i32_524 dim 1 : vector<4x256xf32>, i32 -> vector<4x256xf32>
      %1005 = vector.broadcast %23 : vector<1x256xf32> to vector<4x256xf32>
      %1006 = arith.mulf %1004, %1005 : vector<4x256xf32>
      %1007 = vector.extract_strided_slice %1006 {offsets = [0, 0], sizes = [1, 256], strides = [1, 1]} : vector<4x256xf32> to vector<1x256xf32>
      %c3_525 = arith.constant 3 : index
      %c0_526 = arith.constant 0 : index
      %c0_527 = arith.constant 0 : index
      %c0_528 = arith.constant 0 : index
      %1008 = vector.load %arg5[%c3_525, %c0_526, %c0_527, %c0_528] : memref<9x4x4x1xf32, #tpu.memory_space<vmem>>, vector<1x1x4x1xf32>
      %1009 = vector.shape_cast %1008 : vector<1x1x4x1xf32> to vector<4x1xf32>
      %1010 = vector.broadcast %1007 : vector<1x256xf32> to vector<4x256xf32>
      %1011 = vector.broadcast %1009 : vector<4x1xf32> to vector<4x256xf32>
      %1012 = arith.mulf %1010, %1011 : vector<4x256xf32>
      %1013 = arith.addf %1003, %1012 : vector<4x256xf32>
      %1014 = vector.extract_strided_slice %1006 {offsets = [1, 0], sizes = [1, 256], strides = [1, 1]} : vector<4x256xf32> to vector<1x256xf32>
      %c3_529 = arith.constant 3 : index
      %c1_530 = arith.constant 1 : index
      %c0_531 = arith.constant 0 : index
      %c0_532 = arith.constant 0 : index
      %1015 = vector.load %arg5[%c3_529, %c1_530, %c0_531, %c0_532] : memref<9x4x4x1xf32, #tpu.memory_space<vmem>>, vector<1x1x4x1xf32>
      %1016 = vector.shape_cast %1015 : vector<1x1x4x1xf32> to vector<4x1xf32>
      %1017 = vector.broadcast %1014 : vector<1x256xf32> to vector<4x256xf32>
      %1018 = vector.broadcast %1016 : vector<4x1xf32> to vector<4x256xf32>
      %1019 = arith.mulf %1017, %1018 : vector<4x256xf32>
      %1020 = arith.addf %1013, %1019 : vector<4x256xf32>
      %1021 = vector.extract_strided_slice %1006 {offsets = [2, 0], sizes = [1, 256], strides = [1, 1]} : vector<4x256xf32> to vector<1x256xf32>
      %c3_533 = arith.constant 3 : index
      %c2_534 = arith.constant 2 : index
      %c0_535 = arith.constant 0 : index
      %c0_536 = arith.constant 0 : index
      %1022 = vector.load %arg5[%c3_533, %c2_534, %c0_535, %c0_536] : memref<9x4x4x1xf32, #tpu.memory_space<vmem>>, vector<1x1x4x1xf32>
      %1023 = vector.shape_cast %1022 : vector<1x1x4x1xf32> to vector<4x1xf32>
      %1024 = vector.broadcast %1021 : vector<1x256xf32> to vector<4x256xf32>
      %1025 = vector.broadcast %1023 : vector<4x1xf32> to vector<4x256xf32>
      %1026 = arith.mulf %1024, %1025 : vector<4x256xf32>
      %1027 = arith.addf %1020, %1026 : vector<4x256xf32>
      %1028 = vector.extract_strided_slice %1006 {offsets = [3, 0], sizes = [1, 256], strides = [1, 1]} : vector<4x256xf32> to vector<1x256xf32>
      %c3_537 = arith.constant 3 : index
      %c3_538 = arith.constant 3 : index
      %c0_539 = arith.constant 0 : index
      %c0_540 = arith.constant 0 : index
      %1029 = vector.load %arg5[%c3_537, %c3_538, %c0_539, %c0_540] : memref<9x4x4x1xf32, #tpu.memory_space<vmem>>, vector<1x1x4x1xf32>
      %1030 = vector.shape_cast %1029 : vector<1x1x4x1xf32> to vector<4x1xf32>
      %1031 = vector.broadcast %1028 : vector<1x256xf32> to vector<4x256xf32>
      %1032 = vector.broadcast %1030 : vector<4x1xf32> to vector<4x256xf32>
      %1033 = arith.mulf %1031, %1032 : vector<4x256xf32>
      %1034 = arith.addf %1027, %1033 : vector<4x256xf32>
      %1035 = vector.extract_strided_slice %911 {offsets = [0, 0], sizes = [1, 256], strides = [1, 1]} : vector<4x256xf32> to vector<1x256xf32>
      %c4_541 = arith.constant 4 : index
      %c0_542 = arith.constant 0 : index
      %c0_543 = arith.constant 0 : index
      %c0_544 = arith.constant 0 : index
      %1036 = vector.load %arg5[%c4_541, %c0_542, %c0_543, %c0_544] : memref<9x4x4x1xf32, #tpu.memory_space<vmem>>, vector<1x1x4x1xf32>
      %1037 = vector.shape_cast %1036 : vector<1x1x4x1xf32> to vector<4x1xf32>
      %1038 = vector.broadcast %1035 : vector<1x256xf32> to vector<4x256xf32>
      %1039 = vector.broadcast %1037 : vector<4x1xf32> to vector<4x256xf32>
      %1040 = arith.mulf %1038, %1039 : vector<4x256xf32>
      %1041 = arith.addf %1034, %1040 : vector<4x256xf32>
      %1042 = vector.extract_strided_slice %911 {offsets = [1, 0], sizes = [1, 256], strides = [1, 1]} : vector<4x256xf32> to vector<1x256xf32>
      %c4_545 = arith.constant 4 : index
      %c1_546 = arith.constant 1 : index
      %c0_547 = arith.constant 0 : index
      %c0_548 = arith.constant 0 : index
      %1043 = vector.load %arg5[%c4_545, %c1_546, %c0_547, %c0_548] : memref<9x4x4x1xf32, #tpu.memory_space<vmem>>, vector<1x1x4x1xf32>
      %1044 = vector.shape_cast %1043 : vector<1x1x4x1xf32> to vector<4x1xf32>
      %1045 = vector.broadcast %1042 : vector<1x256xf32> to vector<4x256xf32>
      %1046 = vector.broadcast %1044 : vector<4x1xf32> to vector<4x256xf32>
      %1047 = arith.mulf %1045, %1046 : vector<4x256xf32>
      %1048 = arith.addf %1041, %1047 : vector<4x256xf32>
      %1049 = vector.extract_strided_slice %911 {offsets = [2, 0], sizes = [1, 256], strides = [1, 1]} : vector<4x256xf32> to vector<1x256xf32>
      %c4_549 = arith.constant 4 : index
      %c2_550 = arith.constant 2 : index
      %c0_551 = arith.constant 0 : index
      %c0_552 = arith.constant 0 : index
      %1050 = vector.load %arg5[%c4_549, %c2_550, %c0_551, %c0_552] : memref<9x4x4x1xf32, #tpu.memory_space<vmem>>, vector<1x1x4x1xf32>
      %1051 = vector.shape_cast %1050 : vector<1x1x4x1xf32> to vector<4x1xf32>
      %1052 = vector.broadcast %1049 : vector<1x256xf32> to vector<4x256xf32>
      %1053 = vector.broadcast %1051 : vector<4x1xf32> to vector<4x256xf32>
      %1054 = arith.mulf %1052, %1053 : vector<4x256xf32>
      %1055 = arith.addf %1048, %1054 : vector<4x256xf32>
      %1056 = vector.extract_strided_slice %911 {offsets = [3, 0], sizes = [1, 256], strides = [1, 1]} : vector<4x256xf32> to vector<1x256xf32>
      %c4_553 = arith.constant 4 : index
      %c3_554 = arith.constant 3 : index
      %c0_555 = arith.constant 0 : index
      %c0_556 = arith.constant 0 : index
      %1057 = vector.load %arg5[%c4_553, %c3_554, %c0_555, %c0_556] : memref<9x4x4x1xf32, #tpu.memory_space<vmem>>, vector<1x1x4x1xf32>
      %1058 = vector.shape_cast %1057 : vector<1x1x4x1xf32> to vector<4x1xf32>
      %1059 = vector.broadcast %1056 : vector<1x256xf32> to vector<4x256xf32>
      %1060 = vector.broadcast %1058 : vector<4x1xf32> to vector<4x256xf32>
      %1061 = arith.mulf %1059, %1060 : vector<4x256xf32>
      %1062 = arith.addf %1055, %1061 : vector<4x256xf32>
      %c255_i32_557 = arith.constant 255 : i32
      %1063 = tpu.dynamic_rotate %911 by %c255_i32_557 dim 1 : vector<4x256xf32>, i32 -> vector<4x256xf32>
      %1064 = vector.broadcast %27 : vector<1x256xf32> to vector<4x256xf32>
      %1065 = arith.mulf %1063, %1064 : vector<4x256xf32>
      %1066 = vector.extract_strided_slice %1065 {offsets = [0, 0], sizes = [1, 256], strides = [1, 1]} : vector<4x256xf32> to vector<1x256xf32>
      %c5_558 = arith.constant 5 : index
      %c0_559 = arith.constant 0 : index
      %c0_560 = arith.constant 0 : index
      %c0_561 = arith.constant 0 : index
      %1067 = vector.load %arg5[%c5_558, %c0_559, %c0_560, %c0_561] : memref<9x4x4x1xf32, #tpu.memory_space<vmem>>, vector<1x1x4x1xf32>
      %1068 = vector.shape_cast %1067 : vector<1x1x4x1xf32> to vector<4x1xf32>
      %1069 = vector.broadcast %1066 : vector<1x256xf32> to vector<4x256xf32>
      %1070 = vector.broadcast %1068 : vector<4x1xf32> to vector<4x256xf32>
      %1071 = arith.mulf %1069, %1070 : vector<4x256xf32>
      %1072 = arith.addf %1062, %1071 : vector<4x256xf32>
      %1073 = vector.extract_strided_slice %1065 {offsets = [1, 0], sizes = [1, 256], strides = [1, 1]} : vector<4x256xf32> to vector<1x256xf32>
      %c5_562 = arith.constant 5 : index
      %c1_563 = arith.constant 1 : index
      %c0_564 = arith.constant 0 : index
      %c0_565 = arith.constant 0 : index
      %1074 = vector.load %arg5[%c5_562, %c1_563, %c0_564, %c0_565] : memref<9x4x4x1xf32, #tpu.memory_space<vmem>>, vector<1x1x4x1xf32>
      %1075 = vector.shape_cast %1074 : vector<1x1x4x1xf32> to vector<4x1xf32>
      %1076 = vector.broadcast %1073 : vector<1x256xf32> to vector<4x256xf32>
      %1077 = vector.broadcast %1075 : vector<4x1xf32> to vector<4x256xf32>
      %1078 = arith.mulf %1076, %1077 : vector<4x256xf32>
      %1079 = arith.addf %1072, %1078 : vector<4x256xf32>
      %1080 = vector.extract_strided_slice %1065 {offsets = [2, 0], sizes = [1, 256], strides = [1, 1]} : vector<4x256xf32> to vector<1x256xf32>
      %c5_566 = arith.constant 5 : index
      %c2_567 = arith.constant 2 : index
      %c0_568 = arith.constant 0 : index
      %c0_569 = arith.constant 0 : index
      %1081 = vector.load %arg5[%c5_566, %c2_567, %c0_568, %c0_569] : memref<9x4x4x1xf32, #tpu.memory_space<vmem>>, vector<1x1x4x1xf32>
      %1082 = vector.shape_cast %1081 : vector<1x1x4x1xf32> to vector<4x1xf32>
      %1083 = vector.broadcast %1080 : vector<1x256xf32> to vector<4x256xf32>
      %1084 = vector.broadcast %1082 : vector<4x1xf32> to vector<4x256xf32>
      %1085 = arith.mulf %1083, %1084 : vector<4x256xf32>
      %1086 = arith.addf %1079, %1085 : vector<4x256xf32>
      %1087 = vector.extract_strided_slice %1065 {offsets = [3, 0], sizes = [1, 256], strides = [1, 1]} : vector<4x256xf32> to vector<1x256xf32>
      %c5_570 = arith.constant 5 : index
      %c3_571 = arith.constant 3 : index
      %c0_572 = arith.constant 0 : index
      %c0_573 = arith.constant 0 : index
      %1088 = vector.load %arg5[%c5_570, %c3_571, %c0_572, %c0_573] : memref<9x4x4x1xf32, #tpu.memory_space<vmem>>, vector<1x1x4x1xf32>
      %1089 = vector.shape_cast %1088 : vector<1x1x4x1xf32> to vector<4x1xf32>
      %1090 = vector.broadcast %1087 : vector<1x256xf32> to vector<4x256xf32>
      %1091 = vector.broadcast %1089 : vector<4x1xf32> to vector<4x256xf32>
      %1092 = arith.mulf %1090, %1091 : vector<4x256xf32>
      %1093 = arith.addf %1086, %1092 : vector<4x256xf32>
      %c241_i32_574 = arith.constant 241 : i32
      %1094 = tpu.dynamic_rotate %911 by %c241_i32_574 dim 1 : vector<4x256xf32>, i32 -> vector<4x256xf32>
      %1095 = vector.broadcast %30 : vector<1x256xf32> to vector<4x256xf32>
      %1096 = arith.mulf %1094, %1095 : vector<4x256xf32>
      %1097 = vector.extract_strided_slice %1096 {offsets = [0, 0], sizes = [1, 256], strides = [1, 1]} : vector<4x256xf32> to vector<1x256xf32>
      %c6_575 = arith.constant 6 : index
      %c0_576 = arith.constant 0 : index
      %c0_577 = arith.constant 0 : index
      %c0_578 = arith.constant 0 : index
      %1098 = vector.load %arg5[%c6_575, %c0_576, %c0_577, %c0_578] : memref<9x4x4x1xf32, #tpu.memory_space<vmem>>, vector<1x1x4x1xf32>
      %1099 = vector.shape_cast %1098 : vector<1x1x4x1xf32> to vector<4x1xf32>
      %1100 = vector.broadcast %1097 : vector<1x256xf32> to vector<4x256xf32>
      %1101 = vector.broadcast %1099 : vector<4x1xf32> to vector<4x256xf32>
      %1102 = arith.mulf %1100, %1101 : vector<4x256xf32>
      %1103 = arith.addf %1093, %1102 : vector<4x256xf32>
      %1104 = vector.extract_strided_slice %1096 {offsets = [1, 0], sizes = [1, 256], strides = [1, 1]} : vector<4x256xf32> to vector<1x256xf32>
      %c6_579 = arith.constant 6 : index
      %c1_580 = arith.constant 1 : index
      %c0_581 = arith.constant 0 : index
      %c0_582 = arith.constant 0 : index
      %1105 = vector.load %arg5[%c6_579, %c1_580, %c0_581, %c0_582] : memref<9x4x4x1xf32, #tpu.memory_space<vmem>>, vector<1x1x4x1xf32>
      %1106 = vector.shape_cast %1105 : vector<1x1x4x1xf32> to vector<4x1xf32>
      %1107 = vector.broadcast %1104 : vector<1x256xf32> to vector<4x256xf32>
      %1108 = vector.broadcast %1106 : vector<4x1xf32> to vector<4x256xf32>
      %1109 = arith.mulf %1107, %1108 : vector<4x256xf32>
      %1110 = arith.addf %1103, %1109 : vector<4x256xf32>
      %1111 = vector.extract_strided_slice %1096 {offsets = [2, 0], sizes = [1, 256], strides = [1, 1]} : vector<4x256xf32> to vector<1x256xf32>
      %c6_583 = arith.constant 6 : index
      %c2_584 = arith.constant 2 : index
      %c0_585 = arith.constant 0 : index
      %c0_586 = arith.constant 0 : index
      %1112 = vector.load %arg5[%c6_583, %c2_584, %c0_585, %c0_586] : memref<9x4x4x1xf32, #tpu.memory_space<vmem>>, vector<1x1x4x1xf32>
      %1113 = vector.shape_cast %1112 : vector<1x1x4x1xf32> to vector<4x1xf32>
      %1114 = vector.broadcast %1111 : vector<1x256xf32> to vector<4x256xf32>
      %1115 = vector.broadcast %1113 : vector<4x1xf32> to vector<4x256xf32>
      %1116 = arith.mulf %1114, %1115 : vector<4x256xf32>
      %1117 = arith.addf %1110, %1116 : vector<4x256xf32>
      %1118 = vector.extract_strided_slice %1096 {offsets = [3, 0], sizes = [1, 256], strides = [1, 1]} : vector<4x256xf32> to vector<1x256xf32>
      %c6_587 = arith.constant 6 : index
      %c3_588 = arith.constant 3 : index
      %c0_589 = arith.constant 0 : index
      %c0_590 = arith.constant 0 : index
      %1119 = vector.load %arg5[%c6_587, %c3_588, %c0_589, %c0_590] : memref<9x4x4x1xf32, #tpu.memory_space<vmem>>, vector<1x1x4x1xf32>
      %1120 = vector.shape_cast %1119 : vector<1x1x4x1xf32> to vector<4x1xf32>
      %1121 = vector.broadcast %1118 : vector<1x256xf32> to vector<4x256xf32>
      %1122 = vector.broadcast %1120 : vector<4x1xf32> to vector<4x256xf32>
      %1123 = arith.mulf %1121, %1122 : vector<4x256xf32>
      %1124 = arith.addf %1117, %1123 : vector<4x256xf32>
      %c240_i32_591 = arith.constant 240 : i32
      %1125 = tpu.dynamic_rotate %911 by %c240_i32_591 dim 1 : vector<4x256xf32>, i32 -> vector<4x256xf32>
      %1126 = vector.broadcast %19 : vector<1x256xf32> to vector<4x256xf32>
      %1127 = arith.mulf %1125, %1126 : vector<4x256xf32>
      %1128 = vector.extract_strided_slice %1127 {offsets = [0, 0], sizes = [1, 256], strides = [1, 1]} : vector<4x256xf32> to vector<1x256xf32>
      %c7_592 = arith.constant 7 : index
      %c0_593 = arith.constant 0 : index
      %c0_594 = arith.constant 0 : index
      %c0_595 = arith.constant 0 : index
      %1129 = vector.load %arg5[%c7_592, %c0_593, %c0_594, %c0_595] : memref<9x4x4x1xf32, #tpu.memory_space<vmem>>, vector<1x1x4x1xf32>
      %1130 = vector.shape_cast %1129 : vector<1x1x4x1xf32> to vector<4x1xf32>
      %1131 = vector.broadcast %1128 : vector<1x256xf32> to vector<4x256xf32>
      %1132 = vector.broadcast %1130 : vector<4x1xf32> to vector<4x256xf32>
      %1133 = arith.mulf %1131, %1132 : vector<4x256xf32>
      %1134 = arith.addf %1124, %1133 : vector<4x256xf32>
      %1135 = vector.extract_strided_slice %1127 {offsets = [1, 0], sizes = [1, 256], strides = [1, 1]} : vector<4x256xf32> to vector<1x256xf32>
      %c7_596 = arith.constant 7 : index
      %c1_597 = arith.constant 1 : index
      %c0_598 = arith.constant 0 : index
      %c0_599 = arith.constant 0 : index
      %1136 = vector.load %arg5[%c7_596, %c1_597, %c0_598, %c0_599] : memref<9x4x4x1xf32, #tpu.memory_space<vmem>>, vector<1x1x4x1xf32>
      %1137 = vector.shape_cast %1136 : vector<1x1x4x1xf32> to vector<4x1xf32>
      %1138 = vector.broadcast %1135 : vector<1x256xf32> to vector<4x256xf32>
      %1139 = vector.broadcast %1137 : vector<4x1xf32> to vector<4x256xf32>
      %1140 = arith.mulf %1138, %1139 : vector<4x256xf32>
      %1141 = arith.addf %1134, %1140 : vector<4x256xf32>
      %1142 = vector.extract_strided_slice %1127 {offsets = [2, 0], sizes = [1, 256], strides = [1, 1]} : vector<4x256xf32> to vector<1x256xf32>
      %c7_600 = arith.constant 7 : index
      %c2_601 = arith.constant 2 : index
      %c0_602 = arith.constant 0 : index
      %c0_603 = arith.constant 0 : index
      %1143 = vector.load %arg5[%c7_600, %c2_601, %c0_602, %c0_603] : memref<9x4x4x1xf32, #tpu.memory_space<vmem>>, vector<1x1x4x1xf32>
      %1144 = vector.shape_cast %1143 : vector<1x1x4x1xf32> to vector<4x1xf32>
      %1145 = vector.broadcast %1142 : vector<1x256xf32> to vector<4x256xf32>
      %1146 = vector.broadcast %1144 : vector<4x1xf32> to vector<4x256xf32>
      %1147 = arith.mulf %1145, %1146 : vector<4x256xf32>
      %1148 = arith.addf %1141, %1147 : vector<4x256xf32>
      %1149 = vector.extract_strided_slice %1127 {offsets = [3, 0], sizes = [1, 256], strides = [1, 1]} : vector<4x256xf32> to vector<1x256xf32>
      %c7_604 = arith.constant 7 : index
      %c3_605 = arith.constant 3 : index
      %c0_606 = arith.constant 0 : index
      %c0_607 = arith.constant 0 : index
      %1150 = vector.load %arg5[%c7_604, %c3_605, %c0_606, %c0_607] : memref<9x4x4x1xf32, #tpu.memory_space<vmem>>, vector<1x1x4x1xf32>
      %1151 = vector.shape_cast %1150 : vector<1x1x4x1xf32> to vector<4x1xf32>
      %1152 = vector.broadcast %1149 : vector<1x256xf32> to vector<4x256xf32>
      %1153 = vector.broadcast %1151 : vector<4x1xf32> to vector<4x256xf32>
      %1154 = arith.mulf %1152, %1153 : vector<4x256xf32>
      %1155 = arith.addf %1148, %1154 : vector<4x256xf32>
      %c239_i32_608 = arith.constant 239 : i32
      %1156 = tpu.dynamic_rotate %911 by %c239_i32_608 dim 1 : vector<4x256xf32>, i32 -> vector<4x256xf32>
      %1157 = vector.broadcast %31 : vector<1x256xf32> to vector<4x256xf32>
      %1158 = arith.mulf %1156, %1157 : vector<4x256xf32>
      %1159 = vector.extract_strided_slice %1158 {offsets = [0, 0], sizes = [1, 256], strides = [1, 1]} : vector<4x256xf32> to vector<1x256xf32>
      %c8_609 = arith.constant 8 : index
      %c0_610 = arith.constant 0 : index
      %c0_611 = arith.constant 0 : index
      %c0_612 = arith.constant 0 : index
      %1160 = vector.load %arg5[%c8_609, %c0_610, %c0_611, %c0_612] : memref<9x4x4x1xf32, #tpu.memory_space<vmem>>, vector<1x1x4x1xf32>
      %1161 = vector.shape_cast %1160 : vector<1x1x4x1xf32> to vector<4x1xf32>
      %1162 = vector.broadcast %1159 : vector<1x256xf32> to vector<4x256xf32>
      %1163 = vector.broadcast %1161 : vector<4x1xf32> to vector<4x256xf32>
      %1164 = arith.mulf %1162, %1163 : vector<4x256xf32>
      %1165 = arith.addf %1155, %1164 : vector<4x256xf32>
      %1166 = vector.extract_strided_slice %1158 {offsets = [1, 0], sizes = [1, 256], strides = [1, 1]} : vector<4x256xf32> to vector<1x256xf32>
      %c8_613 = arith.constant 8 : index
      %c1_614 = arith.constant 1 : index
      %c0_615 = arith.constant 0 : index
      %c0_616 = arith.constant 0 : index
      %1167 = vector.load %arg5[%c8_613, %c1_614, %c0_615, %c0_616] : memref<9x4x4x1xf32, #tpu.memory_space<vmem>>, vector<1x1x4x1xf32>
      %1168 = vector.shape_cast %1167 : vector<1x1x4x1xf32> to vector<4x1xf32>
      %1169 = vector.broadcast %1166 : vector<1x256xf32> to vector<4x256xf32>
      %1170 = vector.broadcast %1168 : vector<4x1xf32> to vector<4x256xf32>
      %1171 = arith.mulf %1169, %1170 : vector<4x256xf32>
      %1172 = arith.addf %1165, %1171 : vector<4x256xf32>
      %1173 = vector.extract_strided_slice %1158 {offsets = [2, 0], sizes = [1, 256], strides = [1, 1]} : vector<4x256xf32> to vector<1x256xf32>
      %c8_617 = arith.constant 8 : index
      %c2_618 = arith.constant 2 : index
      %c0_619 = arith.constant 0 : index
      %c0_620 = arith.constant 0 : index
      %1174 = vector.load %arg5[%c8_617, %c2_618, %c0_619, %c0_620] : memref<9x4x4x1xf32, #tpu.memory_space<vmem>>, vector<1x1x4x1xf32>
      %1175 = vector.shape_cast %1174 : vector<1x1x4x1xf32> to vector<4x1xf32>
      %1176 = vector.broadcast %1173 : vector<1x256xf32> to vector<4x256xf32>
      %1177 = vector.broadcast %1175 : vector<4x1xf32> to vector<4x256xf32>
      %1178 = arith.mulf %1176, %1177 : vector<4x256xf32>
      %1179 = arith.addf %1172, %1178 : vector<4x256xf32>
      %1180 = vector.extract_strided_slice %1158 {offsets = [3, 0], sizes = [1, 256], strides = [1, 1]} : vector<4x256xf32> to vector<1x256xf32>
      %c8_621 = arith.constant 8 : index
      %c3_622 = arith.constant 3 : index
      %c0_623 = arith.constant 0 : index
      %c0_624 = arith.constant 0 : index
      %1181 = vector.load %arg5[%c8_621, %c3_622, %c0_623, %c0_624] : memref<9x4x4x1xf32, #tpu.memory_space<vmem>>, vector<1x1x4x1xf32>
      %1182 = vector.shape_cast %1181 : vector<1x1x4x1xf32> to vector<4x1xf32>
      %1183 = vector.broadcast %1180 : vector<1x256xf32> to vector<4x256xf32>
      %1184 = vector.broadcast %1182 : vector<4x1xf32> to vector<4x256xf32>
      %1185 = arith.mulf %1183, %1184 : vector<4x256xf32>
      %1186 = arith.addf %1179, %1185 : vector<4x256xf32>
      %1187 = vector.broadcast %33 : vector<4x1xf32> to vector<4x256xf32>
      %1188 = arith.addf %1186, %1187 : vector<4x256xf32>
      %cst_625 = arith.constant dense<0.000000e+00> : vector<4xf32>
      %1189 = vector.multi_reduction <add>, %1188, %cst_625 [1] : vector<4x256xf32> to vector<4xf32>
      %1190 = vector.shape_cast %1189 : vector<4xf32> to vector<4x1xf32>
      %1191 = arith.mulf %1188, %1188 : vector<4x256xf32>
      %cst_626 = arith.constant dense<0.000000e+00> : vector<4xf32>
      %1192 = vector.multi_reduction <add>, %1191, %cst_626 [1] : vector<4x256xf32> to vector<4xf32>
      %1193 = vector.shape_cast %1192 : vector<4xf32> to vector<4x1xf32>
      %c2_i32_627 = arith.constant 2 : i32
      %1194 = arith.muli %arg1, %c2_i32_627 : i32
      %c1_i32_628 = arith.constant 1 : i32
      %1195 = arith.addi %1194, %c1_i32_628 : i32
      %1196 = arith.index_cast %1195 : i32 to index
      %c0_629 = arith.constant 0 : index
      %c0_630 = arith.constant 0 : index
      %1197 = vector.load %arg10[%1196, %c0_629, %c0_630] : memref<2x4x256xf32, #tpu.memory_space<vmem>>, vector<1x4x256xf32>
      %1198 = vector.shape_cast %1197 : vector<1x4x256xf32> to vector<4x256xf32>
      %1199 = vector.shape_cast %1188 : vector<4x256xf32> to vector<1x4x256xf32>
      tpu.vector_store %arg10[%1196, %c0_629, %c0_630], %1199 {strides = array<i32>} : memref<2x4x256xf32, #tpu.memory_space<vmem>>, vector<1x4x256xf32>,
      %1200 = arith.addf %607, %1190 : vector<4x1xf32>
      %1201 = arith.addf %610, %1193 : vector<4x1xf32>
      %c0_631 = arith.constant 0 : index
      %c0_632 = arith.constant 0 : index
      %c0_633 = arith.constant 0 : index
      %1202 = vector.load %arg11[%c0_631, %c0_632, %c0_633] : memref<2x4x1xf32, #tpu.memory_space<vmem>>, vector<1x4x1xf32>
      %1203 = vector.shape_cast %1202 : vector<1x4x1xf32> to vector<4x1xf32>
      %1204 = arith.addf %1203, %1200 : vector<4x1xf32>
      %c0_634 = arith.constant 0 : index
      %c0_635 = arith.constant 0 : index
      %c0_636 = arith.constant 0 : index
      %1205 = vector.load %arg11[%c0_634, %c0_635, %c0_636] : memref<2x4x1xf32, #tpu.memory_space<vmem>>, vector<1x4x1xf32>
      %1206 = vector.shape_cast %1205 : vector<1x4x1xf32> to vector<4x1xf32>
      %1207 = vector.shape_cast %1204 : vector<4x1xf32> to vector<1x4x1xf32>
      tpu.vector_store %arg11[%c0_634, %c0_635, %c0_636], %1207 {strides = array<i32>} : memref<2x4x1xf32, #tpu.memory_space<vmem>>, vector<1x4x1xf32>,
      %c1_637 = arith.constant 1 : index
      %c0_638 = arith.constant 0 : index
      %c0_639 = arith.constant 0 : index
      %1208 = vector.load %arg11[%c1_637, %c0_638, %c0_639] : memref<2x4x1xf32, #tpu.memory_space<vmem>>, vector<1x4x1xf32>
      %1209 = vector.shape_cast %1208 : vector<1x4x1xf32> to vector<4x1xf32>
      %1210 = arith.addf %1209, %1201 : vector<4x1xf32>
      %c1_640 = arith.constant 1 : index
      %c0_641 = arith.constant 0 : index
      %c0_642 = arith.constant 0 : index
      %1211 = vector.load %arg11[%c1_640, %c0_641, %c0_642] : memref<2x4x1xf32, #tpu.memory_space<vmem>>, vector<1x4x1xf32>
      %1212 = vector.shape_cast %1211 : vector<1x4x1xf32> to vector<4x1xf32>
      %1213 = vector.shape_cast %1210 : vector<4x1xf32> to vector<1x4x1xf32>
      tpu.vector_store %arg11[%c1_640, %c0_641, %c0_642], %1213 {strides = array<i32>} : memref<2x4x1xf32, #tpu.memory_space<vmem>>, vector<1x4x1xf32>,
    } else {
    }
    %c1_i32 = arith.constant 1 : i32
    %3 = arith.cmpi eq, %arg0, %c1_i32 : i32
    %4 = arith.extui %3 : i1 to i32
    %c0_i32_1 = arith.constant 0 : i32
    %5 = arith.cmpi ne, %4, %c0_i32_1 : i32
    scf.if %5 {
      %c0_i32_2 = arith.constant 0 : i32
      %6 = arith.cmpi eq, %arg1, %c0_i32_2 : i32
      %7 = arith.extui %6 : i1 to i32
      %c0_i32_3 = arith.constant 0 : i32
      %8 = arith.cmpi ne, %7, %c0_i32_3 : i32
      scf.if %8 {
        %c0_27 = arith.constant 0 : index
        %c0_28 = arith.constant 0 : index
        %c0_29 = arith.constant 0 : index
        %43 = vector.load %arg11[%c0_27, %c0_28, %c0_29] : memref<2x4x1xf32, #tpu.memory_space<vmem>>, vector<1x4x1xf32>
        %44 = vector.shape_cast %43 : vector<1x4x1xf32> to vector<4x1xf32>
        %cst = arith.constant 0.001953125 : f32
        %45 = vector.broadcast %cst : f32 to vector<4x1xf32>
        %46 = arith.mulf %44, %45 : vector<4x1xf32>
        %c1_30 = arith.constant 1 : index
        %c0_31 = arith.constant 0 : index
        %c0_32 = arith.constant 0 : index
        %47 = vector.load %arg11[%c1_30, %c0_31, %c0_32] : memref<2x4x1xf32, #tpu.memory_space<vmem>>, vector<1x4x1xf32>
        %48 = vector.shape_cast %47 : vector<1x4x1xf32> to vector<4x1xf32>
        %cst_33 = arith.constant 0.001953125 : f32
        %49 = vector.broadcast %cst_33 : f32 to vector<4x1xf32>
        %50 = arith.mulf %48, %49 : vector<4x1xf32>
        %51 = arith.mulf %46, %46 : vector<4x1xf32>
        %52 = arith.subf %50, %51 : vector<4x1xf32>
        %c0_34 = arith.constant 0 : index
        %c0_35 = arith.constant 0 : index
        %53 = vector.load %arg7[%c0_34, %c0_35] : memref<4x1xf32, #tpu.memory_space<vmem>>, vector<4x1xf32>
        %cst_36 = arith.constant 9.99999974E-6 : f32
        %54 = vector.broadcast %cst_36 : f32 to vector<4x1xf32>
        %55 = arith.addf %52, %54 : vector<4x1xf32>
        %56 = math.rsqrt %55 : vector<4x1xf32>
        %57 = arith.mulf %53, %56 : vector<4x1xf32>
        %c0_37 = arith.constant 0 : index
        %c0_38 = arith.constant 0 : index
        %c0_39 = arith.constant 0 : index
        %58 = vector.load %arg12[%c0_37, %c0_38, %c0_39] : memref<2x4x1xf32, #tpu.memory_space<vmem>>, vector<1x4x1xf32>
        %59 = vector.shape_cast %58 : vector<1x4x1xf32> to vector<4x1xf32>
        %60 = vector.shape_cast %57 : vector<4x1xf32> to vector<1x4x1xf32>
        tpu.vector_store %arg12[%c0_37, %c0_38, %c0_39], %60 {strides = array<i32>} : memref<2x4x1xf32, #tpu.memory_space<vmem>>, vector<1x4x1xf32>,
        %c0_40 = arith.constant 0 : index
        %c0_41 = arith.constant 0 : index
        %61 = vector.load %arg8[%c0_40, %c0_41] : memref<4x1xf32, #tpu.memory_space<vmem>>, vector<4x1xf32>
        %62 = arith.mulf %46, %57 : vector<4x1xf32>
        %63 = arith.subf %61, %62 : vector<4x1xf32>
        %c1_42 = arith.constant 1 : index
        %c0_43 = arith.constant 0 : index
        %c0_44 = arith.constant 0 : index
        %64 = vector.load %arg12[%c1_42, %c0_43, %c0_44] : memref<2x4x1xf32, #tpu.memory_space<vmem>>, vector<1x4x1xf32>
        %65 = vector.shape_cast %64 : vector<1x4x1xf32> to vector<4x1xf32>
        %66 = vector.shape_cast %63 : vector<4x1xf32> to vector<1x4x1xf32>
        tpu.vector_store %arg12[%c1_42, %c0_43, %c0_44], %66 {strides = array<i32>} : memref<2x4x1xf32, #tpu.memory_space<vmem>>, vector<1x4x1xf32>,
      } else {
      }
      %c0 = arith.constant 0 : index
      %c0_4 = arith.constant 0 : index
      %c0_5 = arith.constant 0 : index
      %9 = vector.load %arg12[%c0, %c0_4, %c0_5] : memref<2x4x1xf32, #tpu.memory_space<vmem>>, vector<1x4x1xf32>
      %10 = vector.shape_cast %9 : vector<1x4x1xf32> to vector<4x1xf32>
      %c1 = arith.constant 1 : index
      %c0_6 = arith.constant 0 : index
      %c0_7 = arith.constant 0 : index
      %11 = vector.load %arg12[%c1, %c0_6, %c0_7] : memref<2x4x1xf32, #tpu.memory_space<vmem>>, vector<1x4x1xf32>
      %12 = vector.shape_cast %11 : vector<1x4x1xf32> to vector<4x1xf32>
      %c0_8 = arith.constant 0 : index
      %c0_9 = arith.constant 0 : index
      %c0_10 = arith.constant 0 : index
      %13 = vector.load %arg2[%c0_8, %c0_9, %c0_10] : memref<2x4x256xf32, #tpu.memory_space<vmem>>, vector<1x4x256xf32>
      %14 = vector.shape_cast %13 : vector<1x4x256xf32> to vector<4x256xf32>
      %c2_i32 = arith.constant 2 : i32
      %15 = arith.muli %arg1, %c2_i32 : i32
      %c0_i32_11 = arith.constant 0 : i32
      %16 = arith.addi %15, %c0_i32_11 : i32
      %17 = arith.index_cast %16 : i32 to index
      %c0_12 = arith.constant 0 : index
      %c0_13 = arith.constant 0 : index
      %18 = vector.load %arg10[%17, %c0_12, %c0_13] : memref<2x4x256xf32, #tpu.memory_space<vmem>>, vector<1x4x256xf32>
      %19 = vector.shape_cast %18 : vector<1x4x256xf32> to vector<4x256xf32>
      %20 = vector.broadcast %10 : vector<4x1xf32> to vector<4x256xf32>
      %21 = arith.mulf %19, %20 : vector<4x256xf32>
      %22 = vector.broadcast %12 : vector<4x1xf32> to vector<4x256xf32>
      %23 = arith.addf %21, %22 : vector<4x256xf32>
      %24 = arith.addf %23, %14 : vector<4x256xf32>
      %c0_14 = arith.constant 0 : index
      %c0_15 = arith.constant 0 : index
      %c0_16 = arith.constant 0 : index
      %25 = vector.load %arg9[%c0_14, %c0_15, %c0_16] : memref<2x4x256xf32, #tpu.memory_space<vmem>>, vector<1x4x256xf32>
      %26 = vector.shape_cast %25 : vector<1x4x256xf32> to vector<4x256xf32>
      %27 = vector.shape_cast %24 : vector<4x256xf32> to vector<1x4x256xf32>
      tpu.vector_store %arg9[%c0_14, %c0_15, %c0_16], %27 {strides = array<i32>} : memref<2x4x256xf32, #tpu.memory_space<vmem>>, vector<1x4x256xf32>,
      %c1_17 = arith.constant 1 : index
      %c0_18 = arith.constant 0 : index
      %c0_19 = arith.constant 0 : index
      %28 = vector.load %arg2[%c1_17, %c0_18, %c0_19] : memref<2x4x256xf32, #tpu.memory_space<vmem>>, vector<1x4x256xf32>
      %29 = vector.shape_cast %28 : vector<1x4x256xf32> to vector<4x256xf32>
      %c2_i32_20 = arith.constant 2 : i32
      %30 = arith.muli %arg1, %c2_i32_20 : i32
      %c1_i32_21 = arith.constant 1 : i32
      %31 = arith.addi %30, %c1_i32_21 : i32
      %32 = arith.index_cast %31 : i32 to index
      %c0_22 = arith.constant 0 : index
      %c0_23 = arith.constant 0 : index
      %33 = vector.load %arg10[%32, %c0_22, %c0_23] : memref<2x4x256xf32, #tpu.memory_space<vmem>>, vector<1x4x256xf32>
      %34 = vector.shape_cast %33 : vector<1x4x256xf32> to vector<4x256xf32>
      %35 = vector.broadcast %10 : vector<4x1xf32> to vector<4x256xf32>
      %36 = arith.mulf %34, %35 : vector<4x256xf32>
      %37 = vector.broadcast %12 : vector<4x1xf32> to vector<4x256xf32>
      %38 = arith.addf %36, %37 : vector<4x256xf32>
      %39 = arith.addf %38, %29 : vector<4x256xf32>
      %c1_24 = arith.constant 1 : index
      %c0_25 = arith.constant 0 : index
      %c0_26 = arith.constant 0 : index
      %40 = vector.load %arg9[%c1_24, %c0_25, %c0_26] : memref<2x4x256xf32, #tpu.memory_space<vmem>>, vector<1x4x256xf32>
      %41 = vector.shape_cast %40 : vector<1x4x256xf32> to vector<4x256xf32>
      %42 = vector.shape_cast %39 : vector<4x256xf32> to vector<1x4x256xf32>
      tpu.vector_store %arg9[%c1_24, %c0_25, %c0_26], %42 {strides = array<i32>} : memref<2x4x256xf32, #tpu.memory_space<vmem>>, vector<1x4x256xf32>,
    } else {
    }
    return
  }
  func.func @transform_0(%arg0: i32, %arg1: i32) -> (i32, i32, i32) {
    %c0_i32 = arith.constant 0 : i32
    %c0_i32_0 = arith.constant 0 : i32
    %c0_i32_1 = arith.constant 0 : i32
    return %arg1, %c0_i32, %c0_i32_0 : i32, i32, i32
  }
  func.func @transform_1(%arg0: i32, %arg1: i32) -> (i32, i32, i32, i32) {
    %c0_i32 = arith.constant 0 : i32
    %c0_i32_0 = arith.constant 0 : i32
    %c0_i32_1 = arith.constant 0 : i32
    %c0_i32_2 = arith.constant 0 : i32
    %c0_i32_3 = arith.constant 0 : i32
    return %c0_i32, %c0_i32_0, %c0_i32_1, %c0_i32_2 : i32, i32, i32, i32
  }
  func.func @transform_2(%arg0: i32, %arg1: i32) -> (i32, i32) {
    %c0_i32 = arith.constant 0 : i32
    %c0_i32_0 = arith.constant 0 : i32
    %c0_i32_1 = arith.constant 0 : i32
    return %c0_i32, %c0_i32_0 : i32, i32
  }
  func.func @transform_3(%arg0: i32, %arg1: i32) -> (i32, i32, i32, i32) {
    %c0_i32 = arith.constant 0 : i32
    %c0_i32_0 = arith.constant 0 : i32
    %c0_i32_1 = arith.constant 0 : i32
    %c0_i32_2 = arith.constant 0 : i32
    %c0_i32_3 = arith.constant 0 : i32
    return %c0_i32, %c0_i32_0, %c0_i32_1, %c0_i32_2 : i32, i32, i32, i32
  }
  func.func @transform_4(%arg0: i32, %arg1: i32) -> (i32, i32) {
    %c0_i32 = arith.constant 0 : i32
    %c0_i32_0 = arith.constant 0 : i32
    %c0_i32_1 = arith.constant 0 : i32
    return %c0_i32, %c0_i32_0 : i32, i32
  }
  func.func @transform_5(%arg0: i32, %arg1: i32) -> (i32, i32) {
    %c0_i32 = arith.constant 0 : i32
    %c0_i32_0 = arith.constant 0 : i32
    %c0_i32_1 = arith.constant 0 : i32
    return %c0_i32, %c0_i32_0 : i32, i32
  }
  func.func @transform_6(%arg0: i32, %arg1: i32) -> (i32, i32) {
    %c0_i32 = arith.constant 0 : i32
    %c0_i32_0 = arith.constant 0 : i32
    %c0_i32_1 = arith.constant 0 : i32
    return %c0_i32, %c0_i32_0 : i32, i32
  }
  func.func @transform_7(%arg0: i32, %arg1: i32) -> (i32, i32, i32) {
    %0 = arith.muli %arg1, %arg0 : i32
    %c0_i32 = arith.constant 0 : i32
    %c0_i32_0 = arith.constant 0 : i32
    %c0_i32_1 = arith.constant 0 : i32
    return %0, %c0_i32, %c0_i32_0 : i32, i32, i32
  }
}

</mosaic_0001>

<llo_original>
// kernel: _forward_fused.1
$region0: #{_forward_fused.1}
  #allocation0 [shape = 'u32[]', space=smem, size = 0x4, offset = 0x4, fixed_abs, tag = 'smem constant byte address 0x4 - core index']
  #allocation1 [shape = 'u32[144,128]{1,0:T(1,128)}', space=vmem, size = 0x12000, scoped, tag = 'internal scratch']
  #allocation2 [shape = 'f32[2,4,256]{2,1,0:T(4,128)}', space=vmem, size = 0x2000, scoped, tag = 'scratch operand']
  #allocation3 [shape = 'f32[2,4,1]{2,1,0:T(4,128)}', space=vmem, size = 0x1000, scoped, tag = 'scratch operand']
  #allocation4 [shape = 'f32[2,4,1]{2,1,0:T(4,128)}', space=vmem, size = 0x1000, scoped, tag = 'scratch operand']
  %s0 = inlined_call_operand.vmem [shape: f32[2,4,256], index: 0, kind: input, shape index: {}]
  %s1 = inlined_call_operand.vmem [shape: f32[9,4,4,1], index: 1, kind: input, shape index: {}]
  %s2 = inlined_call_operand.vmem [shape: f32[4,1], index: 2, kind: input, shape index: {}]
  %s3 = inlined_call_operand.vmem [shape: f32[9,4,4,1], index: 3, kind: input, shape index: {}]
  %s4 = inlined_call_operand.vmem [shape: f32[4,1], index: 4, kind: input, shape index: {}]
  %s5 = inlined_call_operand.vmem [shape: f32[4,1], index: 5, kind: input, shape index: {}]
  %s6 = inlined_call_operand.vmem [shape: f32[4,1], index: 6, kind: input, shape index: {}]
  %s7 = inlined_call_operand.vmem [shape: f32[2,4,256], index: 7, kind: output, shape index: {}]
  %s8 = sld [smem:[#allocation0]]
  $region77: #{_forward_fused.1} parent=0
    _
  %s10 = ssub.s32 1, %s8
  %s11 = scalar_select 0, %s10, %s8
  loop: start=0, step=1, limit=4
  $region2: #{_forward_fused.1} parent=0 // loop_pre_header
    _
  $region3: #{_forward_fused.1} parent=0 // loop_header
    %s13 = sphi 0, %s17
    %p14 = scmp.ge.s32.totalorder %s13, 4
    %s20 = sphi 0, %s32
    %s21 = sphi 0, %s28
    %s22 = sphi 0, %s20
    %s23 = sphi 0, %s21
    %s24 = sphi 0, %s22
    %s25 = sphi 0, %s23
    %s35 = sphi 0, %s37
    %s38 = sphi 0, %s35
    %s39 = sphi 0, %s38
    %s55 = sphi 0, %s39
    %s59 = sphi 0, %s59
    %s61 = sphi 0, %s59
    %s62 = sphi 0, %s61
    %s76 = sphi 0, %s62
    %s80 = sphi 0, %s80
    %s82 = sphi 0, %s80
    %s83 = sphi 0, %s82
    %s97 = sphi 0, %s83
    %s101 = sphi 0, %s101
    %s103 = sphi 0, %s101
    %s104 = sphi 0, %s103
    %s118 = sphi 0, %s104
    %s122 = sphi 0, %s122
    %s124 = sphi 0, %s122
    %s125 = sphi 0, %s124
    %s139 = sphi 0, %s125
    %s143 = sphi 0, %s143
    %s145 = sphi 0, %s143
    %s146 = sphi 0, %s145
    %s160 = sphi 0, %s146
    %s164 = sphi 0, %s164
    %s166 = sphi 0, %s164
    %s167 = sphi 0, %s166
    %s181 = sphi 0, %s167
    %s189 = sphi 0, %s191
    %s192 = sphi 0, %s189
    %s193 = sphi 0, %s192
    %s209 = sphi 0, %s193
  $region4: #{_forward_fused.1} parent=0 // loop_header_branch
    %16 = sbr.rel (%p14) target = $region8
  $region5: #{_forward_fused.1} parent=0 // loop_body
    %s18 = ssub.s32 %s13, 1
    %s19 = ssub.s32 %s13, 2
    %s26 = sadd.s32 1, %s21
    %p27 = scmp.ge.s32.totalorder %s26, 1
    %s28 = scalar_select %p27, 0, %s26
    %s29 = sadd.s32 1, %s20
    %s30 = scalar_select %p27, %s29, %s20
    %p31 = scmp.ge.s32.totalorder %s30, 2
    %s32 = scalar_select %p31, 0, %s30
    %s33 = ssub.s32 %s21, %s28
    %p34 = scmp.eq.s32.totalorder %s33, 0
    %s36 = sadd.s32 %s35, 1
    %s37 = scalar_select %p34, %s35, %s36
    %p40 = pneg %p34
    %p41 = scmp.eq.s32.totalorder %s13, 1
    %p42 = por %p40, %p41
    %p43 = scmp.ne.s32.totalorder %s35, %s38
    %p44 = scmp.eq.s32.totalorder %s13, 0
    %p45 = por %p43, %p44
    %p46 = scmp.ne.s32.totalorder %s35, %s38
    %p47 = scmp.eq.s32.totalorder %s18, 1
    %p48 = por %p46, %p47
    %p49 = scmp.ne.s32.totalorder %s38, %s39
    %p50 = scmp.eq.s32.totalorder %s18, 0
    %p51 = por %p49, %p50
    %p52 = scmp.ne.s32.totalorder %s38, %s39
    %p53 = scmp.eq.s32.totalorder %s19, 1
    %p54 = por %p52, %p53
    %p56 = scmp.ne.s32.totalorder %s39, %s55
    %p57 = scmp.eq.s32.totalorder %s19, 0
    %p58 = por %p56, %p57
    %s60 = sadd.s32 %s59, 1
    %p63 = scmp.eq.s32.totalorder %s13, 1
    %p64 = scmp.ne.s32.totalorder %s59, %s61
    %p65 = scmp.eq.s32.totalorder %s13, 0
    %p66 = por %p64, %p65
    %p67 = scmp.ne.s32.totalorder %s59, %s61
    %p68 = scmp.eq.s32.totalorder %s18, 1
    %p69 = por %p67, %p68
    %p70 = scmp.ne.s32.totalorder %s61, %s62
    %p71 = scmp.eq.s32.totalorder %s18, 0
    %p72 = por %p70, %p71
    %p73 = scmp.ne.s32.totalorder %s61, %s62
    %p74 = scmp.eq.s32.totalorder %s19, 1
    %p75 = por %p73, %p74
    %p77 = scmp.ne.s32.totalorder %s62, %s76
    %p78 = scmp.eq.s32.totalorder %s19, 0
    %p79 = por %p77, %p78
    %s81 = sadd.s32 %s80, 1
    %p84 = scmp.eq.s32.totalorder %s13, 1
    %p85 = scmp.ne.s32.totalorder %s80, %s82
    %p86 = scmp.eq.s32.totalorder %s13, 0
    %p87 = por %p85, %p86
    %p88 = scmp.ne.s32.totalorder %s80, %s82
    %p89 = scmp.eq.s32.totalorder %s18, 1
    %p90 = por %p88, %p89
    %p91 = scmp.ne.s32.totalorder %s82, %s83
    %p92 = scmp.eq.s32.totalorder %s18, 0
    %p93 = por %p91, %p92
    %p94 = scmp.ne.s32.totalorder %s82, %s83
    %p95 = scmp.eq.s32.totalorder %s19, 1
    %p96 = por %p94, %p95
    %p98 = scmp.ne.s32.totalorder %s83, %s97
    %p99 = scmp.eq.s32.totalorder %s19, 0
    %p100 = por %p98, %p99
    %s102 = sadd.s32 %s101, 1
    %p105 = scmp.eq.s32.totalorder %s13, 1
    %p106 = scmp.ne.s32.totalorder %s101, %s103
    %p107 = scmp.eq.s32.totalorder %s13, 0
    %p108 = por %p106, %p107
    %p109 = scmp.ne.s32.totalorder %s101, %s103
    %p110 = scmp.eq.s32.totalorder %s18, 1
    %p111 = por %p109, %p110
    %p112 = scmp.ne.s32.totalorder %s103, %s104
    %p113 = scmp.eq.s32.totalorder %s18, 0
    %p114 = por %p112, %p113
    %p115 = scmp.ne.s32.totalorder %s103, %s104
    %p116 = scmp.eq.s32.totalorder %s19, 1
    %p117 = por %p115, %p116
    %p119 = scmp.ne.s32.totalorder %s104, %s118
    %p120 = scmp.eq.s32.totalorder %s19, 0
    %p121 = por %p119, %p120
    %s123 = sadd.s32 %s122, 1
    %p126 = scmp.eq.s32.totalorder %s13, 1
    %p127 = scmp.ne.s32.totalorder %s122, %s124
    %p128 = scmp.eq.s32.totalorder %s13, 0
    %p129 = por %p127, %p128
    %p130 = scmp.ne.s32.totalorder %s122, %s124
    %p131 = scmp.eq.s32.totalorder %s18, 1
    %p132 = por %p130, %p131
    %p133 = scmp.ne.s32.totalorder %s124, %s125
    %p134 = scmp.eq.s32.totalorder %s18, 0
    %p135 = por %p133, %p134
    %p136 = scmp.ne.s32.totalorder %s124, %s125
    %p137 = scmp.eq.s32.totalorder %s19, 1
    %p138 = por %p136, %p137
    %p140 = scmp.ne.s32.totalorder %s125, %s139
    %p141 = scmp.eq.s32.totalorder %s19, 0
    %p142 = por %p140, %p141
    %s144 = sadd.s32 %s143, 1
    %p147 = scmp.eq.s32.totalorder %s13, 1
    %p148 = scmp.ne.s32.totalorder %s143, %s145
    %p149 = scmp.eq.s32.totalorder %s13, 0
    %p150 = por %p148, %p149
    %p151 = scmp.ne.s32.totalorder %s143, %s145
    %p152 = scmp.eq.s32.totalorder %s18, 1
    %p153 = por %p151, %p152
    %p154 = scmp.ne.s32.totalorder %s145, %s146
    %p155 = scmp.eq.s32.totalorder %s18, 0
    %p156 = por %p154, %p155
    %p157 = scmp.ne.s32.totalorder %s145, %s146
    %p158 = scmp.eq.s32.totalorder %s19, 1
    %p159 = por %p157, %p158
    %p161 = scmp.ne.s32.totalorder %s146, %s160
    %p162 = scmp.eq.s32.totalorder %s19, 0
    %p163 = por %p161, %p162
    %s165 = sadd.s32 %s164, 1
    %p168 = scmp.eq.s32.totalorder %s13, 1
    %p169 = scmp.ne.s32.totalorder %s164, %s166
    %p170 = scmp.eq.s32.totalorder %s13, 0
    %p171 = por %p169, %p170
    %p172 = scmp.ne.s32.totalorder %s164, %s166
    %p173 = scmp.eq.s32.totalorder %s18, 1
    %p174 = por %p172, %p173
    %p175 = scmp.ne.s32.totalorder %s166, %s167
    %p176 = scmp.eq.s32.totalorder %s18, 0
    %p177 = por %p175, %p176
    %p178 = scmp.ne.s32.totalorder %s166, %s167
    %p179 = scmp.eq.s32.totalorder %s19, 1
    %p180 = por %p178, %p179
    %p182 = scmp.ne.s32.totalorder %s167, %s181
    %p183 = scmp.eq.s32.totalorder %s19, 0
    %p184 = por %p182, %p183
    %s185 = smul.u32 %s21, %s20
    %s186 = smul.u32 %s28, %s32
    %s187 = ssub.s32 %s185, %s186
    %p188 = scmp.eq.s32.totalorder %s187, 0
    %s190 = sadd.s32 %s189, 1
    %s191 = scalar_select %p188, %s189, %s190
    %p194 = pneg %p188
    %p195 = scmp.eq.s32.totalorder %s13, 1
    %p196 = por %p194, %p195
    %p197 = scmp.ne.s32.totalorder %s189, %s192
    %p198 = scmp.eq.s32.totalorder %s13, 0
    %p199 = por %p197, %p198
    %p200 = scmp.ne.s32.totalorder %s189, %s192
    %p201 = scmp.eq.s32.totalorder %s18, 1
    %p202 = por %p200, %p201
    %p203 = scmp.ne.s32.totalorder %s192, %s193
    %p204 = scmp.eq.s32.totalorder %s18, 0
    %p205 = por %p203, %p204
    %p206 = scmp.ne.s32.totalorder %s192, %s193
    %p207 = scmp.eq.s32.totalorder %s19, 1
    %p208 = por %p206, %p207
    %p210 = scmp.ne.s32.totalorder %s193, %s209
    %p211 = scmp.eq.s32.totalorder %s19, 0
    %p212 = por %p210, %p211
    %p213 = scmp.le.s32.totalorder 1, %s13
    %p214 = scmp.lt.s32.totalorder %s13, 3
    %p215 = pnand %p213, %p214
    %p216 = pneg %p215
    // Predicated region
    $region9: #{_forward_fused.1} parent=5 // pred_check
      _
    $region10: #{_forward_fused.1} parent=5 // pred_check_branch
      %218 = sbr.rel (%p215) target = $region12
    $region11: #{_forward_fused.1} parent=5 // pred_region
      %s219 = ssub.s32 %s13, 1
      // Predicated region
      $region13: #{_forward_fused.1} parent=11 // pred_check
        %p220 = pneg %p51
      $region14: #{_forward_fused.1} parent=11 // pred_check_branch
        %222 = sbr.rel (%p220) target = $region16
      $region15: #{_forward_fused.1} parent=11 // pred_region
        %s223 = smul.u32 2, %s23
        %p224 = scmp.lt.s32.totalorder %s223, 1
        %s225 = scalar_select %p224, %s223, 1
        %s226 = smul.addr %s225, 2
        %s227 = smul.addr %s226, 4
        %s228 = scalar_lea.vmem %s0, %s227
        %s229 = smul.u32 2, %s23
      $region16: #{_forward_fused.1} parent=11 // pred_fallthru
        _
      // Predicated region
      $region17: #{_forward_fused.1} parent=11 // pred_check
        %p230 = pneg %p72
      $region18: #{_forward_fused.1} parent=11 // pred_check_branch
        %232 = sbr.rel (%p230) target = $region20
      $region19: #{_forward_fused.1} parent=11 // pred_region
        _
      $region20: #{_forward_fused.1} parent=11 // pred_fallthru
        _
      // Predicated region
      $region21: #{_forward_fused.1} parent=11 // pred_check
        %p233 = pneg %p93
      $region22: #{_forward_fused.1} parent=11 // pred_check_branch
        %235 = sbr.rel (%p233) target = $region24
      $region23: #{_forward_fused.1} parent=11 // pred_region
        _
      $region24: #{_forward_fused.1} parent=11 // pred_fallthru
        _
      // Predicated region
      $region25: #{_forward_fused.1} parent=11 // pred_check
        %p236 = pneg %p114
      $region26: #{_forward_fused.1} parent=11 // pred_check_branch
        %238 = sbr.rel (%p236) target = $region28
      $region27: #{_forward_fused.1} parent=11 // pred_region
        _
      $region28: #{_forward_fused.1} parent=11 // pred_fallthru
        _
      // Predicated region
      $region29: #{_forward_fused.1} parent=11 // pred_check
        %p239 = pneg %p135
      $region30: #{_forward_fused.1} parent=11 // pred_check_branch
        %241 = sbr.rel (%p239) target = $region32
      $region31: #{_forward_fused.1} parent=11 // pred_region
        _
      $region32: #{_forward_fused.1} parent=11 // pred_fallthru
        _
      // Predicated region
      $region33: #{_forward_fused.1} parent=11 // pred_check
        %p242 = pneg %p156
      $region34: #{_forward_fused.1} parent=11 // pred_check_branch
        %244 = sbr.rel (%p242) target = $region36
      $region35: #{_forward_fused.1} parent=11 // pred_region
        _
      $region36: #{_forward_fused.1} parent=11 // pred_fallthru
        _
      // Predicated region
      $region37: #{_forward_fused.1} parent=11 // pred_check
        %p245 = pneg %p177
      $region38: #{_forward_fused.1} parent=11 // pred_check_branch
        %247 = sbr.rel (%p245) target = $region40
      $region39: #{_forward_fused.1} parent=11 // pred_region
        _
      $region40: #{_forward_fused.1} parent=11 // pred_fallthru
        _
    $region12: #{_forward_fused.1} parent=5 // pred_fallthru
      _
    %p248 = scmp.lt.s32.totalorder %s13, 2
    // Predicated region
    $region41: #{_forward_fused.1} parent=5 // pred_check
      %p249 = pneg %p248
    $region42: #{_forward_fused.1} parent=5 // pred_check_branch
      %251 = sbr.rel (%p249) target = $region44
    $region43: #{_forward_fused.1} parent=5 // pred_region
      _
    $region44: #{_forward_fused.1} parent=5 // pred_fallthru
      _
    %p252 = scmp.le.s32.totalorder 1, %s13
    %p253 = scmp.lt.s32.totalorder %s13, 3
    %p254 = pnand %p252, %p253
    %p255 = pneg %p254
    // Predicated region
    $region45: #{_forward_fused.1} parent=5 // pred_check
      _
    $region46: #{_forward_fused.1} parent=5 // pred_check_branch
      %257 = sbr.rel (%p254) target = $region48
    $region47: #{_forward_fused.1} parent=5 // pred_region
      %s258 = ssub.s32 %s13, 1
      %s259 = smul.u32 2, %s23
      %p260 = scmp.lt.s32.totalorder %s259, 1
      %s261 = scalar_select %p260, %s259, 1
      %s262 = smul.addr %s261, 2
      %s263 = smul.addr %s262, 4
      %s264 = scalar_lea.vmem %s0, %s263
      %p265 = pneg %p51
      %p266 = pneg %p48
      %p267 = pneg %p72
      %p268 = pneg %p69
      %p269 = pneg %p93
      %p270 = pneg %p90
      %p271 = pneg %p114
      %p272 = pneg %p111
      %p273 = pneg %p135
      %p274 = pneg %p132
      %p275 = pneg %p156
      %p276 = pneg %p153
      %p277 = pneg %p177
      %p278 = pneg %p174
      %p279 = pneg %p205
      %p280 = pneg %p202
      %s281 = smul.u32 %s23, %s22
      %s282 = smul.u32 2, %s281
      %p283 = scmp.lt.s32.totalorder %s282, 1
      %s284 = scalar_select %p283, %s282, 1
      %s285 = smul.addr %s284, 2
      %s286 = smul.addr %s285, 4
      %s287 = scalar_lea.vmem %s7, %s286
      %s288 = smul.u32 2, %s23
      %p289 = scmp.lt.s32.totalorder %s288, 1
      %s290 = scalar_select %p289, %s288, 1
      %s291 = smul.addr %s290, 2
      %s292 = smul.addr %s291, 4
      %s293 = scalar_lea.vmem %s0, %s292
      %s294 = smul.u32 2, %s23
      %s295 = smul.u32 %s23, %s22
      %s296 = smul.u32 2, %s295
      %p297 = scmp.lt.s32.totalorder %s296, 1
      %s298 = scalar_select %p297, %s296, 1
      %s299 = smul.addr %s298, 2
      %s300 = smul.addr %s299, 4
      %s301 = scalar_lea.vmem %s7, %s300
      %s302 = smul.u32 %s23, %s22
      %s303 = smul.u32 2, %s302
      %p304 = scmp.eq.s32.totalorder %s22, 0
      // Predicated region
      $region49: #{_forward_fused.1} parent=47 // pred_check
        %p305 = pneg %p304
      $region50: #{_forward_fused.1} parent=47 // pred_check_branch
        %307 = sbr.rel (%p305) target = $region52
      $region51: #{_forward_fused.1} parent=47 // pred_region
        %p308 = scmp.eq.s32.totalorder %s23, 0
        // Predicated region
        $region53: #{_forward_fused.1} parent=51 // pred_check
          %p309 = pneg %p308
        $region54: #{_forward_fused.1} parent=51 // pred_check_branch
          %311 = sbr.rel (%p309) target = $region56
        $region55: #{_forward_fused.1} parent=51 // pred_region
          %vm312 = vcmask 3072
          %313 = vst.msk [vmem:[#allocation3] sm:$0xf] %vm312, 0.0
          %314 = vst.msk [vmem:[#allocation3 + $0x4] sm:$0xf] %vm312, 0.0
        $region56: #{_forward_fused.1} parent=51 // pred_fallthru
          _
        %v315 = vlaneseq
        %v316 = vand.u32 %v315, 127
        %v317 = vadd.s32 %v316, 128
        %v318 = vand.u32 %v316, 15
        %v319 = vand.u32 %v317, 15
        %vm320 = vcmp.ge.s32.totalorder %v316, 16
        %vm321 = vcmp.ge.s32.totalorder %v317, 16
        %v322 = vsel %vm320, 1, 0
        %v323 = vsel %vm321, 1, 0
        %v324 = vcvt.s32.f32 %v322
        %v325 = vcvt.s32.f32 %v323
        %vm326 = vcmp.lt.s32.totalorder %v316, 240
        %vm327 = vcmp.lt.s32.totalorder %v317, 240
        %v328 = vsel %vm326, 1, 0
        %v329 = vsel %vm327, 1, 0
        %v330 = vcvt.s32.f32 %v328
        %v331 = vcvt.s32.f32 %v329
        %vm332 = vcmp.ne.s32.totalorder %v318, 0
        %vm333 = vcmp.ne.s32.totalorder %v319, 0
        %v334 = vsel %vm332, 1, 0
        %v335 = vsel %vm333, 1, 0
        %v336 = vcvt.s32.f32 %v334
        %v337 = vcvt.s32.f32 %v335
        %vm338 = vcmp.ne.s32.totalorder %v318, 15
        %vm339 = vcmp.ne.s32.totalorder %v319, 15
        %v340 = vsel %vm338, 1, 0
        %v341 = vsel %vm339, 1, 0
        %v342 = vcvt.s32.f32 %v340
        %v343 = vcvt.s32.f32 %v341
        %v344 = vmul.f32 %v324, %v336
        %v345 = vmul.f32 %v325, %v337
        %v346 = vmul.f32 %v324, %v342
        %v347 = vmul.f32 %v325, %v343
        %v348 = vmul.f32 %v330, %v336
        %v349 = vmul.f32 %v331, %v337
        %v350 = vmul.f32 %v330, %v342
        %v351 = vmul.f32 %v331, %v343
        %v352 = vld [vmem:[%s2] sm:$0xf]
        %v353 = vld [vmem:[%s4] sm:$0xf]
        %v354 = vld [vmem:[%s293] sm:$0xff]
        %v356 = vcombine.high %v354, %v354
        %358 = vrot.lane.b32.xlu0 %v354, 17
        %v359 = vpop.permute.xlu0 %358
        %360 = vrot.lane.b32.xlu0 %v356, 17
        %v361 = vpop.permute.xlu0 %360
        %vm362 = vcmp.lt.s32.totalorder %v316, 17
        %v363 = vsel %vm362, %v359, %v361
        %v364 = vsel %vm362, %v361, %v359
        %v365 = vmul.f32 %v364, %v344
        %v366 = vmul.f32 %v363, %v345
        %v367 = vld [vmem:[%s1] sm:$0xf]
        %v368 = vlaneseq
        %v369 = vshrl.u32 %v368, 7
        %v370 = vsub.s32 0, %v369
        %v371 = vrot.slane %v365, %v370
        %v372 = vlaneseq
        %v373 = vshrl.u32 %v372, 7
        %v374 = vsub.s32 0, %v373
        %v375 = vrot.slane %v366, %v374
        %377 = vset.pattern.permute.xlu0 0
        %378 = vperm.xlu0 %377, %v367
        %v379 = vpop.permute.xlu0 %378
        %v381 = vmul.f32 %v371, %v379
        %v382 = vmul.f32 %v375, %v379
        %s383 = scalar_lea.vmem %s1, 4
        %v384 = vld [vmem:[%s383] sm:$0xf]
        %v385 = vlaneseq
        %v386 = vshrl.u32 %v385, 7
        %v387 = vsub.s32 1, %v386
        %v388 = vrot.slane %v365, %v387
        %v389 = vlaneseq
        %v390 = vshrl.u32 %v389, 7
        %v391 = vsub.s32 1, %v390
        %v392 = vrot.slane %v366, %v391
        %394 = vset.pattern.permute.xlu0 0
        %395 = vperm.xlu0 %394, %v384
        %v396 = vpop.permute.xlu0 %395
        %v398 = vmul.f32 %v388, %v396
        %v399 = vmul.f32 %v392, %v396
        %v400 = vadd.f32 %v381, %v398
        %v401 = vadd.f32 %v382, %v399
        %s402 = scalar_lea.vmem %s1, 8
        %v403 = vld [vmem:[%s402] sm:$0xf]
        %v404 = vlaneseq
        %v405 = vshrl.u32 %v404, 7
        %v406 = vsub.s32 2, %v405
        %v407 = vrot.slane %v365, %v406
        %v408 = vlaneseq
        %v409 = vshrl.u32 %v408, 7
        %v410 = vsub.s32 2, %v409
        %v411 = vrot.slane %v366, %v410
        %413 = vset.pattern.permute.xlu0 0
        %414 = vperm.xlu0 %413, %v403
        %v415 = vpop.permute.xlu0 %414
        %v417 = vmul.f32 %v407, %v415
        %v418 = vmul.f32 %v411, %v415
        %v419 = vadd.f32 %v400, %v417
        %v420 = vadd.f32 %v401, %v418
        %s421 = scalar_lea.vmem %s1, 12
        %v422 = vld [vmem:[%s421] sm:$0xf]
        %v423 = vlaneseq
        %v424 = vshrl.u32 %v423, 7
        %v425 = vsub.s32 3, %v424
        %v426 = vrot.slane %v365, %v425
        %v427 = vlaneseq
        %v428 = vshrl.u32 %v427, 7
        %v429 = vsub.s32 3, %v428
        %v430 = vrot.slane %v366, %v429
        %432 = vset.pattern.permute.xlu0 0
        %433 = vperm.xlu0 %432, %v422
        %v434 = vpop.permute.xlu0 %433
        %v436 = vmul.f32 %v426, %v434
        %v437 = vmul.f32 %v430, %v434
        %v438 = vadd.f32 %v419, %v436
        %v439 = vadd.f32 %v420, %v437
        %440 = vrot.lane.b32.xlu0 %v354, 16
        %v441 = vpop.permute.xlu0 %440
        %442 = vrot.lane.b32.xlu0 %v356, 16
        %v443 = vpop.permute.xlu0 %442
        %vm444 = vcmp.lt.s32.totalorder %v316, 16
        %v445 = vsel %vm444, %v441, %v443
        %v446 = vsel %vm444, %v443, %v441
        %v447 = vmul.f32 %v446, %v324
        %v448 = vmul.f32 %v445, %v325
        %s449 = scalar_lea.vmem %s1, 16
        %v450 = vld [vmem:[%s449] sm:$0xf]
        %v451 = vlaneseq
        %v452 = vshrl.u32 %v451, 7
        %v453 = vsub.s32 0, %v452
        %v454 = vrot.slane %v447, %v453
        %v455 = vlaneseq
        %v456 = vshrl.u32 %v455, 7
        %v457 = vsub.s32 0, %v456
        %v458 = vrot.slane %v448, %v457
        %460 = vset.pattern.permute.xlu0 0
        %461 = vperm.xlu0 %460, %v450
        %v462 = vpop.permute.xlu0 %461
        %v464 = vmul.f32 %v454, %v462
        %v465 = vmul.f32 %v458, %v462
        %v466 = vadd.f32 %v438, %v464
        %v467 = vadd.f32 %v439, %v465
        %s468 = scalar_lea.vmem %s1, 20
        %v469 = vld [vmem:[%s468] sm:$0xf]
        %v470 = vlaneseq
        %v471 = vshrl.u32 %v470, 7
        %v472 = vsub.s32 1, %v471
        %v473 = vrot.slane %v447, %v472
        %v474 = vlaneseq
        %v475 = vshrl.u32 %v474, 7
        %v476 = vsub.s32 1, %v475
        %v477 = vrot.slane %v448, %v476
        %479 = vset.pattern.permute.xlu0 0
        %480 = vperm.xlu0 %479, %v469
        %v481 = vpop.permute.xlu0 %480
        %v483 = vmul.f32 %v473, %v481
        %v484 = vmul.f32 %v477, %v481
        %v485 = vadd.f32 %v466, %v483
        %v486 = vadd.f32 %v467, %v484
        %s487 = scalar_lea.vmem %s1, 24
        %v488 = vld [vmem:[%s487] sm:$0xf]
        %v489 = vlaneseq
        %v490 = vshrl.u32 %v489, 7
        %v491 = vsub.s32 2, %v490
        %v492 = vrot.slane %v447, %v491
        %v493 = vlaneseq
        %v494 = vshrl.u32 %v493, 7
        %v495 = vsub.s32 2, %v494
        %v496 = vrot.slane %v448, %v495
        %498 = vset.pattern.permute.xlu0 0
        %499 = vperm.xlu0 %498, %v488
        %v500 = vpop.permute.xlu0 %499
        %v502 = vmul.f32 %v492, %v500
        %v503 = vmul.f32 %v496, %v500
        %v504 = vadd.f32 %v485, %v502
        %v505 = vadd.f32 %v486, %v503
        %s506 = scalar_lea.vmem %s1, 28
        %v507 = vld [vmem:[%s506] sm:$0xf]
        %v508 = vlaneseq
        %v509 = vshrl.u32 %v508, 7
        %v510 = vsub.s32 3, %v509
        %v511 = vrot.slane %v447, %v510
        %v512 = vlaneseq
        %v513 = vshrl.u32 %v512, 7
        %v514 = vsub.s32 3, %v513
        %v515 = vrot.slane %v448, %v514
        %517 = vset.pattern.permute.xlu0 0
        %518 = vperm.xlu0 %517, %v507
        %v519 = vpop.permute.xlu0 %518
        %v521 = vmul.f32 %v511, %v519
        %v522 = vmul.f32 %v515, %v519
        %v523 = vadd.f32 %v504, %v521
        %v524 = vadd.f32 %v505, %v522
        %525 = vrot.lane.b32.xlu0 %v354, 15
        %v526 = vpop.permute.xlu0 %525
        %527 = vrot.lane.b32.xlu0 %v356, 15
        %v528 = vpop.permute.xlu0 %527
        %vm529 = vcmp.lt.s32.totalorder %v316, 15
        %v530 = vsel %vm529, %v526, %v528
        %v531 = vsel %vm529, %v528, %v526
        %v532 = vmul.f32 %v531, %v346
        %v533 = vmul.f32 %v530, %v347
        %s534 = scalar_lea.vmem %s1, 32
        %v535 = vld [vmem:[%s534] sm:$0xf]
        %v536 = vlaneseq
        %v537 = vshrl.u32 %v536, 7
        %v538 = vsub.s32 0, %v537
        %v539 = vrot.slane %v532, %v538
        %v540 = vlaneseq
        %v541 = vshrl.u32 %v540, 7
        %v542 = vsub.s32 0, %v541
        %v543 = vrot.slane %v533, %v542
        %545 = vset.pattern.permute.xlu0 0
        %546 = vperm.xlu0 %545, %v535
        %v547 = vpop.permute.xlu0 %546
        %v549 = vmul.f32 %v539, %v547
        %v550 = vmul.f32 %v543, %v547
        %v551 = vadd.f32 %v523, %v549
        %v552 = vadd.f32 %v524, %v550
        %s553 = scalar_lea.vmem %s1, 36
        %v554 = vld [vmem:[%s553] sm:$0xf]
        %v555 = vlaneseq
        %v556 = vshrl.u32 %v555, 7
        %v557 = vsub.s32 1, %v556
        %v558 = vrot.slane %v532, %v557
        %v559 = vlaneseq
        %v560 = vshrl.u32 %v559, 7
        %v561 = vsub.s32 1, %v560
        %v562 = vrot.slane %v533, %v561
        %564 = vset.pattern.permute.xlu0 0
        %565 = vperm.xlu0 %564, %v554
        %v566 = vpop.permute.xlu0 %565
        %v568 = vmul.f32 %v558, %v566
        %v569 = vmul.f32 %v562, %v566
        %v570 = vadd.f32 %v551, %v568
        %v571 = vadd.f32 %v552, %v569
        %s572 = scalar_lea.vmem %s1, 40
        %v573 = vld [vmem:[%s572] sm:$0xf]
        %v574 = vlaneseq
        %v575 = vshrl.u32 %v574, 7
        %v576 = vsub.s32 2, %v575
        %v577 = vrot.slane %v532, %v576
        %v578 = vlaneseq
        %v579 = vshrl.u32 %v578, 7
        %v580 = vsub.s32 2, %v579
        %v581 = vrot.slane %v533, %v580
        %583 = vset.pattern.permute.xlu0 0
        %584 = vperm.xlu0 %583, %v573
        %v585 = vpop.permute.xlu0 %584
        %v587 = vmul.f32 %v577, %v585
        %v588 = vmul.f32 %v581, %v585
        %v589 = vadd.f32 %v570, %v587
        %v590 = vadd.f32 %v571, %v588
        %s591 = scalar_lea.vmem %s1, 44
        %v592 = vld [vmem:[%s591] sm:$0xf]
        %v593 = vlaneseq
        %v594 = vshrl.u32 %v593, 7
        %v595 = vsub.s32 3, %v594
        %v596 = vrot.slane %v532, %v595
        %v597 = vlaneseq
        %v598 = vshrl.u32 %v597, 7
        %v599 = vsub.s32 3, %v598
        %v600 = vrot.slane %v533, %v599
        %602 = vset.pattern.permute.xlu0 0
        %603 = vperm.xlu0 %602, %v592
        %v604 = vpop.permute.xlu0 %603
        %v606 = vmul.f32 %v596, %v604
        %v607 = vmul.f32 %v600, %v604
        %v608 = vadd.f32 %v589, %v606
        %v609 = vadd.f32 %v590, %v607
        %610 = vrot.lane.b32.xlu0 %v354, 1
        %v611 = vpop.permute.xlu0 %610
        %612 = vrot.lane.b32.xlu0 %v356, 1
        %v613 = vpop.permute.xlu0 %612
        %vm614 = vcmp.lt.s32.totalorder %v316, 1
        %v615 = vsel %vm614, %v611, %v613
        %v616 = vsel %vm614, %v613, %v611
        %v617 = vmul.f32 %v616, %v336
        %v618 = vmul.f32 %v615, %v337
        %s619 = scalar_lea.vmem %s1, 48
        %v620 = vld [vmem:[%s619] sm:$0xf]
        %v621 = vlaneseq
        %v622 = vshrl.u32 %v621, 7
        %v623 = vsub.s32 0, %v622
        %v624 = vrot.slane %v617, %v623
        %v625 = vlaneseq
        %v626 = vshrl.u32 %v625, 7
        %v627 = vsub.s32 0, %v626
        %v628 = vrot.slane %v618, %v627
        %630 = vset.pattern.permute.xlu0 0
        %631 = vperm.xlu0 %630, %v620
        %v632 = vpop.permute.xlu0 %631
        %v634 = vmul.f32 %v624, %v632
        %v635 = vmul.f32 %v628, %v632
        %v636 = vadd.f32 %v608, %v634
        %v637 = vadd.f32 %v609, %v635
        %s638 = scalar_lea.vmem %s1, 52
        %v639 = vld [vmem:[%s638] sm:$0xf]
        %v640 = vlaneseq
        %v641 = vshrl.u32 %v640, 7
        %v642 = vsub.s32 1, %v641
        %v643 = vrot.slane %v617, %v642
        %v644 = vlaneseq
        %v645 = vshrl.u32 %v644, 7
        %v646 = vsub.s32 1, %v645
        %v647 = vrot.slane %v618, %v646
        %649 = vset.pattern.permute.xlu0 0
        %650 = vperm.xlu0 %649, %v639
        %v651 = vpop.permute.xlu0 %650
        %v653 = vmul.f32 %v643, %v651
        %v654 = vmul.f32 %v647, %v651
        %v655 = vadd.f32 %v636, %v653
        %v656 = vadd.f32 %v637, %v654
        %s657 = scalar_lea.vmem %s1, 56
        %v658 = vld [vmem:[%s657] sm:$0xf]
        %v659 = vlaneseq
        %v660 = vshrl.u32 %v659, 7
        %v661 = vsub.s32 2, %v660
        %v662 = vrot.slane %v617, %v661
        %v663 = vlaneseq
        %v664 = vshrl.u32 %v663, 7
        %v665 = vsub.s32 2, %v664
        %v666 = vrot.slane %v618, %v665
        %668 = vset.pattern.permute.xlu0 0
        %669 = vperm.xlu0 %668, %v658
        %v670 = vpop.permute.xlu0 %669
        %v672 = vmul.f32 %v662, %v670
        %v673 = vmul.f32 %v666, %v670
        %v674 = vadd.f32 %v655, %v672
        %v675 = vadd.f32 %v656, %v673
        %s676 = scalar_lea.vmem %s1, 60
        %v677 = vld [vmem:[%s676] sm:$0xf]
        %v678 = vlaneseq
        %v679 = vshrl.u32 %v678, 7
        %v680 = vsub.s32 3, %v679
        %v681 = vrot.slane %v617, %v680
        %v682 = vlaneseq
        %v683 = vshrl.u32 %v682, 7
        %v684 = vsub.s32 3, %v683
        %v685 = vrot.slane %v618, %v684
        %687 = vset.pattern.permute.xlu0 0
        %688 = vperm.xlu0 %687, %v677
        %v689 = vpop.permute.xlu0 %688
        %v691 = vmul.f32 %v681, %v689
        %v692 = vmul.f32 %v685, %v689
        %v693 = vadd.f32 %v674, %v691
        %v694 = vadd.f32 %v675, %v692
        %s695 = scalar_lea.vmem %s1, 64
        %v696 = vld [vmem:[%s695] sm:$0xf]
        %v697 = vlaneseq
        %v698 = vshrl.u32 %v697, 7
        %v699 = vsub.s32 0, %v698
        %v700 = vrot.slane %v354, %v699
        %v701 = vlaneseq
        %v702 = vshrl.u32 %v701, 7
        %v703 = vsub.s32 4, %v702
        %v704 = vrot.slane %v354, %v703
        %v707 = vlaneseq
        %v708 = vshrl.u32 %v707, 7
        %v709 = vsub.s32 0, %v708
        %v710 = vrot.slane %v700, %v709
        %v711 = vlaneseq
        %v712 = vshrl.u32 %v711, 7
        %v713 = vsub.s32 0, %v712
        %v714 = vrot.slane %v704, %v713
        %716 = vset.pattern.permute.xlu0 0
        %717 = vperm.xlu0 %716, %v696
        %v718 = vpop.permute.xlu0 %717
        %v720 = vmul.f32 %v710, %v718
        %v721 = vmul.f32 %v714, %v718
        %v722 = vadd.f32 %v693, %v720
        %v723 = vadd.f32 %v694, %v721
        %s724 = scalar_lea.vmem %s1, 68
        %v725 = vld [vmem:[%s724] sm:$0xf]
        %v726 = vlaneseq
        %v727 = vshrl.u32 %v726, 7
        %v728 = vsub.s32 1, %v727
        %v729 = vrot.slane %v354, %v728
        %v730 = vlaneseq
        %v731 = vshrl.u32 %v730, 7
        %v732 = vsub.s32 5, %v731
        %v733 = vrot.slane %v354, %v732
        %v736 = vlaneseq
        %v737 = vshrl.u32 %v736, 7
        %v738 = vsub.s32 1, %v737
        %v739 = vrot.slane %v729, %v738
        %v740 = vlaneseq
        %v741 = vshrl.u32 %v740, 7
        %v742 = vsub.s32 1, %v741
        %v743 = vrot.slane %v733, %v742
        %745 = vset.pattern.permute.xlu0 0
        %746 = vperm.xlu0 %745, %v725
        %v747 = vpop.permute.xlu0 %746
        %v749 = vmul.f32 %v739, %v747
        %v750 = vmul.f32 %v743, %v747
        %v751 = vadd.f32 %v722, %v749
        %v752 = vadd.f32 %v723, %v750
        %s753 = scalar_lea.vmem %s1, 72
        %v754 = vld [vmem:[%s753] sm:$0xf]
        %v755 = vlaneseq
        %v756 = vshrl.u32 %v755, 7
        %v757 = vsub.s32 2, %v756
        %v758 = vrot.slane %v354, %v757
        %v759 = vlaneseq
        %v760 = vshrl.u32 %v759, 7
        %v761 = vsub.s32 6, %v760
        %v762 = vrot.slane %v354, %v761
        %v765 = vlaneseq
        %v766 = vshrl.u32 %v765, 7
        %v767 = vsub.s32 2, %v766
        %v768 = vrot.slane %v758, %v767
        %v769 = vlaneseq
        %v770 = vshrl.u32 %v769, 7
        %v771 = vsub.s32 2, %v770
        %v772 = vrot.slane %v762, %v771
        %774 = vset.pattern.permute.xlu0 0
        %775 = vperm.xlu0 %774, %v754
        %v776 = vpop.permute.xlu0 %775
        %v778 = vmul.f32 %v768, %v776
        %v779 = vmul.f32 %v772, %v776
        %v780 = vadd.f32 %v751, %v778
        %v781 = vadd.f32 %v752, %v779
        %s782 = scalar_lea.vmem %s1, 76
        %v783 = vld [vmem:[%s782] sm:$0xf]
        %v784 = vlaneseq
        %v785 = vshrl.u32 %v784, 7
        %v786 = vsub.s32 3, %v785
        %v787 = vrot.slane %v354, %v786
        %v788 = vlaneseq
        %v789 = vshrl.u32 %v788, 7
        %v790 = vsub.s32 7, %v789
        %v791 = vrot.slane %v354, %v790
        %v794 = vlaneseq
        %v795 = vshrl.u32 %v794, 7
        %v796 = vsub.s32 3, %v795
        %v797 = vrot.slane %v787, %v796
        %v798 = vlaneseq
        %v799 = vshrl.u32 %v798, 7
        %v800 = vsub.s32 3, %v799
        %v801 = vrot.slane %v791, %v800
        %803 = vset.pattern.permute.xlu0 0
        %804 = vperm.xlu0 %803, %v783
        %v805 = vpop.permute.xlu0 %804
        %v807 = vmul.f32 %v797, %v805
        %v808 = vmul.f32 %v801, %v805
        %v809 = vadd.f32 %v780, %v807
        %v810 = vadd.f32 %v781, %v808
        %811 = vrot.lane.b32.xlu0 %v354, 127
        %v812 = vpop.permute.xlu0 %811
        %813 = vrot.lane.b32.xlu0 %v356, 127
        %v814 = vpop.permute.xlu0 %813
        %vm815 = vcmp.lt.s32.totalorder %v316, 127
        %v816 = vsel %vm815, %v812, %v814
        %v817 = vsel %vm815, %v814, %v812
        %v818 = vmul.f32 %v816, %v342
        %v819 = vmul.f32 %v817, %v343
        %s820 = scalar_lea.vmem %s1, 80
        %v821 = vld [vmem:[%s820] sm:$0xf]
        %v822 = vlaneseq
        %v823 = vshrl.u32 %v822, 7
        %v824 = vsub.s32 0, %v823
        %v825 = vrot.slane %v818, %v824
        %v826 = vlaneseq
        %v827 = vshrl.u32 %v826, 7
        %v828 = vsub.s32 0, %v827
        %v829 = vrot.slane %v819, %v828
        %831 = vset.pattern.permute.xlu0 0
        %832 = vperm.xlu0 %831, %v821
        %v833 = vpop.permute.xlu0 %832
        %v835 = vmul.f32 %v825, %v833
        %v836 = vmul.f32 %v829, %v833
        %v837 = vadd.f32 %v809, %v835
        %v838 = vadd.f32 %v810, %v836
        %s839 = scalar_lea.vmem %s1, 84
        %v840 = vld [vmem:[%s839] sm:$0xf]
        %v841 = vlaneseq
        %v842 = vshrl.u32 %v841, 7
        %v843 = vsub.s32 1, %v842
        %v844 = vrot.slane %v818, %v843
        %v845 = vlaneseq
        %v846 = vshrl.u32 %v845, 7
        %v847 = vsub.s32 1, %v846
        %v848 = vrot.slane %v819, %v847
        %850 = vset.pattern.permute.xlu0 0
        %851 = vperm.xlu0 %850, %v840
        %v852 = vpop.permute.xlu0 %851
        %v854 = vmul.f32 %v844, %v852
        %v855 = vmul.f32 %v848, %v852
        %v856 = vadd.f32 %v837, %v854
        %v857 = vadd.f32 %v838, %v855
        %s858 = scalar_lea.vmem %s1, 88
        %v859 = vld [vmem:[%s858] sm:$0xf]
        %v860 = vlaneseq
        %v861 = vshrl.u32 %v860, 7
        %v862 = vsub.s32 2, %v861
        %v863 = vrot.slane %v818, %v862
        %v864 = vlaneseq
        %v865 = vshrl.u32 %v864, 7
        %v866 = vsub.s32 2, %v865
        %v867 = vrot.slane %v819, %v866
        %869 = vset.pattern.permute.xlu0 0
        %870 = vperm.xlu0 %869, %v859
        %v871 = vpop.permute.xlu0 %870
        %v873 = vmul.f32 %v863, %v871
        %v874 = vmul.f32 %v867, %v871
        %v875 = vadd.f32 %v856, %v873
        %v876 = vadd.f32 %v857, %v874
        %s877 = scalar_lea.vmem %s1, 92
        %v878 = vld [vmem:[%s877] sm:$0xf]
        %v879 = vlaneseq
        %v880 = vshrl.u32 %v879, 7
        %v881 = vsub.s32 3, %v880
        %v882 = vrot.slane %v818, %v881
        %v883 = vlaneseq
        %v884 = vshrl.u32 %v883, 7
        %v885 = vsub.s32 3, %v884
        %v886 = vrot.slane %v819, %v885
        %888 = vset.pattern.permute.xlu0 0
        %889 = vperm.xlu0 %888, %v878
        %v890 = vpop.permute.xlu0 %889
        %v892 = vmul.f32 %v882, %v890
        %v893 = vmul.f32 %v886, %v890
        %v894 = vadd.f32 %v875, %v892
        %v895 = vadd.f32 %v876, %v893
        %896 = vrot.lane.b32.xlu0 %v354, 113
        %v897 = vpop.permute.xlu0 %896
        %898 = vrot.lane.b32.xlu0 %v356, 113
        %v899 = vpop.permute.xlu0 %898
        %vm900 = vcmp.lt.s32.totalorder %v316, 113
        %v901 = vsel %vm900, %v897, %v899
        %v902 = vsel %vm900, %v899, %v897
        %v903 = vmul.f32 %v901, %v348
        %v904 = vmul.f32 %v902, %v349
        %s905 = scalar_lea.vmem %s1, 96
        %v906 = vld [vmem:[%s905] sm:$0xf]
        %v907 = vlaneseq
        %v908 = vshrl.u32 %v907, 7
        %v909 = vsub.s32 0, %v908
        %v910 = vrot.slane %v903, %v909
        %v911 = vlaneseq
        %v912 = vshrl.u32 %v911, 7
        %v913 = vsub.s32 0, %v912
        %v914 = vrot.slane %v904, %v913
        %916 = vset.pattern.permute.xlu0 0
        %917 = vperm.xlu0 %916, %v906
        %v918 = vpop.permute.xlu0 %917
        %v920 = vmul.f32 %v910, %v918
        %v921 = vmul.f32 %v914, %v918
        %v922 = vadd.f32 %v894, %v920
        %v923 = vadd.f32 %v895, %v921
        %s924 = scalar_lea.vmem %s1, 100
        %v925 = vld [vmem:[%s924] sm:$0xf]
        %v926 = vlaneseq
        %v927 = vshrl.u32 %v926, 7
        %v928 = vsub.s32 1, %v927
        %v929 = vrot.slane %v903, %v928
        %v930 = vlaneseq
        %v931 = vshrl.u32 %v930, 7
        %v932 = vsub.s32 1, %v931
        %v933 = vrot.slane %v904, %v932
        %935 = vset.pattern.permute.xlu0 0
        %936 = vperm.xlu0 %935, %v925
        %v937 = vpop.permute.xlu0 %936
        %v939 = vmul.f32 %v929, %v937
        %v940 = vmul.f32 %v933, %v937
        %v941 = vadd.f32 %v922, %v939
        %v942 = vadd.f32 %v923, %v940
        %s943 = scalar_lea.vmem %s1, 104
        %v944 = vld [vmem:[%s943] sm:$0xf]
        %v945 = vlaneseq
        %v946 = vshrl.u32 %v945, 7
        %v947 = vsub.s32 2, %v946
        %v948 = vrot.slane %v903, %v947
        %v949 = vlaneseq
        %v950 = vshrl.u32 %v949, 7
        %v951 = vsub.s32 2, %v950
        %v952 = vrot.slane %v904, %v951
        %954 = vset.pattern.permute.xlu0 0
        %955 = vperm.xlu0 %954, %v944
        %v956 = vpop.permute.xlu0 %955
        %v958 = vmul.f32 %v948, %v956
        %v959 = vmul.f32 %v952, %v956
        %v960 = vadd.f32 %v941, %v958
        %v961 = vadd.f32 %v942, %v959
        %s962 = scalar_lea.vmem %s1, 108
        %v963 = vld [vmem:[%s962] sm:$0xf]
        %v964 = vlaneseq
        %v965 = vshrl.u32 %v964, 7
        %v966 = vsub.s32 3, %v965
        %v967 = vrot.slane %v903, %v966
        %v968 = vlaneseq
        %v969 = vshrl.u32 %v968, 7
        %v970 = vsub.s32 3, %v969
        %v971 = vrot.slane %v904, %v970
        %973 = vset.pattern.permute.xlu0 0
        %974 = vperm.xlu0 %973, %v963
        %v975 = vpop.permute.xlu0 %974
        %v977 = vmul.f32 %v967, %v975
        %v978 = vmul.f32 %v971, %v975
        %v979 = vadd.f32 %v960, %v977
        %v980 = vadd.f32 %v961, %v978
        %981 = vrot.lane.b32.xlu0 %v354, 112
        %v982 = vpop.permute.xlu0 %981
        %983 = vrot.lane.b32.xlu0 %v356, 112
        %v984 = vpop.permute.xlu0 %983
        %vm985 = vcmp.lt.s32.totalorder %v316, 112
        %v986 = vsel %vm985, %v982, %v984
        %v987 = vsel %vm985, %v984, %v982
        %v988 = vmul.f32 %v986, %v330
        %v989 = vmul.f32 %v987, %v331
        %s990 = scalar_lea.vmem %s1, 112
        %v991 = vld [vmem:[%s990] sm:$0xf]
        %v992 = vlaneseq
        %v993 = vshrl.u32 %v992, 7
        %v994 = vsub.s32 0, %v993
        %v995 = vrot.slane %v988, %v994
        %v996 = vlaneseq
        %v997 = vshrl.u32 %v996, 7
        %v998 = vsub.s32 0, %v997
        %v999 = vrot.slane %v989, %v998
        %1001 = vset.pattern.permute.xlu0 0
        %1002 = vperm.xlu0 %1001, %v991
        %v1003 = vpop.permute.xlu0 %1002
        %v1005 = vmul.f32 %v995, %v1003
        %v1006 = vmul.f32 %v999, %v1003
        %v1007 = vadd.f32 %v979, %v1005
        %v1008 = vadd.f32 %v980, %v1006
        %s1009 = scalar_lea.vmem %s1, 116
        %v1010 = vld [vmem:[%s1009] sm:$0xf]
        %v1011 = vlaneseq
        %v1012 = vshrl.u32 %v1011, 7
        %v1013 = vsub.s32 1, %v1012
        %v1014 = vrot.slane %v988, %v1013
        %v1015 = vlaneseq
        %v1016 = vshrl.u32 %v1015, 7
        %v1017 = vsub.s32 1, %v1016
        %v1018 = vrot.slane %v989, %v1017
        %1020 = vset.pattern.permute.xlu0 0
        %1021 = vperm.xlu0 %1020, %v1010
        %v1022 = vpop.permute.xlu0 %1021
        %v1024 = vmul.f32 %v1014, %v1022
        %v1025 = vmul.f32 %v1018, %v1022
        %v1026 = vadd.f32 %v1007, %v1024
        %v1027 = vadd.f32 %v1008, %v1025
        %s1028 = scalar_lea.vmem %s1, 120
        %v1029 = vld [vmem:[%s1028] sm:$0xf]
        %v1030 = vlaneseq
        %v1031 = vshrl.u32 %v1030, 7
        %v1032 = vsub.s32 2, %v1031
        %v1033 = vrot.slane %v988, %v1032
        %v1034 = vlaneseq
        %v1035 = vshrl.u32 %v1034, 7
        %v1036 = vsub.s32 2, %v1035
        %v1037 = vrot.slane %v989, %v1036
        %1039 = vset.pattern.permute.xlu0 0
        %1040 = vperm.xlu0 %1039, %v1029
        %v1041 = vpop.permute.xlu0 %1040
        %v1043 = vmul.f32 %v1033, %v1041
        %v1044 = vmul.f32 %v1037, %v1041
        %v1045 = vadd.f32 %v1026, %v1043
        %v1046 = vadd.f32 %v1027, %v1044
        %s1047 = scalar_lea.vmem %s1, 124
        %v1048 = vld [vmem:[%s1047] sm:$0xf]
        %v1049 = vlaneseq
        %v1050 = vshrl.u32 %v1049, 7
        %v1051 = vsub.s32 3, %v1050
        %v1052 = vrot.slane %v988, %v1051
        %v1053 = vlaneseq
        %v1054 = vshrl.u32 %v1053, 7
        %v1055 = vsub.s32 3, %v1054
        %v1056 = vrot.slane %v989, %v1055
        %1058 = vset.pattern.permute.xlu0 0
        %1059 = vperm.xlu0 %1058, %v1048
        %v1060 = vpop.permute.xlu0 %1059
        %v1062 = vmul.f32 %v1052, %v1060
        %v1063 = vmul.f32 %v1056, %v1060
        %v1064 = vadd.f32 %v1045, %v1062
        %v1065 = vadd.f32 %v1046, %v1063
        %1066 = vrot.lane.b32.xlu0 %v354, 111
        %v1067 = vpop.permute.xlu0 %1066
        %1068 = vrot.lane.b32.xlu0 %v356, 111
        %v1069 = vpop.permute.xlu0 %1068
        %vm1070 = vcmp.lt.s32.totalorder %v316, 111
        %v1071 = vsel %vm1070, %v1067, %v1069
        %v1072 = vsel %vm1070, %v1069, %v1067
        %v1073 = vmul.f32 %v1071, %v350
        %v1074 = vmul.f32 %v1072, %v351
        %s1075 = scalar_lea.vmem %s1, 128
        %v1076 = vld [vmem:[%s1075] sm:$0xf]
        %v1077 = vlaneseq
        %v1078 = vshrl.u32 %v1077, 7
        %v1079 = vsub.s32 0, %v1078
        %v1080 = vrot.slane %v1073, %v1079
        %v1081 = vlaneseq
        %v1082 = vshrl.u32 %v1081, 7
        %v1083 = vsub.s32 0, %v1082
        %v1084 = vrot.slane %v1074, %v1083
        %1086 = vset.pattern.permute.xlu0 0
        %1087 = vperm.xlu0 %1086, %v1076
        %v1088 = vpop.permute.xlu0 %1087
        %v1090 = vmul.f32 %v1080, %v1088
        %v1091 = vmul.f32 %v1084, %v1088
        %v1092 = vadd.f32 %v1064, %v1090
        %v1093 = vadd.f32 %v1065, %v1091
        %s1094 = scalar_lea.vmem %s1, 132
        %v1095 = vld [vmem:[%s1094] sm:$0xf]
        %v1096 = vlaneseq
        %v1097 = vshrl.u32 %v1096, 7
        %v1098 = vsub.s32 1, %v1097
        %v1099 = vrot.slane %v1073, %v1098
        %v1100 = vlaneseq
        %v1101 = vshrl.u32 %v1100, 7
        %v1102 = vsub.s32 1, %v1101
        %v1103 = vrot.slane %v1074, %v1102
        %1105 = vset.pattern.permute.xlu0 0
        %1106 = vperm.xlu0 %1105, %v1095
        %v1107 = vpop.permute.xlu0 %1106
        %v1109 = vmul.f32 %v1099, %v1107
        %v1110 = vmul.f32 %v1103, %v1107
        %v1111 = vadd.f32 %v1092, %v1109
        %v1112 = vadd.f32 %v1093, %v1110
        %s1113 = scalar_lea.vmem %s1, 136
        %v1114 = vld [vmem:[%s1113] sm:$0xf]
        %v1115 = vlaneseq
        %v1116 = vshrl.u32 %v1115, 7
        %v1117 = vsub.s32 2, %v1116
        %v1118 = vrot.slane %v1073, %v1117
        %v1119 = vlaneseq
        %v1120 = vshrl.u32 %v1119, 7
        %v1121 = vsub.s32 2, %v1120
        %v1122 = vrot.slane %v1074, %v1121
        %1124 = vset.pattern.permute.xlu0 0
        %1125 = vperm.xlu0 %1124, %v1114
        %v1126 = vpop.permute.xlu0 %1125
        %v1128 = vmul.f32 %v1118, %v1126
        %v1129 = vmul.f32 %v1122, %v1126
        %v1130 = vadd.f32 %v1111, %v1128
        %v1131 = vadd.f32 %v1112, %v1129
        %s1132 = scalar_lea.vmem %s1, 140
        %v1133 = vld [vmem:[%s1132] sm:$0xf]
        %v1134 = vlaneseq
        %v1135 = vshrl.u32 %v1134, 7
        %v1136 = vsub.s32 3, %v1135
        %v1137 = vrot.slane %v1073, %v1136
        %v1138 = vlaneseq
        %v1139 = vshrl.u32 %v1138, 7
        %v1140 = vsub.s32 3, %v1139
        %v1141 = vrot.slane %v1074, %v1140
        %1143 = vset.pattern.permute.xlu0 0
        %1144 = vperm.xlu0 %1143, %v1133
        %v1145 = vpop.permute.xlu0 %1144
        %v1147 = vmul.f32 %v1137, %v1145
        %v1148 = vmul.f32 %v1141, %v1145
        %v1149 = vadd.f32 %v1130, %v1147
        %v1150 = vadd.f32 %v1131, %v1148
        %1152 = vset.pattern.permute.xlu0 0
        %1153 = vperm.xlu0 %1152, %v352
        %v1154 = vpop.permute.xlu0 %1153
        %v1156 = vadd.f32 %v1149, %v1154
        %v1157 = vadd.f32 %v1150, %v1154
        %vm1158 = vcmask 1043456
        %v1159 = vsel %vm1158, %v1156, 0.0
        %v1160 = vsel %vm1158, %v1157, 0.0
        %v1161 = vadd.f32 %v1159, %v1160
        %1162 = vadd.xlane.f32.xlu0 %v1161
        %v1163 = vpop.xlane.xlu0 %1162
        %v1164 = vmul.f32 %v1163, 0.00390625
        %v1165 = vsub.f32 %v1156, %v1164
        %v1166 = vsub.f32 %v1157, %v1164
        %v1167 = vmul.f32 %v1165, %v1165
        %v1168 = vmul.f32 %v1166, %v1166
        %v1169 = vsel %vm1158, %v1167, 0.0
        %v1170 = vsel %vm1158, %v1168, 0.0
        %v1171 = vadd.f32 %v1169, %v1170
        %1172 = vadd.xlane.f32.xlu0 %v1171
        %v1173 = vpop.xlane.xlu0 %1172
        %v1174 = vmul.f32 %v1173, 0.00390625
        %v1175 = vadd.f32 %v1174, 1e-05
        %v1176 = vrsqrt.pop %v1175
        %v1177 = vmul.f32 %v1165, %v1176
        %v1178 = vmul.f32 %v1166, %v1176
        %1179 = vrot.lane.b32.xlu0 %v1177, 17
        %v1180 = vpop.permute.xlu0 %1179
        %1181 = vrot.lane.b32.xlu0 %v1178, 17
        %v1182 = vpop.permute.xlu0 %1181
        %v1183 = vsel %vm362, %v1180, %v1182
        %v1184 = vsel %vm362, %v1182, %v1180
        %v1185 = vmul.f32 %v1184, %v344
        %v1186 = vmul.f32 %v1183, %v345
        %v1187 = vld [vmem:[%s3] sm:$0xf]
        %v1188 = vlaneseq
        %v1189 = vshrl.u32 %v1188, 7
        %v1190 = vsub.s32 0, %v1189
        %v1191 = vrot.slane %v1185, %v1190
        %v1192 = vlaneseq
        %v1193 = vshrl.u32 %v1192, 7
        %v1194 = vsub.s32 0, %v1193
        %v1195 = vrot.slane %v1186, %v1194
        %1197 = vset.pattern.permute.xlu0 0
        %1198 = vperm.xlu0 %1197, %v1187
        %v1199 = vpop.permute.xlu0 %1198
        %v1201 = vmul.f32 %v1191, %v1199
        %v1202 = vmul.f32 %v1195, %v1199
        %s1203 = scalar_lea.vmem %s3, 4
        %v1204 = vld [vmem:[%s1203] sm:$0xf]
        %v1205 = vlaneseq
        %v1206 = vshrl.u32 %v1205, 7
        %v1207 = vsub.s32 1, %v1206
        %v1208 = vrot.slane %v1185, %v1207
        %v1209 = vlaneseq
        %v1210 = vshrl.u32 %v1209, 7
        %v1211 = vsub.s32 1, %v1210
        %v1212 = vrot.slane %v1186, %v1211
        %1214 = vset.pattern.permute.xlu0 0
        %1215 = vperm.xlu0 %1214, %v1204
        %v1216 = vpop.permute.xlu0 %1215
        %v1218 = vmul.f32 %v1208, %v1216
        %v1219 = vmul.f32 %v1212, %v1216
        %v1220 = vadd.f32 %v1201, %v1218
        %v1221 = vadd.f32 %v1202, %v1219
        %s1222 = scalar_lea.vmem %s3, 8
        %v1223 = vld [vmem:[%s1222] sm:$0xf]
        %v1224 = vlaneseq
        %v1225 = vshrl.u32 %v1224, 7
        %v1226 = vsub.s32 2, %v1225
        %v1227 = vrot.slane %v1185, %v1226
        %v1228 = vlaneseq
        %v1229 = vshrl.u32 %v1228, 7
        %v1230 = vsub.s32 2, %v1229
        %v1231 = vrot.slane %v1186, %v1230
        %1233 = vset.pattern.permute.xlu0 0
        %1234 = vperm.xlu0 %1233, %v1223
        %v1235 = vpop.permute.xlu0 %1234
        %v1237 = vmul.f32 %v1227, %v1235
        %v1238 = vmul.f32 %v1231, %v1235
        %v1239 = vadd.f32 %v1220, %v1237
        %v1240 = vadd.f32 %v1221, %v1238
        %s1241 = scalar_lea.vmem %s3, 12
        %v1242 = vld [vmem:[%s1241] sm:$0xf]
        %v1243 = vlaneseq
        %v1244 = vshrl.u32 %v1243, 7
        %v1245 = vsub.s32 3, %v1244
        %v1246 = vrot.slane %v1185, %v1245
        %v1247 = vlaneseq
        %v1248 = vshrl.u32 %v1247, 7
        %v1249 = vsub.s32 3, %v1248
        %v1250 = vrot.slane %v1186, %v1249
        %1252 = vset.pattern.permute.xlu0 0
        %1253 = vperm.xlu0 %1252, %v1242
        %v1254 = vpop.permute.xlu0 %1253
        %v1256 = vmul.f32 %v1246, %v1254
        %v1257 = vmul.f32 %v1250, %v1254
        %v1258 = vadd.f32 %v1239, %v1256
        %v1259 = vadd.f32 %v1240, %v1257
        %1260 = vrot.lane.b32.xlu0 %v1177, 16
        %v1261 = vpop.permute.xlu0 %1260
        %1262 = vrot.lane.b32.xlu0 %v1178, 16
        %v1263 = vpop.permute.xlu0 %1262
        %v1264 = vsel %vm444, %v1261, %v1263
        %v1265 = vsel %vm444, %v1263, %v1261
        %v1266 = vmul.f32 %v1265, %v324
        %v1267 = vmul.f32 %v1264, %v325
        %s1268 = scalar_lea.vmem %s3, 16
        %v1269 = vld [vmem:[%s1268] sm:$0xf]
        %v1270 = vlaneseq
        %v1271 = vshrl.u32 %v1270, 7
        %v1272 = vsub.s32 0, %v1271
        %v1273 = vrot.slane %v1266, %v1272
        %v1274 = vlaneseq
        %v1275 = vshrl.u32 %v1274, 7
        %v1276 = vsub.s32 0, %v1275
        %v1277 = vrot.slane %v1267, %v1276
        %1279 = vset.pattern.permute.xlu0 0
        %1280 = vperm.xlu0 %1279, %v1269
        %v1281 = vpop.permute.xlu0 %1280
        %v1283 = vmul.f32 %v1273, %v1281
        %v1284 = vmul.f32 %v1277, %v1281
        %v1285 = vadd.f32 %v1258, %v1283
        %v1286 = vadd.f32 %v1259, %v1284
        %s1287 = scalar_lea.vmem %s3, 20
        %v1288 = vld [vmem:[%s1287] sm:$0xf]
        %v1289 = vlaneseq
        %v1290 = vshrl.u32 %v1289, 7
        %v1291 = vsub.s32 1, %v1290
        %v1292 = vrot.slane %v1266, %v1291
        %v1293 = vlaneseq
        %v1294 = vshrl.u32 %v1293, 7
        %v1295 = vsub.s32 1, %v1294
        %v1296 = vrot.slane %v1267, %v1295
        %1298 = vset.pattern.permute.xlu0 0
        %1299 = vperm.xlu0 %1298, %v1288
        %v1300 = vpop.permute.xlu0 %1299
        %v1302 = vmul.f32 %v1292, %v1300
        %v1303 = vmul.f32 %v1296, %v1300
        %v1304 = vadd.f32 %v1285, %v1302
        %v1305 = vadd.f32 %v1286, %v1303
        %s1306 = scalar_lea.vmem %s3, 24
        %v1307 = vld [vmem:[%s1306] sm:$0xf]
        %v1308 = vlaneseq
        %v1309 = vshrl.u32 %v1308, 7
        %v1310 = vsub.s32 2, %v1309
        %v1311 = vrot.slane %v1266, %v1310
        %v1312 = vlaneseq
        %v1313 = vshrl.u32 %v1312, 7
        %v1314 = vsub.s32 2, %v1313
        %v1315 = vrot.slane %v1267, %v1314
        %1317 = vset.pattern.permute.xlu0 0
        %1318 = vperm.xlu0 %1317, %v1307
        %v1319 = vpop.permute.xlu0 %1318
        %v1321 = vmul.f32 %v1311, %v1319
        %v1322 = vmul.f32 %v1315, %v1319
        %v1323 = vadd.f32 %v1304, %v1321
        %v1324 = vadd.f32 %v1305, %v1322
        %s1325 = scalar_lea.vmem %s3, 28
        %v1326 = vld [vmem:[%s1325] sm:$0xf]
        %v1327 = vlaneseq
        %v1328 = vshrl.u32 %v1327, 7
        %v1329 = vsub.s32 3, %v1328
        %v1330 = vrot.slane %v1266, %v1329
        %v1331 = vlaneseq
        %v1332 = vshrl.u32 %v1331, 7
        %v1333 = vsub.s32 3, %v1332
        %v1334 = vrot.slane %v1267, %v1333
        %1336 = vset.pattern.permute.xlu0 0
        %1337 = vperm.xlu0 %1336, %v1326
        %v1338 = vpop.permute.xlu0 %1337
        %v1340 = vmul.f32 %v1330, %v1338
        %v1341 = vmul.f32 %v1334, %v1338
        %v1342 = vadd.f32 %v1323, %v1340
        %v1343 = vadd.f32 %v1324, %v1341
        %1344 = vrot.lane.b32.xlu0 %v1177, 15
        %v1345 = vpop.permute.xlu0 %1344
        %1346 = vrot.lane.b32.xlu0 %v1178, 15
        %v1347 = vpop.permute.xlu0 %1346
        %v1348 = vsel %vm529, %v1345, %v1347
        %v1349 = vsel %vm529, %v1347, %v1345
        %v1350 = vmul.f32 %v1349, %v346
        %v1351 = vmul.f32 %v1348, %v347
        %s1352 = scalar_lea.vmem %s3, 32
        %v1353 = vld [vmem:[%s1352] sm:$0xf]
        %v1354 = vlaneseq
        %v1355 = vshrl.u32 %v1354, 7
        %v1356 = vsub.s32 0, %v1355
        %v1357 = vrot.slane %v1350, %v1356
        %v1358 = vlaneseq
        %v1359 = vshrl.u32 %v1358, 7
        %v1360 = vsub.s32 0, %v1359
        %v1361 = vrot.slane %v1351, %v1360
        %1363 = vset.pattern.permute.xlu0 0
        %1364 = vperm.xlu0 %1363, %v1353
        %v1365 = vpop.permute.xlu0 %1364
        %v1367 = vmul.f32 %v1357, %v1365
        %v1368 = vmul.f32 %v1361, %v1365
        %v1369 = vadd.f32 %v1342, %v1367
        %v1370 = vadd.f32 %v1343, %v1368
        %s1371 = scalar_lea.vmem %s3, 36
        %v1372 = vld [vmem:[%s1371] sm:$0xf]
        %v1373 = vlaneseq
        %v1374 = vshrl.u32 %v1373, 7
        %v1375 = vsub.s32 1, %v1374
        %v1376 = vrot.slane %v1350, %v1375
        %v1377 = vlaneseq
        %v1378 = vshrl.u32 %v1377, 7
        %v1379 = vsub.s32 1, %v1378
        %v1380 = vrot.slane %v1351, %v1379
        %1382 = vset.pattern.permute.xlu0 0
        %1383 = vperm.xlu0 %1382, %v1372
        %v1384 = vpop.permute.xlu0 %1383
        %v1386 = vmul.f32 %v1376, %v1384
        %v1387 = vmul.f32 %v1380, %v1384
        %v1388 = vadd.f32 %v1369, %v1386
        %v1389 = vadd.f32 %v1370, %v1387
        %s1390 = scalar_lea.vmem %s3, 40
        %v1391 = vld [vmem:[%s1390] sm:$0xf]
        %v1392 = vlaneseq
        %v1393 = vshrl.u32 %v1392, 7
        %v1394 = vsub.s32 2, %v1393
        %v1395 = vrot.slane %v1350, %v1394
        %v1396 = vlaneseq
        %v1397 = vshrl.u32 %v1396, 7
        %v1398 = vsub.s32 2, %v1397
        %v1399 = vrot.slane %v1351, %v1398
        %1401 = vset.pattern.permute.xlu0 0
        %1402 = vperm.xlu0 %1401, %v1391
        %v1403 = vpop.permute.xlu0 %1402
        %v1405 = vmul.f32 %v1395, %v1403
        %v1406 = vmul.f32 %v1399, %v1403
        %v1407 = vadd.f32 %v1388, %v1405
        %v1408 = vadd.f32 %v1389, %v1406
        %s1409 = scalar_lea.vmem %s3, 44
        %v1410 = vld [vmem:[%s1409] sm:$0xf]
        %v1411 = vlaneseq
        %v1412 = vshrl.u32 %v1411, 7
        %v1413 = vsub.s32 3, %v1412
        %v1414 = vrot.slane %v1350, %v1413
        %v1415 = vlaneseq
        %v1416 = vshrl.u32 %v1415, 7
        %v1417 = vsub.s32 3, %v1416
        %v1418 = vrot.slane %v1351, %v1417
        %1420 = vset.pattern.permute.xlu0 0
        %1421 = vperm.xlu0 %1420, %v1410
        %v1422 = vpop.permute.xlu0 %1421
        %v1424 = vmul.f32 %v1414, %v1422
        %v1425 = vmul.f32 %v1418, %v1422
        %v1426 = vadd.f32 %v1407, %v1424
        %v1427 = vadd.f32 %v1408, %v1425
        %1428 = vrot.lane.b32.xlu0 %v1177, 1
        %v1429 = vpop.permute.xlu0 %1428
        %1430 = vrot.lane.b32.xlu0 %v1178, 1
        %v1431 = vpop.permute.xlu0 %1430
        %v1432 = vsel %vm614, %v1429, %v1431
        %v1433 = vsel %vm614, %v1431, %v1429
        %v1434 = vmul.f32 %v1433, %v336
        %v1435 = vmul.f32 %v1432, %v337
        %s1436 = scalar_lea.vmem %s3, 48
        %v1437 = vld [vmem:[%s1436] sm:$0xf]
        %v1438 = vlaneseq
        %v1439 = vshrl.u32 %v1438, 7
        %v1440 = vsub.s32 0, %v1439
        %v1441 = vrot.slane %v1434, %v1440
        %v1442 = vlaneseq
        %v1443 = vshrl.u32 %v1442, 7
        %v1444 = vsub.s32 0, %v1443
        %v1445 = vrot.slane %v1435, %v1444
        %1447 = vset.pattern.permute.xlu0 0
        %1448 = vperm.xlu0 %1447, %v1437
        %v1449 = vpop.permute.xlu0 %1448
        %v1451 = vmul.f32 %v1441, %v1449
        %v1452 = vmul.f32 %v1445, %v1449
        %v1453 = vadd.f32 %v1426, %v1451
        %v1454 = vadd.f32 %v1427, %v1452
        %s1455 = scalar_lea.vmem %s3, 52
        %v1456 = vld [vmem:[%s1455] sm:$0xf]
        %v1457 = vlaneseq
        %v1458 = vshrl.u32 %v1457, 7
        %v1459 = vsub.s32 1, %v1458
        %v1460 = vrot.slane %v1434, %v1459
        %v1461 = vlaneseq
        %v1462 = vshrl.u32 %v1461, 7
        %v1463 = vsub.s32 1, %v1462
        %v1464 = vrot.slane %v1435, %v1463
        %1466 = vset.pattern.permute.xlu0 0
        %1467 = vperm.xlu0 %1466, %v1456
        %v1468 = vpop.permute.xlu0 %1467
        %v1470 = vmul.f32 %v1460, %v1468
        %v1471 = vmul.f32 %v1464, %v1468
        %v1472 = vadd.f32 %v1453, %v1470
        %v1473 = vadd.f32 %v1454, %v1471
        %s1474 = scalar_lea.vmem %s3, 56
        %v1475 = vld [vmem:[%s1474] sm:$0xf]
        %v1476 = vlaneseq
        %v1477 = vshrl.u32 %v1476, 7
        %v1478 = vsub.s32 2, %v1477
        %v1479 = vrot.slane %v1434, %v1478
        %v1480 = vlaneseq
        %v1481 = vshrl.u32 %v1480, 7
        %v1482 = vsub.s32 2, %v1481
        %v1483 = vrot.slane %v1435, %v1482
        %1485 = vset.pattern.permute.xlu0 0
        %1486 = vperm.xlu0 %1485, %v1475
        %v1487 = vpop.permute.xlu0 %1486
        %v1489 = vmul.f32 %v1479, %v1487
        %v1490 = vmul.f32 %v1483, %v1487
        %v1491 = vadd.f32 %v1472, %v1489
        %v1492 = vadd.f32 %v1473, %v1490
        %s1493 = scalar_lea.vmem %s3, 60
        %v1494 = vld [vmem:[%s1493] sm:$0xf]
        %v1495 = vlaneseq
        %v1496 = vshrl.u32 %v1495, 7
        %v1497 = vsub.s32 3, %v1496
        %v1498 = vrot.slane %v1434, %v1497
        %v1499 = vlaneseq
        %v1500 = vshrl.u32 %v1499, 7
        %v1501 = vsub.s32 3, %v1500
        %v1502 = vrot.slane %v1435, %v1501
        %1504 = vset.pattern.permute.xlu0 0
        %1505 = vperm.xlu0 %1504, %v1494
        %v1506 = vpop.permute.xlu0 %1505
        %v1508 = vmul.f32 %v1498, %v1506
        %v1509 = vmul.f32 %v1502, %v1506
        %v1510 = vadd.f32 %v1491, %v1508
        %v1511 = vadd.f32 %v1492, %v1509
        %s1512 = scalar_lea.vmem %s3, 64
        %v1513 = vld [vmem:[%s1512] sm:$0xf]
        %v1514 = vlaneseq
        %v1515 = vshrl.u32 %v1514, 7
        %v1516 = vsub.s32 0, %v1515
        %v1517 = vrot.slane %v1177, %v1516
        %v1518 = vlaneseq
        %v1519 = vshrl.u32 %v1518, 7
        %v1520 = vsub.s32 0, %v1519
        %v1521 = vrot.slane %v1178, %v1520
        %1523 = vset.pattern.permute.xlu0 0
        %1524 = vperm.xlu0 %1523, %v1513
        %v1525 = vpop.permute.xlu0 %1524
        %v1527 = vmul.f32 %v1517, %v1525
        %v1528 = vmul.f32 %v1521, %v1525
        %v1529 = vadd.f32 %v1510, %v1527
        %v1530 = vadd.f32 %v1511, %v1528
        %s1531 = scalar_lea.vmem %s3, 68
        %v1532 = vld [vmem:[%s1531] sm:$0xf]
        %v1533 = vlaneseq
        %v1534 = vshrl.u32 %v1533, 7
        %v1535 = vsub.s32 1, %v1534
        %v1536 = vrot.slane %v1177, %v1535
        %v1537 = vlaneseq
        %v1538 = vshrl.u32 %v1537, 7
        %v1539 = vsub.s32 1, %v1538
        %v1540 = vrot.slane %v1178, %v1539
        %1542 = vset.pattern.permute.xlu0 0
        %1543 = vperm.xlu0 %1542, %v1532
        %v1544 = vpop.permute.xlu0 %1543
        %v1546 = vmul.f32 %v1536, %v1544
        %v1547 = vmul.f32 %v1540, %v1544
        %v1548 = vadd.f32 %v1529, %v1546
        %v1549 = vadd.f32 %v1530, %v1547
        %s1550 = scalar_lea.vmem %s3, 72
        %v1551 = vld [vmem:[%s1550] sm:$0xf]
        %v1552 = vlaneseq
        %v1553 = vshrl.u32 %v1552, 7
        %v1554 = vsub.s32 2, %v1553
        %v1555 = vrot.slane %v1177, %v1554
        %v1556 = vlaneseq
        %v1557 = vshrl.u32 %v1556, 7
        %v1558 = vsub.s32 2, %v1557
        %v1559 = vrot.slane %v1178, %v1558
        %1561 = vset.pattern.permute.xlu0 0
        %1562 = vperm.xlu0 %1561, %v1551
        %v1563 = vpop.permute.xlu0 %1562
        %v1565 = vmul.f32 %v1555, %v1563
        %v1566 = vmul.f32 %v1559, %v1563
        %v1567 = vadd.f32 %v1548, %v1565
        %v1568 = vadd.f32 %v1549, %v1566
        %s1569 = scalar_lea.vmem %s3, 76
        %v1570 = vld [vmem:[%s1569] sm:$0xf]
        %v1571 = vlaneseq
        %v1572 = vshrl.u32 %v1571, 7
        %v1573 = vsub.s32 3, %v1572
        %v1574 = vrot.slane %v1177, %v1573
        %v1575 = vlaneseq
        %v1576 = vshrl.u32 %v1575, 7
        %v1577 = vsub.s32 3, %v1576
        %v1578 = vrot.slane %v1178, %v1577
        %1580 = vset.pattern.permute.xlu0 0
        %1581 = vperm.xlu0 %1580, %v1570
        %v1582 = vpop.permute.xlu0 %1581
        %v1584 = vmul.f32 %v1574, %v1582
        %v1585 = vmul.f32 %v1578, %v1582
        %v1586 = vadd.f32 %v1567, %v1584
        %v1587 = vadd.f32 %v1568, %v1585
        %1588 = vrot.lane.b32.xlu0 %v1177, 127
        %v1589 = vpop.permute.xlu0 %1588
        %1590 = vrot.lane.b32.xlu0 %v1178, 127
        %v1591 = vpop.permute.xlu0 %1590
        %v1592 = vsel %vm815, %v1589, %v1591
        %v1593 = vsel %vm815, %v1591, %v1589
        %v1594 = vmul.f32 %v1592, %v342
        %v1595 = vmul.f32 %v1593, %v343
        %s1596 = scalar_lea.vmem %s3, 80
        %v1597 = vld [vmem:[%s1596] sm:$0xf]
        %v1598 = vlaneseq
        %v1599 = vshrl.u32 %v1598, 7
        %v1600 = vsub.s32 0, %v1599
        %v1601 = vrot.slane %v1594, %v1600
        %v1602 = vlaneseq
        %v1603 = vshrl.u32 %v1602, 7
        %v1604 = vsub.s32 0, %v1603
        %v1605 = vrot.slane %v1595, %v1604
        %1607 = vset.pattern.permute.xlu0 0
        %1608 = vperm.xlu0 %1607, %v1597
        %v1609 = vpop.permute.xlu0 %1608
        %v1611 = vmul.f32 %v1601, %v1609
        %v1612 = vmul.f32 %v1605, %v1609
        %v1613 = vadd.f32 %v1586, %v1611
        %v1614 = vadd.f32 %v1587, %v1612
        %s1615 = scalar_lea.vmem %s3, 84
        %v1616 = vld [vmem:[%s1615] sm:$0xf]
        %v1617 = vlaneseq
        %v1618 = vshrl.u32 %v1617, 7
        %v1619 = vsub.s32 1, %v1618
        %v1620 = vrot.slane %v1594, %v1619
        %v1621 = vlaneseq
        %v1622 = vshrl.u32 %v1621, 7
        %v1623 = vsub.s32 1, %v1622
        %v1624 = vrot.slane %v1595, %v1623
        %1626 = vset.pattern.permute.xlu0 0
        %1627 = vperm.xlu0 %1626, %v1616
        %v1628 = vpop.permute.xlu0 %1627
        %v1630 = vmul.f32 %v1620, %v1628
        %v1631 = vmul.f32 %v1624, %v1628
        %v1632 = vadd.f32 %v1613, %v1630
        %v1633 = vadd.f32 %v1614, %v1631
        %s1634 = scalar_lea.vmem %s3, 88
        %v1635 = vld [vmem:[%s1634] sm:$0xf]
        %v1636 = vlaneseq
        %v1637 = vshrl.u32 %v1636, 7
        %v1638 = vsub.s32 2, %v1637
        %v1639 = vrot.slane %v1594, %v1638
        %v1640 = vlaneseq
        %v1641 = vshrl.u32 %v1640, 7
        %v1642 = vsub.s32 2, %v1641
        %v1643 = vrot.slane %v1595, %v1642
        %1645 = vset.pattern.permute.xlu0 0
        %1646 = vperm.xlu0 %1645, %v1635
        %v1647 = vpop.permute.xlu0 %1646
        %v1649 = vmul.f32 %v1639, %v1647
        %v1650 = vmul.f32 %v1643, %v1647
        %v1651 = vadd.f32 %v1632, %v1649
        %v1652 = vadd.f32 %v1633, %v1650
        %s1653 = scalar_lea.vmem %s3, 92
        %v1654 = vld [vmem:[%s1653] sm:$0xf]
        %v1655 = vlaneseq
        %v1656 = vshrl.u32 %v1655, 7
        %v1657 = vsub.s32 3, %v1656
        %v1658 = vrot.slane %v1594, %v1657
        %v1659 = vlaneseq
        %v1660 = vshrl.u32 %v1659, 7
        %v1661 = vsub.s32 3, %v1660
        %v1662 = vrot.slane %v1595, %v1661
        %1664 = vset.pattern.permute.xlu0 0
        %1665 = vperm.xlu0 %1664, %v1654
        %v1666 = vpop.permute.xlu0 %1665
        %v1668 = vmul.f32 %v1658, %v1666
        %v1669 = vmul.f32 %v1662, %v1666
        %v1670 = vadd.f32 %v1651, %v1668
        %v1671 = vadd.f32 %v1652, %v1669
        %1672 = vrot.lane.b32.xlu0 %v1177, 113
        %v1673 = vpop.permute.xlu0 %1672
        %1674 = vrot.lane.b32.xlu0 %v1178, 113
        %v1675 = vpop.permute.xlu0 %1674
        %v1676 = vsel %vm900, %v1673, %v1675
        %v1677 = vsel %vm900, %v1675, %v1673
        %v1678 = vmul.f32 %v1676, %v348
        %v1679 = vmul.f32 %v1677, %v349
        %s1680 = scalar_lea.vmem %s3, 96
        %v1681 = vld [vmem:[%s1680] sm:$0xf]
        %v1682 = vlaneseq
        %v1683 = vshrl.u32 %v1682, 7
        %v1684 = vsub.s32 0, %v1683
        %v1685 = vrot.slane %v1678, %v1684
        %v1686 = vlaneseq
        %v1687 = vshrl.u32 %v1686, 7
        %v1688 = vsub.s32 0, %v1687
        %v1689 = vrot.slane %v1679, %v1688
        %1691 = vset.pattern.permute.xlu0 0
        %1692 = vperm.xlu0 %1691, %v1681
        %v1693 = vpop.permute.xlu0 %1692
        %v1695 = vmul.f32 %v1685, %v1693
        %v1696 = vmul.f32 %v1689, %v1693
        %v1697 = vadd.f32 %v1670, %v1695
        %v1698 = vadd.f32 %v1671, %v1696
        %s1699 = scalar_lea.vmem %s3, 100
        %v1700 = vld [vmem:[%s1699] sm:$0xf]
        %v1701 = vlaneseq
        %v1702 = vshrl.u32 %v1701, 7
        %v1703 = vsub.s32 1, %v1702
        %v1704 = vrot.slane %v1678, %v1703
        %v1705 = vlaneseq
        %v1706 = vshrl.u32 %v1705, 7
        %v1707 = vsub.s32 1, %v1706
        %v1708 = vrot.slane %v1679, %v1707
        %1710 = vset.pattern.permute.xlu0 0
        %1711 = vperm.xlu0 %1710, %v1700
        %v1712 = vpop.permute.xlu0 %1711
        %v1714 = vmul.f32 %v1704, %v1712
        %v1715 = vmul.f32 %v1708, %v1712
        %v1716 = vadd.f32 %v1697, %v1714
        %v1717 = vadd.f32 %v1698, %v1715
        %s1718 = scalar_lea.vmem %s3, 104
        %v1719 = vld [vmem:[%s1718] sm:$0xf]
        %v1720 = vlaneseq
        %v1721 = vshrl.u32 %v1720, 7
        %v1722 = vsub.s32 2, %v1721
        %v1723 = vrot.slane %v1678, %v1722
        %v1724 = vlaneseq
        %v1725 = vshrl.u32 %v1724, 7
        %v1726 = vsub.s32 2, %v1725
        %v1727 = vrot.slane %v1679, %v1726
        %1729 = vset.pattern.permute.xlu0 0
        %1730 = vperm.xlu0 %1729, %v1719
        %v1731 = vpop.permute.xlu0 %1730
        %v1733 = vmul.f32 %v1723, %v1731
        %v1734 = vmul.f32 %v1727, %v1731
        %v1735 = vadd.f32 %v1716, %v1733
        %v1736 = vadd.f32 %v1717, %v1734
        %s1737 = scalar_lea.vmem %s3, 108
        %v1738 = vld [vmem:[%s1737] sm:$0xf]
        %v1739 = vlaneseq
        %v1740 = vshrl.u32 %v1739, 7
        %v1741 = vsub.s32 3, %v1740
        %v1742 = vrot.slane %v1678, %v1741
        %v1743 = vlaneseq
        %v1744 = vshrl.u32 %v1743, 7
        %v1745 = vsub.s32 3, %v1744
        %v1746 = vrot.slane %v1679, %v1745
        %1748 = vset.pattern.permute.xlu0 0
        %1749 = vperm.xlu0 %1748, %v1738
        %v1750 = vpop.permute.xlu0 %1749
        %v1752 = vmul.f32 %v1742, %v1750
        %v1753 = vmul.f32 %v1746, %v1750
        %v1754 = vadd.f32 %v1735, %v1752
        %v1755 = vadd.f32 %v1736, %v1753
        %1756 = vrot.lane.b32.xlu0 %v1177, 112
        %v1757 = vpop.permute.xlu0 %1756
        %1758 = vrot.lane.b32.xlu0 %v1178, 112
        %v1759 = vpop.permute.xlu0 %1758
        %v1760 = vsel %vm985, %v1757, %v1759
        %v1761 = vsel %vm985, %v1759, %v1757
        %v1762 = vmul.f32 %v1760, %v330
        %v1763 = vmul.f32 %v1761, %v331
        %s1764 = scalar_lea.vmem %s3, 112
        %v1765 = vld [vmem:[%s1764] sm:$0xf]
        %v1766 = vlaneseq
        %v1767 = vshrl.u32 %v1766, 7
        %v1768 = vsub.s32 0, %v1767
        %v1769 = vrot.slane %v1762, %v1768
        %v1770 = vlaneseq
        %v1771 = vshrl.u32 %v1770, 7
        %v1772 = vsub.s32 0, %v1771
        %v1773 = vrot.slane %v1763, %v1772
        %1775 = vset.pattern.permute.xlu0 0
        %1776 = vperm.xlu0 %1775, %v1765
        %v1777 = vpop.permute.xlu0 %1776
        %v1779 = vmul.f32 %v1769, %v1777
        %v1780 = vmul.f32 %v1773, %v1777
        %v1781 = vadd.f32 %v1754, %v1779
        %v1782 = vadd.f32 %v1755, %v1780
        %s1783 = scalar_lea.vmem %s3, 116
        %v1784 = vld [vmem:[%s1783] sm:$0xf]
        %v1785 = vlaneseq
        %v1786 = vshrl.u32 %v1785, 7
        %v1787 = vsub.s32 1, %v1786
        %v1788 = vrot.slane %v1762, %v1787
        %v1789 = vlaneseq
        %v1790 = vshrl.u32 %v1789, 7
        %v1791 = vsub.s32 1, %v1790
        %v1792 = vrot.slane %v1763, %v1791
        %1794 = vset.pattern.permute.xlu0 0
        %1795 = vperm.xlu0 %1794, %v1784
        %v1796 = vpop.permute.xlu0 %1795
        %v1798 = vmul.f32 %v1788, %v1796
        %v1799 = vmul.f32 %v1792, %v1796
        %v1800 = vadd.f32 %v1781, %v1798
        %v1801 = vadd.f32 %v1782, %v1799
        %s1802 = scalar_lea.vmem %s3, 120
        %v1803 = vld [vmem:[%s1802] sm:$0xf]
        %v1804 = vlaneseq
        %v1805 = vshrl.u32 %v1804, 7
        %v1806 = vsub.s32 2, %v1805
        %v1807 = vrot.slane %v1762, %v1806
        %v1808 = vlaneseq
        %v1809 = vshrl.u32 %v1808, 7
        %v1810 = vsub.s32 2, %v1809
        %v1811 = vrot.slane %v1763, %v1810
        %1813 = vset.pattern.permute.xlu0 0
        %1814 = vperm.xlu0 %1813, %v1803
        %v1815 = vpop.permute.xlu0 %1814
        %v1817 = vmul.f32 %v1807, %v1815
        %v1818 = vmul.f32 %v1811, %v1815
        %v1819 = vadd.f32 %v1800, %v1817
        %v1820 = vadd.f32 %v1801, %v1818
        %s1821 = scalar_lea.vmem %s3, 124
        %v1822 = vld [vmem:[%s1821] sm:$0xf]
        %v1823 = vlaneseq
        %v1824 = vshrl.u32 %v1823, 7
        %v1825 = vsub.s32 3, %v1824
        %v1826 = vrot.slane %v1762, %v1825
        %v1827 = vlaneseq
        %v1828 = vshrl.u32 %v1827, 7
        %v1829 = vsub.s32 3, %v1828
        %v1830 = vrot.slane %v1763, %v1829
        %1832 = vset.pattern.permute.xlu0 0
        %1833 = vperm.xlu0 %1832, %v1822
        %v1834 = vpop.permute.xlu0 %1833
        %v1836 = vmul.f32 %v1826, %v1834
        %v1837 = vmul.f32 %v1830, %v1834
        %v1838 = vadd.f32 %v1819, %v1836
        %v1839 = vadd.f32 %v1820, %v1837
        %1840 = vrot.lane.b32.xlu0 %v1177, 111
        %v1841 = vpop.permute.xlu0 %1840
        %1842 = vrot.lane.b32.xlu0 %v1178, 111
        %v1843 = vpop.permute.xlu0 %1842
        %v1844 = vsel %vm1070, %v1841, %v1843
        %v1845 = vsel %vm1070, %v1843, %v1841
        %v1846 = vmul.f32 %v1844, %v350
        %v1847 = vmul.f32 %v1845, %v351
        %s1848 = scalar_lea.vmem %s3, 128
        %v1849 = vld [vmem:[%s1848] sm:$0xf]
        %v1850 = vlaneseq
        %v1851 = vshrl.u32 %v1850, 7
        %v1852 = vsub.s32 0, %v1851
        %v1853 = vrot.slane %v1846, %v1852
        %v1854 = vlaneseq
        %v1855 = vshrl.u32 %v1854, 7
        %v1856 = vsub.s32 0, %v1855
        %v1857 = vrot.slane %v1847, %v1856
        %1859 = vset.pattern.permute.xlu0 0
        %1860 = vperm.xlu0 %1859, %v1849
        %v1861 = vpop.permute.xlu0 %1860
        %v1863 = vmul.f32 %v1853, %v1861
        %v1864 = vmul.f32 %v1857, %v1861
        %v1865 = vadd.f32 %v1838, %v1863
        %v1866 = vadd.f32 %v1839, %v1864
        %s1867 = scalar_lea.vmem %s3, 132
        %v1868 = vld [vmem:[%s1867] sm:$0xf]
        %v1869 = vlaneseq
        %v1870 = vshrl.u32 %v1869, 7
        %v1871 = vsub.s32 1, %v1870
        %v1872 = vrot.slane %v1846, %v1871
        %v1873 = vlaneseq
        %v1874 = vshrl.u32 %v1873, 7
        %v1875 = vsub.s32 1, %v1874
        %v1876 = vrot.slane %v1847, %v1875
        %1878 = vset.pattern.permute.xlu0 0
        %1879 = vperm.xlu0 %1878, %v1868
        %v1880 = vpop.permute.xlu0 %1879
        %v1882 = vmul.f32 %v1872, %v1880
        %v1883 = vmul.f32 %v1876, %v1880
        %v1884 = vadd.f32 %v1865, %v1882
        %v1885 = vadd.f32 %v1866, %v1883
        %s1886 = scalar_lea.vmem %s3, 136
        %v1887 = vld [vmem:[%s1886] sm:$0xf]
        %v1888 = vlaneseq
        %v1889 = vshrl.u32 %v1888, 7
        %v1890 = vsub.s32 2, %v1889
        %v1891 = vrot.slane %v1846, %v1890
        %v1892 = vlaneseq
        %v1893 = vshrl.u32 %v1892, 7
        %v1894 = vsub.s32 2, %v1893
        %v1895 = vrot.slane %v1847, %v1894
        %1897 = vset.pattern.permute.xlu0 0
        %1898 = vperm.xlu0 %1897, %v1887
        %v1899 = vpop.permute.xlu0 %1898
        %v1901 = vmul.f32 %v1891, %v1899
        %v1902 = vmul.f32 %v1895, %v1899
        %v1903 = vadd.f32 %v1884, %v1901
        %v1904 = vadd.f32 %v1885, %v1902
        %s1905 = scalar_lea.vmem %s3, 140
        %v1906 = vld [vmem:[%s1905] sm:$0xf]
        %v1907 = vlaneseq
        %v1908 = vshrl.u32 %v1907, 7
        %v1909 = vsub.s32 3, %v1908
        %v1910 = vrot.slane %v1846, %v1909
        %v1911 = vlaneseq
        %v1912 = vshrl.u32 %v1911, 7
        %v1913 = vsub.s32 3, %v1912
        %v1914 = vrot.slane %v1847, %v1913
        %1916 = vset.pattern.permute.xlu0 0
        %1917 = vperm.xlu0 %1916, %v1906
        %v1918 = vpop.permute.xlu0 %1917
        %v1920 = vmul.f32 %v1910, %v1918
        %v1921 = vmul.f32 %v1914, %v1918
        %v1922 = vadd.f32 %v1903, %v1920
        %v1923 = vadd.f32 %v1904, %v1921
        %1925 = vset.pattern.permute.xlu0 0
        %1926 = vperm.xlu0 %1925, %v353
        %v1927 = vpop.permute.xlu0 %1926
        %v1929 = vadd.f32 %v1922, %v1927
        %v1930 = vadd.f32 %v1923, %v1927
        %v1931 = vsel %vm1158, %v1929, 0.0
        %v1932 = vsel %vm1158, %v1930, 0.0
        %v1933 = vadd.f32 %v1931, %v1932
        %1934 = vadd.xlane.f32.xlu0 %v1933
        %v1935 = vpop.xlane.xlu0 %1934
        %v1936 = vmul.f32 %v1929, %v1929
        %v1937 = vmul.f32 %v1930, %v1930
        %v1938 = vsel %vm1158, %v1936, 0.0
        %v1939 = vsel %vm1158, %v1937, 0.0
        %v1940 = vadd.f32 %v1938, %v1939
        %1941 = vadd.xlane.f32.xlu0 %v1940
        %v1942 = vpop.xlane.xlu0 %1941
        %s1943 = smul.u32 %s23, 2
        %v1946 = vcombine.low %v1929, %v1930
        %s1948 = smul.u32 %s1943, 2
        %s1949 = smul.addr %s1948, 4
        %s1950 = scalar_lea.vmem [#allocation2], %s1949
        %1951 = vst [vmem:[%s1950] sm:$0xff] %v1946
        %s1952 = scalar_lea.vmem %s293, 8
        %v1953 = vld [vmem:[%s1952] sm:$0xff]
        %v1955 = vcombine.high %v1953, %v1953
        %1957 = vrot.lane.b32.xlu0 %v1953, 17
        %v1958 = vpop.permute.xlu0 %1957
        %1959 = vrot.lane.b32.xlu0 %v1955, 17
        %v1960 = vpop.permute.xlu0 %1959
        %v1961 = vsel %vm362, %v1958, %v1960
        %v1962 = vsel %vm362, %v1960, %v1958
        %v1963 = vmul.f32 %v1962, %v344
        %v1964 = vmul.f32 %v1961, %v345
        %v1965 = vld [vmem:[%s1] sm:$0xf]
        %v1966 = vlaneseq
        %v1967 = vshrl.u32 %v1966, 7
        %v1968 = vsub.s32 0, %v1967
        %v1969 = vrot.slane %v1963, %v1968
        %v1970 = vlaneseq
        %v1971 = vshrl.u32 %v1970, 7
        %v1972 = vsub.s32 0, %v1971
        %v1973 = vrot.slane %v1964, %v1972
        %1975 = vset.pattern.permute.xlu0 0
        %1976 = vperm.xlu0 %1975, %v1965
        %v1977 = vpop.permute.xlu0 %1976
        %v1979 = vmul.f32 %v1969, %v1977
        %v1980 = vmul.f32 %v1973, %v1977
        %v1981 = vld [vmem:[%s383] sm:$0xf]
        %v1982 = vlaneseq
        %v1983 = vshrl.u32 %v1982, 7
        %v1984 = vsub.s32 1, %v1983
        %v1985 = vrot.slane %v1963, %v1984
        %v1986 = vlaneseq
        %v1987 = vshrl.u32 %v1986, 7
        %v1988 = vsub.s32 1, %v1987
        %v1989 = vrot.slane %v1964, %v1988
        %1991 = vset.pattern.permute.xlu0 0
        %1992 = vperm.xlu0 %1991, %v1981
        %v1993 = vpop.permute.xlu0 %1992
        %v1995 = vmul.f32 %v1985, %v1993
        %v1996 = vmul.f32 %v1989, %v1993
        %v1997 = vadd.f32 %v1979, %v1995
        %v1998 = vadd.f32 %v1980, %v1996
        %v1999 = vld [vmem:[%s402] sm:$0xf]
        %v2000 = vlaneseq
        %v2001 = vshrl.u32 %v2000, 7
        %v2002 = vsub.s32 2, %v2001
        %v2003 = vrot.slane %v1963, %v2002
        %v2004 = vlaneseq
        %v2005 = vshrl.u32 %v2004, 7
        %v2006 = vsub.s32 2, %v2005
        %v2007 = vrot.slane %v1964, %v2006
        %2009 = vset.pattern.permute.xlu0 0
        %2010 = vperm.xlu0 %2009, %v1999
        %v2011 = vpop.permute.xlu0 %2010
        %v2013 = vmul.f32 %v2003, %v2011
        %v2014 = vmul.f32 %v2007, %v2011
        %v2015 = vadd.f32 %v1997, %v2013
        %v2016 = vadd.f32 %v1998, %v2014
        %v2017 = vld [vmem:[%s421] sm:$0xf]
        %v2018 = vlaneseq
        %v2019 = vshrl.u32 %v2018, 7
        %v2020 = vsub.s32 3, %v2019
        %v2021 = vrot.slane %v1963, %v2020
        %v2022 = vlaneseq
        %v2023 = vshrl.u32 %v2022, 7
        %v2024 = vsub.s32 3, %v2023
        %v2025 = vrot.slane %v1964, %v2024
        %2027 = vset.pattern.permute.xlu0 0
        %2028 = vperm.xlu0 %2027, %v2017
        %v2029 = vpop.permute.xlu0 %2028
        %v2031 = vmul.f32 %v2021, %v2029
        %v2032 = vmul.f32 %v2025, %v2029
        %v2033 = vadd.f32 %v2015, %v2031
        %v2034 = vadd.f32 %v2016, %v2032
        %2035 = vrot.lane.b32.xlu0 %v1953, 16
        %v2036 = vpop.permute.xlu0 %2035
        %2037 = vrot.lane.b32.xlu0 %v1955, 16
        %v2038 = vpop.permute.xlu0 %2037
        %v2039 = vsel %vm444, %v2036, %v2038
        %v2040 = vsel %vm444, %v2038, %v2036
        %v2041 = vmul.f32 %v2040, %v324
        %v2042 = vmul.f32 %v2039, %v325
        %v2043 = vld [vmem:[%s449] sm:$0xf]
        %v2044 = vlaneseq
        %v2045 = vshrl.u32 %v2044, 7
        %v2046 = vsub.s32 0, %v2045
        %v2047 = vrot.slane %v2041, %v2046
        %v2048 = vlaneseq
        %v2049 = vshrl.u32 %v2048, 7
        %v2050 = vsub.s32 0, %v2049
        %v2051 = vrot.slane %v2042, %v2050
        %2053 = vset.pattern.permute.xlu0 0
        %2054 = vperm.xlu0 %2053, %v2043
        %v2055 = vpop.permute.xlu0 %2054
        %v2057 = vmul.f32 %v2047, %v2055
        %v2058 = vmul.f32 %v2051, %v2055
        %v2059 = vadd.f32 %v2033, %v2057
        %v2060 = vadd.f32 %v2034, %v2058
        %v2061 = vld [vmem:[%s468] sm:$0xf]
        %v2062 = vlaneseq
        %v2063 = vshrl.u32 %v2062, 7
        %v2064 = vsub.s32 1, %v2063
        %v2065 = vrot.slane %v2041, %v2064
        %v2066 = vlaneseq
        %v2067 = vshrl.u32 %v2066, 7
        %v2068 = vsub.s32 1, %v2067
        %v2069 = vrot.slane %v2042, %v2068
        %2071 = vset.pattern.permute.xlu0 0
        %2072 = vperm.xlu0 %2071, %v2061
        %v2073 = vpop.permute.xlu0 %2072
        %v2075 = vmul.f32 %v2065, %v2073
        %v2076 = vmul.f32 %v2069, %v2073
        %v2077 = vadd.f32 %v2059, %v2075
        %v2078 = vadd.f32 %v2060, %v2076
        %v2079 = vld [vmem:[%s487] sm:$0xf]
        %v2080 = vlaneseq
        %v2081 = vshrl.u32 %v2080, 7
        %v2082 = vsub.s32 2, %v2081
        %v2083 = vrot.slane %v2041, %v2082
        %v2084 = vlaneseq
        %v2085 = vshrl.u32 %v2084, 7
        %v2086 = vsub.s32 2, %v2085
        %v2087 = vrot.slane %v2042, %v2086
        %2089 = vset.pattern.permute.xlu0 0
        %2090 = vperm.xlu0 %2089, %v2079
        %v2091 = vpop.permute.xlu0 %2090
        %v2093 = vmul.f32 %v2083, %v2091
        %v2094 = vmul.f32 %v2087, %v2091
        %v2095 = vadd.f32 %v2077, %v2093
        %v2096 = vadd.f32 %v2078, %v2094
        %v2097 = vld [vmem:[%s506] sm:$0xf]
        %v2098 = vlaneseq
        %v2099 = vshrl.u32 %v2098, 7
        %v2100 = vsub.s32 3, %v2099
        %v2101 = vrot.slane %v2041, %v2100
        %v2102 = vlaneseq
        %v2103 = vshrl.u32 %v2102, 7
        %v2104 = vsub.s32 3, %v2103
        %v2105 = vrot.slane %v2042, %v2104
        %2107 = vset.pattern.permute.xlu0 0
        %2108 = vperm.xlu0 %2107, %v2097
        %v2109 = vpop.permute.xlu0 %2108
        %v2111 = vmul.f32 %v2101, %v2109
        %v2112 = vmul.f32 %v2105, %v2109
        %v2113 = vadd.f32 %v2095, %v2111
        %v2114 = vadd.f32 %v2096, %v2112
        %2115 = vrot.lane.b32.xlu0 %v1953, 15
        %v2116 = vpop.permute.xlu0 %2115
        %2117 = vrot.lane.b32.xlu0 %v1955, 15
        %v2118 = vpop.permute.xlu0 %2117
        %v2119 = vsel %vm529, %v2116, %v2118
        %v2120 = vsel %vm529, %v2118, %v2116
        %v2121 = vmul.f32 %v2120, %v346
        %v2122 = vmul.f32 %v2119, %v347
        %v2123 = vld [vmem:[%s534] sm:$0xf]
        %v2124 = vlaneseq
        %v2125 = vshrl.u32 %v2124, 7
        %v2126 = vsub.s32 0, %v2125
        %v2127 = vrot.slane %v2121, %v2126
        %v2128 = vlaneseq
        %v2129 = vshrl.u32 %v2128, 7
        %v2130 = vsub.s32 0, %v2129
        %v2131 = vrot.slane %v2122, %v2130
        %2133 = vset.pattern.permute.xlu0 0
        %2134 = vperm.xlu0 %2133, %v2123
        %v2135 = vpop.permute.xlu0 %2134
        %v2137 = vmul.f32 %v2127, %v2135
        %v2138 = vmul.f32 %v2131, %v2135
        %v2139 = vadd.f32 %v2113, %v2137
        %v2140 = vadd.f32 %v2114, %v2138
        %v2141 = vld [vmem:[%s553] sm:$0xf]
        %v2142 = vlaneseq
        %v2143 = vshrl.u32 %v2142, 7
        %v2144 = vsub.s32 1, %v2143
        %v2145 = vrot.slane %v2121, %v2144
        %v2146 = vlaneseq
        %v2147 = vshrl.u32 %v2146, 7
        %v2148 = vsub.s32 1, %v2147
        %v2149 = vrot.slane %v2122, %v2148
        %2151 = vset.pattern.permute.xlu0 0
        %2152 = vperm.xlu0 %2151, %v2141
        %v2153 = vpop.permute.xlu0 %2152
        %v2155 = vmul.f32 %v2145, %v2153
        %v2156 = vmul.f32 %v2149, %v2153
        %v2157 = vadd.f32 %v2139, %v2155
        %v2158 = vadd.f32 %v2140, %v2156
        %v2159 = vld [vmem:[%s572] sm:$0xf]
        %v2160 = vlaneseq
        %v2161 = vshrl.u32 %v2160, 7
        %v2162 = vsub.s32 2, %v2161
        %v2163 = vrot.slane %v2121, %v2162
        %v2164 = vlaneseq
        %v2165 = vshrl.u32 %v2164, 7
        %v2166 = vsub.s32 2, %v2165
        %v2167 = vrot.slane %v2122, %v2166
        %2169 = vset.pattern.permute.xlu0 0
        %2170 = vperm.xlu0 %2169, %v2159
        %v2171 = vpop.permute.xlu0 %2170
        %v2173 = vmul.f32 %v2163, %v2171
        %v2174 = vmul.f32 %v2167, %v2171
        %v2175 = vadd.f32 %v2157, %v2173
        %v2176 = vadd.f32 %v2158, %v2174
        %v2177 = vld [vmem:[%s591] sm:$0xf]
        %v2178 = vlaneseq
        %v2179 = vshrl.u32 %v2178, 7
        %v2180 = vsub.s32 3, %v2179
        %v2181 = vrot.slane %v2121, %v2180
        %v2182 = vlaneseq
        %v2183 = vshrl.u32 %v2182, 7
        %v2184 = vsub.s32 3, %v2183
        %v2185 = vrot.slane %v2122, %v2184
        %2187 = vset.pattern.permute.xlu0 0
        %2188 = vperm.xlu0 %2187, %v2177
        %v2189 = vpop.permute.xlu0 %2188
        %v2191 = vmul.f32 %v2181, %v2189
        %v2192 = vmul.f32 %v2185, %v2189
        %v2193 = vadd.f32 %v2175, %v2191
        %v2194 = vadd.f32 %v2176, %v2192
        %2195 = vrot.lane.b32.xlu0 %v1953, 1
        %v2196 = vpop.permute.xlu0 %2195
        %2197 = vrot.lane.b32.xlu0 %v1955, 1
        %v2198 = vpop.permute.xlu0 %2197
        %v2199 = vsel %vm614, %v2196, %v2198
        %v2200 = vsel %vm614, %v2198, %v2196
        %v2201 = vmul.f32 %v2200, %v336
        %v2202 = vmul.f32 %v2199, %v337
        %v2203 = vld [vmem:[%s619] sm:$0xf]
        %v2204 = vlaneseq
        %v2205 = vshrl.u32 %v2204, 7
        %v2206 = vsub.s32 0, %v2205
        %v2207 = vrot.slane %v2201, %v2206
        %v2208 = vlaneseq
        %v2209 = vshrl.u32 %v2208, 7
        %v2210 = vsub.s32 0, %v2209
        %v2211 = vrot.slane %v2202, %v2210
        %2213 = vset.pattern.permute.xlu0 0
        %2214 = vperm.xlu0 %2213, %v2203
        %v2215 = vpop.permute.xlu0 %2214
        %v2217 = vmul.f32 %v2207, %v2215
        %v2218 = vmul.f32 %v2211, %v2215
        %v2219 = vadd.f32 %v2193, %v2217
        %v2220 = vadd.f32 %v2194, %v2218
        %v2221 = vld [vmem:[%s638] sm:$0xf]
        %v2222 = vlaneseq
        %v2223 = vshrl.u32 %v2222, 7
        %v2224 = vsub.s32 1, %v2223
        %v2225 = vrot.slane %v2201, %v2224
        %v2226 = vlaneseq
        %v2227 = vshrl.u32 %v2226, 7
        %v2228 = vsub.s32 1, %v2227
        %v2229 = vrot.slane %v2202, %v2228
        %2231 = vset.pattern.permute.xlu0 0
        %2232 = vperm.xlu0 %2231, %v2221
        %v2233 = vpop.permute.xlu0 %2232
        %v2235 = vmul.f32 %v2225, %v2233
        %v2236 = vmul.f32 %v2229, %v2233
        %v2237 = vadd.f32 %v2219, %v2235
        %v2238 = vadd.f32 %v2220, %v2236
        %v2239 = vld [vmem:[%s657] sm:$0xf]
        %v2240 = vlaneseq
        %v2241 = vshrl.u32 %v2240, 7
        %v2242 = vsub.s32 2, %v2241
        %v2243 = vrot.slane %v2201, %v2242
        %v2244 = vlaneseq
        %v2245 = vshrl.u32 %v2244, 7
        %v2246 = vsub.s32 2, %v2245
        %v2247 = vrot.slane %v2202, %v2246
        %2249 = vset.pattern.permute.xlu0 0
        %2250 = vperm.xlu0 %2249, %v2239
        %v2251 = vpop.permute.xlu0 %2250
        %v2253 = vmul.f32 %v2243, %v2251
        %v2254 = vmul.f32 %v2247, %v2251
        %v2255 = vadd.f32 %v2237, %v2253
        %v2256 = vadd.f32 %v2238, %v2254
        %v2257 = vld [vmem:[%s676] sm:$0xf]
        %v2258 = vlaneseq
        %v2259 = vshrl.u32 %v2258, 7
        %v2260 = vsub.s32 3, %v2259
        %v2261 = vrot.slane %v2201, %v2260
        %v2262 = vlaneseq
        %v2263 = vshrl.u32 %v2262, 7
        %v2264 = vsub.s32 3, %v2263
        %v2265 = vrot.slane %v2202, %v2264
        %2267 = vset.pattern.permute.xlu0 0
        %2268 = vperm.xlu0 %2267, %v2257
        %v2269 = vpop.permute.xlu0 %2268
        %v2271 = vmul.f32 %v2261, %v2269
        %v2272 = vmul.f32 %v2265, %v2269
        %v2273 = vadd.f32 %v2255, %v2271
        %v2274 = vadd.f32 %v2256, %v2272
        %v2275 = vld [vmem:[%s695] sm:$0xf]
        %v2276 = vlaneseq
        %v2277 = vshrl.u32 %v2276, 7
        %v2278 = vsub.s32 0, %v2277
        %v2279 = vrot.slane %v1953, %v2278
        %v2280 = vlaneseq
        %v2281 = vshrl.u32 %v2280, 7
        %v2282 = vsub.s32 4, %v2281
        %v2283 = vrot.slane %v1953, %v2282
        %v2286 = vlaneseq
        %v2287 = vshrl.u32 %v2286, 7
        %v2288 = vsub.s32 0, %v2287
        %v2289 = vrot.slane %v2279, %v2288
        %v2290 = vlaneseq
        %v2291 = vshrl.u32 %v2290, 7
        %v2292 = vsub.s32 0, %v2291
        %v2293 = vrot.slane %v2283, %v2292
        %2295 = vset.pattern.permute.xlu0 0
        %2296 = vperm.xlu0 %2295, %v2275
        %v2297 = vpop.permute.xlu0 %2296
        %v2299 = vmul.f32 %v2289, %v2297
        %v2300 = vmul.f32 %v2293, %v2297
        %v2301 = vadd.f32 %v2273, %v2299
        %v2302 = vadd.f32 %v2274, %v2300
        %v2303 = vld [vmem:[%s724] sm:$0xf]
        %v2304 = vlaneseq
        %v2305 = vshrl.u32 %v2304, 7
        %v2306 = vsub.s32 1, %v2305
        %v2307 = vrot.slane %v1953, %v2306
        %v2308 = vlaneseq
        %v2309 = vshrl.u32 %v2308, 7
        %v2310 = vsub.s32 5, %v2309
        %v2311 = vrot.slane %v1953, %v2310
        %v2314 = vlaneseq
        %v2315 = vshrl.u32 %v2314, 7
        %v2316 = vsub.s32 1, %v2315
        %v2317 = vrot.slane %v2307, %v2316
        %v2318 = vlaneseq
        %v2319 = vshrl.u32 %v2318, 7
        %v2320 = vsub.s32 1, %v2319
        %v2321 = vrot.slane %v2311, %v2320
        %2323 = vset.pattern.permute.xlu0 0
        %2324 = vperm.xlu0 %2323, %v2303
        %v2325 = vpop.permute.xlu0 %2324
        %v2327 = vmul.f32 %v2317, %v2325
        %v2328 = vmul.f32 %v2321, %v2325
        %v2329 = vadd.f32 %v2301, %v2327
        %v2330 = vadd.f32 %v2302, %v2328
        %v2331 = vld [vmem:[%s753] sm:$0xf]
        %v2332 = vlaneseq
        %v2333 = vshrl.u32 %v2332, 7
        %v2334 = vsub.s32 2, %v2333
        %v2335 = vrot.slane %v1953, %v2334
        %v2336 = vlaneseq
        %v2337 = vshrl.u32 %v2336, 7
        %v2338 = vsub.s32 6, %v2337
        %v2339 = vrot.slane %v1953, %v2338
        %v2342 = vlaneseq
        %v2343 = vshrl.u32 %v2342, 7
        %v2344 = vsub.s32 2, %v2343
        %v2345 = vrot.slane %v2335, %v2344
        %v2346 = vlaneseq
        %v2347 = vshrl.u32 %v2346, 7
        %v2348 = vsub.s32 2, %v2347
        %v2349 = vrot.slane %v2339, %v2348
        %2351 = vset.pattern.permute.xlu0 0
        %2352 = vperm.xlu0 %2351, %v2331
        %v2353 = vpop.permute.xlu0 %2352
        %v2355 = vmul.f32 %v2345, %v2353
        %v2356 = vmul.f32 %v2349, %v2353
        %v2357 = vadd.f32 %v2329, %v2355
        %v2358 = vadd.f32 %v2330, %v2356
        %v2359 = vld [vmem:[%s782] sm:$0xf]
        %v2360 = vlaneseq
        %v2361 = vshrl.u32 %v2360, 7
        %v2362 = vsub.s32 3, %v2361
        %v2363 = vrot.slane %v1953, %v2362
        %v2364 = vlaneseq
        %v2365 = vshrl.u32 %v2364, 7
        %v2366 = vsub.s32 7, %v2365
        %v2367 = vrot.slane %v1953, %v2366
        %v2370 = vlaneseq
        %v2371 = vshrl.u32 %v2370, 7
        %v2372 = vsub.s32 3, %v2371
        %v2373 = vrot.slane %v2363, %v2372
        %v2374 = vlaneseq
        %v2375 = vshrl.u32 %v2374, 7
        %v2376 = vsub.s32 3, %v2375
        %v2377 = vrot.slane %v2367, %v2376
        %2379 = vset.pattern.permute.xlu0 0
        %2380 = vperm.xlu0 %2379, %v2359
        %v2381 = vpop.permute.xlu0 %2380
        %v2383 = vmul.f32 %v2373, %v2381
        %v2384 = vmul.f32 %v2377, %v2381
        %v2385 = vadd.f32 %v2357, %v2383
        %v2386 = vadd.f32 %v2358, %v2384
        %2387 = vrot.lane.b32.xlu0 %v1953, 127
        %v2388 = vpop.permute.xlu0 %2387
        %2389 = vrot.lane.b32.xlu0 %v1955, 127
        %v2390 = vpop.permute.xlu0 %2389
        %v2391 = vsel %vm815, %v2388, %v2390
        %v2392 = vsel %vm815, %v2390, %v2388
        %v2393 = vmul.f32 %v2391, %v342
        %v2394 = vmul.f32 %v2392, %v343
        %v2395 = vld [vmem:[%s820] sm:$0xf]
        %v2396 = vlaneseq
        %v2397 = vshrl.u32 %v2396, 7
        %v2398 = vsub.s32 0, %v2397
        %v2399 = vrot.slane %v2393, %v2398
        %v2400 = vlaneseq
        %v2401 = vshrl.u32 %v2400, 7
        %v2402 = vsub.s32 0, %v2401
        %v2403 = vrot.slane %v2394, %v2402
        %2405 = vset.pattern.permute.xlu0 0
        %2406 = vperm.xlu0 %2405, %v2395
        %v2407 = vpop.permute.xlu0 %2406
        %v2409 = vmul.f32 %v2399, %v2407
        %v2410 = vmul.f32 %v2403, %v2407
        %v2411 = vadd.f32 %v2385, %v2409
        %v2412 = vadd.f32 %v2386, %v2410
        %v2413 = vld [vmem:[%s839] sm:$0xf]
        %v2414 = vlaneseq
        %v2415 = vshrl.u32 %v2414, 7
        %v2416 = vsub.s32 1, %v2415
        %v2417 = vrot.slane %v2393, %v2416
        %v2418 = vlaneseq
        %v2419 = vshrl.u32 %v2418, 7
        %v2420 = vsub.s32 1, %v2419
        %v2421 = vrot.slane %v2394, %v2420
        %2423 = vset.pattern.permute.xlu0 0
        %2424 = vperm.xlu0 %2423, %v2413
        %v2425 = vpop.permute.xlu0 %2424
        %v2427 = vmul.f32 %v2417, %v2425
        %v2428 = vmul.f32 %v2421, %v2425
        %v2429 = vadd.f32 %v2411, %v2427
        %v2430 = vadd.f32 %v2412, %v2428
        %v2431 = vld [vmem:[%s858] sm:$0xf]
        %v2432 = vlaneseq
        %v2433 = vshrl.u32 %v2432, 7
        %v2434 = vsub.s32 2, %v2433
        %v2435 = vrot.slane %v2393, %v2434
        %v2436 = vlaneseq
        %v2437 = vshrl.u32 %v2436, 7
        %v2438 = vsub.s32 2, %v2437
        %v2439 = vrot.slane %v2394, %v2438
        %2441 = vset.pattern.permute.xlu0 0
        %2442 = vperm.xlu0 %2441, %v2431
        %v2443 = vpop.permute.xlu0 %2442
        %v2445 = vmul.f32 %v2435, %v2443
        %v2446 = vmul.f32 %v2439, %v2443
        %v2447 = vadd.f32 %v2429, %v2445
        %v2448 = vadd.f32 %v2430, %v2446
        %v2449 = vld [vmem:[%s877] sm:$0xf]
        %v2450 = vlaneseq
        %v2451 = vshrl.u32 %v2450, 7
        %v2452 = vsub.s32 3, %v2451
        %v2453 = vrot.slane %v2393, %v2452
        %v2454 = vlaneseq
        %v2455 = vshrl.u32 %v2454, 7
        %v2456 = vsub.s32 3, %v2455
        %v2457 = vrot.slane %v2394, %v2456
        %2459 = vset.pattern.permute.xlu0 0
        %2460 = vperm.xlu0 %2459, %v2449
        %v2461 = vpop.permute.xlu0 %2460
        %v2463 = vmul.f32 %v2453, %v2461
        %v2464 = vmul.f32 %v2457, %v2461
        %v2465 = vadd.f32 %v2447, %v2463
        %v2466 = vadd.f32 %v2448, %v2464
        %2467 = vrot.lane.b32.xlu0 %v1953, 113
        %v2468 = vpop.permute.xlu0 %2467
        %2469 = vrot.lane.b32.xlu0 %v1955, 113
        %v2470 = vpop.permute.xlu0 %2469
        %v2471 = vsel %vm900, %v2468, %v2470
        %v2472 = vsel %vm900, %v2470, %v2468
        %v2473 = vmul.f32 %v2471, %v348
        %v2474 = vmul.f32 %v2472, %v349
        %v2475 = vld [vmem:[%s905] sm:$0xf]
        %v2476 = vlaneseq
        %v2477 = vshrl.u32 %v2476, 7
        %v2478 = vsub.s32 0, %v2477
        %v2479 = vrot.slane %v2473, %v2478
        %v2480 = vlaneseq
        %v2481 = vshrl.u32 %v2480, 7
        %v2482 = vsub.s32 0, %v2481
        %v2483 = vrot.slane %v2474, %v2482
        %2485 = vset.pattern.permute.xlu0 0
        %2486 = vperm.xlu0 %2485, %v2475
        %v2487 = vpop.permute.xlu0 %2486
        %v2489 = vmul.f32 %v2479, %v2487
        %v2490 = vmul.f32 %v2483, %v2487
        %v2491 = vadd.f32 %v2465, %v2489
        %v2492 = vadd.f32 %v2466, %v2490
        %v2493 = vld [vmem:[%s924] sm:$0xf]
        %v2494 = vlaneseq
        %v2495 = vshrl.u32 %v2494, 7
        %v2496 = vsub.s32 1, %v2495
        %v2497 = vrot.slane %v2473, %v2496
        %v2498 = vlaneseq
        %v2499 = vshrl.u32 %v2498, 7
        %v2500 = vsub.s32 1, %v2499
        %v2501 = vrot.slane %v2474, %v2500
        %2503 = vset.pattern.permute.xlu0 0
        %2504 = vperm.xlu0 %2503, %v2493
        %v2505 = vpop.permute.xlu0 %2504
        %v2507 = vmul.f32 %v2497, %v2505
        %v2508 = vmul.f32 %v2501, %v2505
        %v2509 = vadd.f32 %v2491, %v2507
        %v2510 = vadd.f32 %v2492, %v2508
        %v2511 = vld [vmem:[%s943] sm:$0xf]
        %v2512 = vlaneseq
        %v2513 = vshrl.u32 %v2512, 7
        %v2514 = vsub.s32 2, %v2513
        %v2515 = vrot.slane %v2473, %v2514
        %v2516 = vlaneseq
        %v2517 = vshrl.u32 %v2516, 7
        %v2518 = vsub.s32 2, %v2517
        %v2519 = vrot.slane %v2474, %v2518
        %2521 = vset.pattern.permute.xlu0 0
        %2522 = vperm.xlu0 %2521, %v2511
        %v2523 = vpop.permute.xlu0 %2522
        %v2525 = vmul.f32 %v2515, %v2523
        %v2526 = vmul.f32 %v2519, %v2523
        %v2527 = vadd.f32 %v2509, %v2525
        %v2528 = vadd.f32 %v2510, %v2526
        %v2529 = vld [vmem:[%s962] sm:$0xf]
        %v2530 = vlaneseq
        %v2531 = vshrl.u32 %v2530, 7
        %v2532 = vsub.s32 3, %v2531
        %v2533 = vrot.slane %v2473, %v2532
        %v2534 = vlaneseq
        %v2535 = vshrl.u32 %v2534, 7
        %v2536 = vsub.s32 3, %v2535
        %v2537 = vrot.slane %v2474, %v2536
        %2539 = vset.pattern.permute.xlu0 0
        %2540 = vperm.xlu0 %2539, %v2529
        %v2541 = vpop.permute.xlu0 %2540
        %v2543 = vmul.f32 %v2533, %v2541
        %v2544 = vmul.f32 %v2537, %v2541
        %v2545 = vadd.f32 %v2527, %v2543
        %v2546 = vadd.f32 %v2528, %v2544
        %2547 = vrot.lane.b32.xlu0 %v1953, 112
        %v2548 = vpop.permute.xlu0 %2547
        %2549 = vrot.lane.b32.xlu0 %v1955, 112
        %v2550 = vpop.permute.xlu0 %2549
        %v2551 = vsel %vm985, %v2548, %v2550
        %v2552 = vsel %vm985, %v2550, %v2548
        %v2553 = vmul.f32 %v2551, %v330
        %v2554 = vmul.f32 %v2552, %v331
        %v2555 = vld [vmem:[%s990] sm:$0xf]
        %v2556 = vlaneseq
        %v2557 = vshrl.u32 %v2556, 7
        %v2558 = vsub.s32 0, %v2557
        %v2559 = vrot.slane %v2553, %v2558
        %v2560 = vlaneseq
        %v2561 = vshrl.u32 %v2560, 7
        %v2562 = vsub.s32 0, %v2561
        %v2563 = vrot.slane %v2554, %v2562
        %2565 = vset.pattern.permute.xlu0 0
        %2566 = vperm.xlu0 %2565, %v2555
        %v2567 = vpop.permute.xlu0 %2566
        %v2569 = vmul.f32 %v2559, %v2567
        %v2570 = vmul.f32 %v2563, %v2567
        %v2571 = vadd.f32 %v2545, %v2569
        %v2572 = vadd.f32 %v2546, %v2570
        %v2573 = vld [vmem:[%s1009] sm:$0xf]
        %v2574 = vlaneseq
        %v2575 = vshrl.u32 %v2574, 7
        %v2576 = vsub.s32 1, %v2575
        %v2577 = vrot.slane %v2553, %v2576
        %v2578 = vlaneseq
        %v2579 = vshrl.u32 %v2578, 7
        %v2580 = vsub.s32 1, %v2579
        %v2581 = vrot.slane %v2554, %v2580
        %2583 = vset.pattern.permute.xlu0 0
        %2584 = vperm.xlu0 %2583, %v2573
        %v2585 = vpop.permute.xlu0 %2584
        %v2587 = vmul.f32 %v2577, %v2585
        %v2588 = vmul.f32 %v2581, %v2585
        %v2589 = vadd.f32 %v2571, %v2587
        %v2590 = vadd.f32 %v2572, %v2588
        %v2591 = vld [vmem:[%s1028] sm:$0xf]
        %v2592 = vlaneseq
        %v2593 = vshrl.u32 %v2592, 7
        %v2594 = vsub.s32 2, %v2593
        %v2595 = vrot.slane %v2553, %v2594
        %v2596 = vlaneseq
        %v2597 = vshrl.u32 %v2596, 7
        %v2598 = vsub.s32 2, %v2597
        %v2599 = vrot.slane %v2554, %v2598
        %2601 = vset.pattern.permute.xlu0 0
        %2602 = vperm.xlu0 %2601, %v2591
        %v2603 = vpop.permute.xlu0 %2602
        %v2605 = vmul.f32 %v2595, %v2603
        %v2606 = vmul.f32 %v2599, %v2603
        %v2607 = vadd.f32 %v2589, %v2605
        %v2608 = vadd.f32 %v2590, %v2606
        %v2609 = vld [vmem:[%s1047] sm:$0xf]
        %v2610 = vlaneseq
        %v2611 = vshrl.u32 %v2610, 7
        %v2612 = vsub.s32 3, %v2611
        %v2613 = vrot.slane %v2553, %v2612
        %v2614 = vlaneseq
        %v2615 = vshrl.u32 %v2614, 7
        %v2616 = vsub.s32 3, %v2615
        %v2617 = vrot.slane %v2554, %v2616
        %2619 = vset.pattern.permute.xlu0 0
        %2620 = vperm.xlu0 %2619, %v2609
        %v2621 = vpop.permute.xlu0 %2620
        %v2623 = vmul.f32 %v2613, %v2621
        %v2624 = vmul.f32 %v2617, %v2621
        %v2625 = vadd.f32 %v2607, %v2623
        %v2626 = vadd.f32 %v2608, %v2624
        %2627 = vrot.lane.b32.xlu0 %v1953, 111
        %v2628 = vpop.permute.xlu0 %2627
        %2629 = vrot.lane.b32.xlu0 %v1955, 111
        %v2630 = vpop.permute.xlu0 %2629
        %v2631 = vsel %vm1070, %v2628, %v2630
        %v2632 = vsel %vm1070, %v2630, %v2628
        %v2633 = vmul.f32 %v2631, %v350
        %v2634 = vmul.f32 %v2632, %v351
        %v2635 = vld [vmem:[%s1075] sm:$0xf]
        %v2636 = vlaneseq
        %v2637 = vshrl.u32 %v2636, 7
        %v2638 = vsub.s32 0, %v2637
        %v2639 = vrot.slane %v2633, %v2638
        %v2640 = vlaneseq
        %v2641 = vshrl.u32 %v2640, 7
        %v2642 = vsub.s32 0, %v2641
        %v2643 = vrot.slane %v2634, %v2642
        %2645 = vset.pattern.permute.xlu0 0
        %2646 = vperm.xlu0 %2645, %v2635
        %v2647 = vpop.permute.xlu0 %2646
        %v2649 = vmul.f32 %v2639, %v2647
        %v2650 = vmul.f32 %v2643, %v2647
        %v2651 = vadd.f32 %v2625, %v2649
        %v2652 = vadd.f32 %v2626, %v2650
        %v2653 = vld [vmem:[%s1094] sm:$0xf]
        %v2654 = vlaneseq
        %v2655 = vshrl.u32 %v2654, 7
        %v2656 = vsub.s32 1, %v2655
        %v2657 = vrot.slane %v2633, %v2656
        %v2658 = vlaneseq
        %v2659 = vshrl.u32 %v2658, 7
        %v2660 = vsub.s32 1, %v2659
        %v2661 = vrot.slane %v2634, %v2660
        %2663 = vset.pattern.permute.xlu0 0
        %2664 = vperm.xlu0 %2663, %v2653
        %v2665 = vpop.permute.xlu0 %2664
        %v2667 = vmul.f32 %v2657, %v2665
        %v2668 = vmul.f32 %v2661, %v2665
        %v2669 = vadd.f32 %v2651, %v2667
        %v2670 = vadd.f32 %v2652, %v2668
        %v2671 = vld [vmem:[%s1113] sm:$0xf]
        %v2672 = vlaneseq
        %v2673 = vshrl.u32 %v2672, 7
        %v2674 = vsub.s32 2, %v2673
        %v2675 = vrot.slane %v2633, %v2674
        %v2676 = vlaneseq
        %v2677 = vshrl.u32 %v2676, 7
        %v2678 = vsub.s32 2, %v2677
        %v2679 = vrot.slane %v2634, %v2678
        %2681 = vset.pattern.permute.xlu0 0
        %2682 = vperm.xlu0 %2681, %v2671
        %v2683 = vpop.permute.xlu0 %2682
        %v2685 = vmul.f32 %v2675, %v2683
        %v2686 = vmul.f32 %v2679, %v2683
        %v2687 = vadd.f32 %v2669, %v2685
        %v2688 = vadd.f32 %v2670, %v2686
        %v2689 = vld [vmem:[%s1132] sm:$0xf]
        %v2690 = vlaneseq
        %v2691 = vshrl.u32 %v2690, 7
        %v2692 = vsub.s32 3, %v2691
        %v2693 = vrot.slane %v2633, %v2692
        %v2694 = vlaneseq
        %v2695 = vshrl.u32 %v2694, 7
        %v2696 = vsub.s32 3, %v2695
        %v2697 = vrot.slane %v2634, %v2696
        %2699 = vset.pattern.permute.xlu0 0
        %2700 = vperm.xlu0 %2699, %v2689
        %v2701 = vpop.permute.xlu0 %2700
        %v2703 = vmul.f32 %v2693, %v2701
        %v2704 = vmul.f32 %v2697, %v2701
        %v2705 = vadd.f32 %v2687, %v2703
        %v2706 = vadd.f32 %v2688, %v2704
        %v2707 = vadd.f32 %v2705, %v1154
        %v2708 = vadd.f32 %v2706, %v1154
        %v2709 = vsel %vm1158, %v2707, 0.0
        %v2710 = vsel %vm1158, %v2708, 0.0
        %v2711 = vadd.f32 %v2709, %v2710
        %2712 = vadd.xlane.f32.xlu0 %v2711
        %v2713 = vpop.xlane.xlu0 %2712
        %v2714 = vmul.f32 %v2713, 0.00390625
        %v2715 = vsub.f32 %v2707, %v2714
        %v2716 = vsub.f32 %v2708, %v2714
        %v2717 = vmul.f32 %v2715, %v2715
        %v2718 = vmul.f32 %v2716, %v2716
        %v2719 = vsel %vm1158, %v2717, 0.0
        %v2720 = vsel %vm1158, %v2718, 0.0
        %v2721 = vadd.f32 %v2719, %v2720
        %2722 = vadd.xlane.f32.xlu0 %v2721
        %v2723 = vpop.xlane.xlu0 %2722
        %v2724 = vmul.f32 %v2723, 0.00390625
        %v2725 = vadd.f32 %v2724, 1e-05
        %v2726 = vrsqrt.pop %v2725
        %v2727 = vmul.f32 %v2715, %v2726
        %v2728 = vmul.f32 %v2716, %v2726
        %2729 = vrot.lane.b32.xlu0 %v2727, 17
        %v2730 = vpop.permute.xlu0 %2729
        %2731 = vrot.lane.b32.xlu0 %v2728, 17
        %v2732 = vpop.permute.xlu0 %2731
        %v2733 = vsel %vm362, %v2730, %v2732
        %v2734 = vsel %vm362, %v2732, %v2730
        %v2735 = vmul.f32 %v2734, %v344
        %v2736 = vmul.f32 %v2733, %v345
        %v2737 = vld [vmem:[%s3] sm:$0xf]
        %v2738 = vlaneseq
        %v2739 = vshrl.u32 %v2738, 7
        %v2740 = vsub.s32 0, %v2739
        %v2741 = vrot.slane %v2735, %v2740
        %v2742 = vlaneseq
        %v2743 = vshrl.u32 %v2742, 7
        %v2744 = vsub.s32 0, %v2743
        %v2745 = vrot.slane %v2736, %v2744
        %2747 = vset.pattern.permute.xlu0 0
        %2748 = vperm.xlu0 %2747, %v2737
        %v2749 = vpop.permute.xlu0 %2748
        %v2751 = vmul.f32 %v2741, %v2749
        %v2752 = vmul.f32 %v2745, %v2749
        %v2753 = vld [vmem:[%s1203] sm:$0xf]
        %v2754 = vlaneseq
        %v2755 = vshrl.u32 %v2754, 7
        %v2756 = vsub.s32 1, %v2755
        %v2757 = vrot.slane %v2735, %v2756
        %v2758 = vlaneseq
        %v2759 = vshrl.u32 %v2758, 7
        %v2760 = vsub.s32 1, %v2759
        %v2761 = vrot.slane %v2736, %v2760
        %2763 = vset.pattern.permute.xlu0 0
        %2764 = vperm.xlu0 %2763, %v2753
        %v2765 = vpop.permute.xlu0 %2764
        %v2767 = vmul.f32 %v2757, %v2765
        %v2768 = vmul.f32 %v2761, %v2765
        %v2769 = vadd.f32 %v2751, %v2767
        %v2770 = vadd.f32 %v2752, %v2768
        %v2771 = vld [vmem:[%s1222] sm:$0xf]
        %v2772 = vlaneseq
        %v2773 = vshrl.u32 %v2772, 7
        %v2774 = vsub.s32 2, %v2773
        %v2775 = vrot.slane %v2735, %v2774
        %v2776 = vlaneseq
        %v2777 = vshrl.u32 %v2776, 7
        %v2778 = vsub.s32 2, %v2777
        %v2779 = vrot.slane %v2736, %v2778
        %2781 = vset.pattern.permute.xlu0 0
        %2782 = vperm.xlu0 %2781, %v2771
        %v2783 = vpop.permute.xlu0 %2782
        %v2785 = vmul.f32 %v2775, %v2783
        %v2786 = vmul.f32 %v2779, %v2783
        %v2787 = vadd.f32 %v2769, %v2785
        %v2788 = vadd.f32 %v2770, %v2786
        %v2789 = vld [vmem:[%s1241] sm:$0xf]
        %v2790 = vlaneseq
        %v2791 = vshrl.u32 %v2790, 7
        %v2792 = vsub.s32 3, %v2791
        %v2793 = vrot.slane %v2735, %v2792
        %v2794 = vlaneseq
        %v2795 = vshrl.u32 %v2794, 7
        %v2796 = vsub.s32 3, %v2795
        %v2797 = vrot.slane %v2736, %v2796
        %2799 = vset.pattern.permute.xlu0 0
        %2800 = vperm.xlu0 %2799, %v2789
        %v2801 = vpop.permute.xlu0 %2800
        %v2803 = vmul.f32 %v2793, %v2801
        %v2804 = vmul.f32 %v2797, %v2801
        %v2805 = vadd.f32 %v2787, %v2803
        %v2806 = vadd.f32 %v2788, %v2804
        %2807 = vrot.lane.b32.xlu0 %v2727, 16
        %v2808 = vpop.permute.xlu0 %2807
        %2809 = vrot.lane.b32.xlu0 %v2728, 16
        %v2810 = vpop.permute.xlu0 %2809
        %v2811 = vsel %vm444, %v2808, %v2810
        %v2812 = vsel %vm444, %v2810, %v2808
        %v2813 = vmul.f32 %v2812, %v324
        %v2814 = vmul.f32 %v2811, %v325
        %v2815 = vld [vmem:[%s1268] sm:$0xf]
        %v2816 = vlaneseq
        %v2817 = vshrl.u32 %v2816, 7
        %v2818 = vsub.s32 0, %v2817
        %v2819 = vrot.slane %v2813, %v2818
        %v2820 = vlaneseq
        %v2821 = vshrl.u32 %v2820, 7
        %v2822 = vsub.s32 0, %v2821
        %v2823 = vrot.slane %v2814, %v2822
        %2825 = vset.pattern.permute.xlu0 0
        %2826 = vperm.xlu0 %2825, %v2815
        %v2827 = vpop.permute.xlu0 %2826
        %v2829 = vmul.f32 %v2819, %v2827
        %v2830 = vmul.f32 %v2823, %v2827
        %v2831 = vadd.f32 %v2805, %v2829
        %v2832 = vadd.f32 %v2806, %v2830
        %v2833 = vld [vmem:[%s1287] sm:$0xf]
        %v2834 = vlaneseq
        %v2835 = vshrl.u32 %v2834, 7
        %v2836 = vsub.s32 1, %v2835
        %v2837 = vrot.slane %v2813, %v2836
        %v2838 = vlaneseq
        %v2839 = vshrl.u32 %v2838, 7
        %v2840 = vsub.s32 1, %v2839
        %v2841 = vrot.slane %v2814, %v2840
        %2843 = vset.pattern.permute.xlu0 0
        %2844 = vperm.xlu0 %2843, %v2833
        %v2845 = vpop.permute.xlu0 %2844
        %v2847 = vmul.f32 %v2837, %v2845
        %v2848 = vmul.f32 %v2841, %v2845
        %v2849 = vadd.f32 %v2831, %v2847
        %v2850 = vadd.f32 %v2832, %v2848
        %v2851 = vld [vmem:[%s1306] sm:$0xf]
        %v2852 = vlaneseq
        %v2853 = vshrl.u32 %v2852, 7
        %v2854 = vsub.s32 2, %v2853
        %v2855 = vrot.slane %v2813, %v2854
        %v2856 = vlaneseq
        %v2857 = vshrl.u32 %v2856, 7
        %v2858 = vsub.s32 2, %v2857
        %v2859 = vrot.slane %v2814, %v2858
        %2861 = vset.pattern.permute.xlu0 0
        %2862 = vperm.xlu0 %2861, %v2851
        %v2863 = vpop.permute.xlu0 %2862
        %v2865 = vmul.f32 %v2855, %v2863
        %v2866 = vmul.f32 %v2859, %v2863
        %v2867 = vadd.f32 %v2849, %v2865
        %v2868 = vadd.f32 %v2850, %v2866
        %v2869 = vld [vmem:[%s1325] sm:$0xf]
        %v2870 = vlaneseq
        %v2871 = vshrl.u32 %v2870, 7
        %v2872 = vsub.s32 3, %v2871
        %v2873 = vrot.slane %v2813, %v2872
        %v2874 = vlaneseq
        %v2875 = vshrl.u32 %v2874, 7
        %v2876 = vsub.s32 3, %v2875
        %v2877 = vrot.slane %v2814, %v2876
        %2879 = vset.pattern.permute.xlu0 0
        %2880 = vperm.xlu0 %2879, %v2869
        %v2881 = vpop.permute.xlu0 %2880
        %v2883 = vmul.f32 %v2873, %v2881
        %v2884 = vmul.f32 %v2877, %v2881
        %v2885 = vadd.f32 %v2867, %v2883
        %v2886 = vadd.f32 %v2868, %v2884
        %2887 = vrot.lane.b32.xlu0 %v2727, 15
        %v2888 = vpop.permute.xlu0 %2887
        %2889 = vrot.lane.b32.xlu0 %v2728, 15
        %v2890 = vpop.permute.xlu0 %2889
        %v2891 = vsel %vm529, %v2888, %v2890
        %v2892 = vsel %vm529, %v2890, %v2888
        %v2893 = vmul.f32 %v2892, %v346
        %v2894 = vmul.f32 %v2891, %v347
        %v2895 = vld [vmem:[%s1352] sm:$0xf]
        %v2896 = vlaneseq
        %v2897 = vshrl.u32 %v2896, 7
        %v2898 = vsub.s32 0, %v2897
        %v2899 = vrot.slane %v2893, %v2898
        %v2900 = vlaneseq
        %v2901 = vshrl.u32 %v2900, 7
        %v2902 = vsub.s32 0, %v2901
        %v2903 = vrot.slane %v2894, %v2902
        %2905 = vset.pattern.permute.xlu0 0
        %2906 = vperm.xlu0 %2905, %v2895
        %v2907 = vpop.permute.xlu0 %2906
        %v2909 = vmul.f32 %v2899, %v2907
        %v2910 = vmul.f32 %v2903, %v2907
        %v2911 = vadd.f32 %v2885, %v2909
        %v2912 = vadd.f32 %v2886, %v2910
        %v2913 = vld [vmem:[%s1371] sm:$0xf]
        %v2914 = vlaneseq
        %v2915 = vshrl.u32 %v2914, 7
        %v2916 = vsub.s32 1, %v2915
        %v2917 = vrot.slane %v2893, %v2916
        %v2918 = vlaneseq
        %v2919 = vshrl.u32 %v2918, 7
        %v2920 = vsub.s32 1, %v2919
        %v2921 = vrot.slane %v2894, %v2920
        %2923 = vset.pattern.permute.xlu0 0
        %2924 = vperm.xlu0 %2923, %v2913
        %v2925 = vpop.permute.xlu0 %2924
        %v2927 = vmul.f32 %v2917, %v2925
        %v2928 = vmul.f32 %v2921, %v2925
        %v2929 = vadd.f32 %v2911, %v2927
        %v2930 = vadd.f32 %v2912, %v2928
        %v2931 = vld [vmem:[%s1390] sm:$0xf]
        %v2932 = vlaneseq
        %v2933 = vshrl.u32 %v2932, 7
        %v2934 = vsub.s32 2, %v2933
        %v2935 = vrot.slane %v2893, %v2934
        %v2936 = vlaneseq
        %v2937 = vshrl.u32 %v2936, 7
        %v2938 = vsub.s32 2, %v2937
        %v2939 = vrot.slane %v2894, %v2938
        %2941 = vset.pattern.permute.xlu0 0
        %2942 = vperm.xlu0 %2941, %v2931
        %v2943 = vpop.permute.xlu0 %2942
        %v2945 = vmul.f32 %v2935, %v2943
        %v2946 = vmul.f32 %v2939, %v2943
        %v2947 = vadd.f32 %v2929, %v2945
        %v2948 = vadd.f32 %v2930, %v2946
        %v2949 = vld [vmem:[%s1409] sm:$0xf]
        %v2950 = vlaneseq
        %v2951 = vshrl.u32 %v2950, 7
        %v2952 = vsub.s32 3, %v2951
        %v2953 = vrot.slane %v2893, %v2952
        %v2954 = vlaneseq
        %v2955 = vshrl.u32 %v2954, 7
        %v2956 = vsub.s32 3, %v2955
        %v2957 = vrot.slane %v2894, %v2956
        %2959 = vset.pattern.permute.xlu0 0
        %2960 = vperm.xlu0 %2959, %v2949
        %v2961 = vpop.permute.xlu0 %2960
        %v2963 = vmul.f32 %v2953, %v2961
        %v2964 = vmul.f32 %v2957, %v2961
        %v2965 = vadd.f32 %v2947, %v2963
        %v2966 = vadd.f32 %v2948, %v2964
        %2967 = vrot.lane.b32.xlu0 %v2727, 1
        %v2968 = vpop.permute.xlu0 %2967
        %2969 = vrot.lane.b32.xlu0 %v2728, 1
        %v2970 = vpop.permute.xlu0 %2969
        %v2971 = vsel %vm614, %v2968, %v2970
        %v2972 = vsel %vm614, %v2970, %v2968
        %v2973 = vmul.f32 %v2972, %v336
        %v2974 = vmul.f32 %v2971, %v337
        %v2975 = vld [vmem:[%s1436] sm:$0xf]
        %v2976 = vlaneseq
        %v2977 = vshrl.u32 %v2976, 7
        %v2978 = vsub.s32 0, %v2977
        %v2979 = vrot.slane %v2973, %v2978
        %v2980 = vlaneseq
        %v2981 = vshrl.u32 %v2980, 7
        %v2982 = vsub.s32 0, %v2981
        %v2983 = vrot.slane %v2974, %v2982
        %2985 = vset.pattern.permute.xlu0 0
        %2986 = vperm.xlu0 %2985, %v2975
        %v2987 = vpop.permute.xlu0 %2986
        %v2989 = vmul.f32 %v2979, %v2987
        %v2990 = vmul.f32 %v2983, %v2987
        %v2991 = vadd.f32 %v2965, %v2989
        %v2992 = vadd.f32 %v2966, %v2990
        %v2993 = vld [vmem:[%s1455] sm:$0xf]
        %v2994 = vlaneseq
        %v2995 = vshrl.u32 %v2994, 7
        %v2996 = vsub.s32 1, %v2995
        %v2997 = vrot.slane %v2973, %v2996
        %v2998 = vlaneseq
        %v2999 = vshrl.u32 %v2998, 7
        %v3000 = vsub.s32 1, %v2999
        %v3001 = vrot.slane %v2974, %v3000
        %3003 = vset.pattern.permute.xlu0 0
        %3004 = vperm.xlu0 %3003, %v2993
        %v3005 = vpop.permute.xlu0 %3004
        %v3007 = vmul.f32 %v2997, %v3005
        %v3008 = vmul.f32 %v3001, %v3005
        %v3009 = vadd.f32 %v2991, %v3007
        %v3010 = vadd.f32 %v2992, %v3008
        %v3011 = vld [vmem:[%s1474] sm:$0xf]
        %v3012 = vlaneseq
        %v3013 = vshrl.u32 %v3012, 7
        %v3014 = vsub.s32 2, %v3013
        %v3015 = vrot.slane %v2973, %v3014
        %v3016 = vlaneseq
        %v3017 = vshrl.u32 %v3016, 7
        %v3018 = vsub.s32 2, %v3017
        %v3019 = vrot.slane %v2974, %v3018
        %3021 = vset.pattern.permute.xlu0 0
        %3022 = vperm.xlu0 %3021, %v3011
        %v3023 = vpop.permute.xlu0 %3022
        %v3025 = vmul.f32 %v3015, %v3023
        %v3026 = vmul.f32 %v3019, %v3023
        %v3027 = vadd.f32 %v3009, %v3025
        %v3028 = vadd.f32 %v3010, %v3026
        %v3029 = vld [vmem:[%s1493] sm:$0xf]
        %v3030 = vlaneseq
        %v3031 = vshrl.u32 %v3030, 7
        %v3032 = vsub.s32 3, %v3031
        %v3033 = vrot.slane %v2973, %v3032
        %v3034 = vlaneseq
        %v3035 = vshrl.u32 %v3034, 7
        %v3036 = vsub.s32 3, %v3035
        %v3037 = vrot.slane %v2974, %v3036
        %3039 = vset.pattern.permute.xlu0 0
        %3040 = vperm.xlu0 %3039, %v3029
        %v3041 = vpop.permute.xlu0 %3040
        %v3043 = vmul.f32 %v3033, %v3041
        %v3044 = vmul.f32 %v3037, %v3041
        %v3045 = vadd.f32 %v3027, %v3043
        %v3046 = vadd.f32 %v3028, %v3044
        %v3047 = vld [vmem:[%s1512] sm:$0xf]
        %v3048 = vlaneseq
        %v3049 = vshrl.u32 %v3048, 7
        %v3050 = vsub.s32 0, %v3049
        %v3051 = vrot.slane %v2727, %v3050
        %v3052 = vlaneseq
        %v3053 = vshrl.u32 %v3052, 7
        %v3054 = vsub.s32 0, %v3053
        %v3055 = vrot.slane %v2728, %v3054
        %3057 = vset.pattern.permute.xlu0 0
        %3058 = vperm.xlu0 %3057, %v3047
        %v3059 = vpop.permute.xlu0 %3058
        %v3061 = vmul.f32 %v3051, %v3059
        %v3062 = vmul.f32 %v3055, %v3059
        %v3063 = vadd.f32 %v3045, %v3061
        %v3064 = vadd.f32 %v3046, %v3062
        %v3065 = vld [vmem:[%s1531] sm:$0xf]
        %v3066 = vlaneseq
        %v3067 = vshrl.u32 %v3066, 7
        %v3068 = vsub.s32 1, %v3067
        %v3069 = vrot.slane %v2727, %v3068
        %v3070 = vlaneseq
        %v3071 = vshrl.u32 %v3070, 7
        %v3072 = vsub.s32 1, %v3071
        %v3073 = vrot.slane %v2728, %v3072
        %3075 = vset.pattern.permute.xlu0 0
        %3076 = vperm.xlu0 %3075, %v3065
        %v3077 = vpop.permute.xlu0 %3076
        %v3079 = vmul.f32 %v3069, %v3077
        %v3080 = vmul.f32 %v3073, %v3077
        %v3081 = vadd.f32 %v3063, %v3079
        %v3082 = vadd.f32 %v3064, %v3080
        %v3083 = vld [vmem:[%s1550] sm:$0xf]
        %v3084 = vlaneseq
        %v3085 = vshrl.u32 %v3084, 7
        %v3086 = vsub.s32 2, %v3085
        %v3087 = vrot.slane %v2727, %v3086
        %v3088 = vlaneseq
        %v3089 = vshrl.u32 %v3088, 7
        %v3090 = vsub.s32 2, %v3089
        %v3091 = vrot.slane %v2728, %v3090
        %3093 = vset.pattern.permute.xlu0 0
        %3094 = vperm.xlu0 %3093, %v3083
        %v3095 = vpop.permute.xlu0 %3094
        %v3097 = vmul.f32 %v3087, %v3095
        %v3098 = vmul.f32 %v3091, %v3095
        %v3099 = vadd.f32 %v3081, %v3097
        %v3100 = vadd.f32 %v3082, %v3098
        %v3101 = vld [vmem:[%s1569] sm:$0xf]
        %v3102 = vlaneseq
        %v3103 = vshrl.u32 %v3102, 7
        %v3104 = vsub.s32 3, %v3103
        %v3105 = vrot.slane %v2727, %v3104
        %v3106 = vlaneseq
        %v3107 = vshrl.u32 %v3106, 7
        %v3108 = vsub.s32 3, %v3107
        %v3109 = vrot.slane %v2728, %v3108
        %3111 = vset.pattern.permute.xlu0 0
        %3112 = vperm.xlu0 %3111, %v3101
        %v3113 = vpop.permute.xlu0 %3112
        %v3115 = vmul.f32 %v3105, %v3113
        %v3116 = vmul.f32 %v3109, %v3113
        %v3117 = vadd.f32 %v3099, %v3115
        %v3118 = vadd.f32 %v3100, %v3116
        %3119 = vrot.lane.b32.xlu0 %v2727, 127
        %v3120 = vpop.permute.xlu0 %3119
        %3121 = vrot.lane.b32.xlu0 %v2728, 127
        %v3122 = vpop.permute.xlu0 %3121
        %v3123 = vsel %vm815, %v3120, %v3122
        %v3124 = vsel %vm815, %v3122, %v3120
        %v3125 = vmul.f32 %v3123, %v342
        %v3126 = vmul.f32 %v3124, %v343
        %v3127 = vld [vmem:[%s1596] sm:$0xf]
        %v3128 = vlaneseq
        %v3129 = vshrl.u32 %v3128, 7
        %v3130 = vsub.s32 0, %v3129
        %v3131 = vrot.slane %v3125, %v3130
        %v3132 = vlaneseq
        %v3133 = vshrl.u32 %v3132, 7
        %v3134 = vsub.s32 0, %v3133
        %v3135 = vrot.slane %v3126, %v3134
        %3137 = vset.pattern.permute.xlu0 0
        %3138 = vperm.xlu0 %3137, %v3127
        %v3139 = vpop.permute.xlu0 %3138
        %v3141 = vmul.f32 %v3131, %v3139
        %v3142 = vmul.f32 %v3135, %v3139
        %v3143 = vadd.f32 %v3117, %v3141
        %v3144 = vadd.f32 %v3118, %v3142
        %v3145 = vld [vmem:[%s1615] sm:$0xf]
        %v3146 = vlaneseq
        %v3147 = vshrl.u32 %v3146, 7
        %v3148 = vsub.s32 1, %v3147
        %v3149 = vrot.slane %v3125, %v3148
        %v3150 = vlaneseq
        %v3151 = vshrl.u32 %v3150, 7
        %v3152 = vsub.s32 1, %v3151
        %v3153 = vrot.slane %v3126, %v3152
        %3155 = vset.pattern.permute.xlu0 0
        %3156 = vperm.xlu0 %3155, %v3145
        %v3157 = vpop.permute.xlu0 %3156
        %v3159 = vmul.f32 %v3149, %v3157
        %v3160 = vmul.f32 %v3153, %v3157
        %v3161 = vadd.f32 %v3143, %v3159
        %v3162 = vadd.f32 %v3144, %v3160
        %v3163 = vld [vmem:[%s1634] sm:$0xf]
        %v3164 = vlaneseq
        %v3165 = vshrl.u32 %v3164, 7
        %v3166 = vsub.s32 2, %v3165
        %v3167 = vrot.slane %v3125, %v3166
        %v3168 = vlaneseq
        %v3169 = vshrl.u32 %v3168, 7
        %v3170 = vsub.s32 2, %v3169
        %v3171 = vrot.slane %v3126, %v3170
        %3173 = vset.pattern.permute.xlu0 0
        %3174 = vperm.xlu0 %3173, %v3163
        %v3175 = vpop.permute.xlu0 %3174
        %v3177 = vmul.f32 %v3167, %v3175
        %v3178 = vmul.f32 %v3171, %v3175
        %v3179 = vadd.f32 %v3161, %v3177
        %v3180 = vadd.f32 %v3162, %v3178
        %v3181 = vld [vmem:[%s1653] sm:$0xf]
        %v3182 = vlaneseq
        %v3183 = vshrl.u32 %v3182, 7
        %v3184 = vsub.s32 3, %v3183
        %v3185 = vrot.slane %v3125, %v3184
        %v3186 = vlaneseq
        %v3187 = vshrl.u32 %v3186, 7
        %v3188 = vsub.s32 3, %v3187
        %v3189 = vrot.slane %v3126, %v3188
        %3191 = vset.pattern.permute.xlu0 0
        %3192 = vperm.xlu0 %3191, %v3181
        %v3193 = vpop.permute.xlu0 %3192
        %v3195 = vmul.f32 %v3185, %v3193
        %v3196 = vmul.f32 %v3189, %v3193
        %v3197 = vadd.f32 %v3179, %v3195
        %v3198 = vadd.f32 %v3180, %v3196
        %3199 = vrot.lane.b32.xlu0 %v2727, 113
        %v3200 = vpop.permute.xlu0 %3199
        %3201 = vrot.lane.b32.xlu0 %v2728, 113
        %v3202 = vpop.permute.xlu0 %3201
        %v3203 = vsel %vm900, %v3200, %v3202
        %v3204 = vsel %vm900, %v3202, %v3200
        %v3205 = vmul.f32 %v3203, %v348
        %v3206 = vmul.f32 %v3204, %v349
        %v3207 = vld [vmem:[%s1680] sm:$0xf]
        %v3208 = vlaneseq
        %v3209 = vshrl.u32 %v3208, 7
        %v3210 = vsub.s32 0, %v3209
        %v3211 = vrot.slane %v3205, %v3210
        %v3212 = vlaneseq
        %v3213 = vshrl.u32 %v3212, 7
        %v3214 = vsub.s32 0, %v3213
        %v3215 = vrot.slane %v3206, %v3214
        %3217 = vset.pattern.permute.xlu0 0
        %3218 = vperm.xlu0 %3217, %v3207
        %v3219 = vpop.permute.xlu0 %3218
        %v3221 = vmul.f32 %v3211, %v3219
        %v3222 = vmul.f32 %v3215, %v3219
        %v3223 = vadd.f32 %v3197, %v3221
        %v3224 = vadd.f32 %v3198, %v3222
        %v3225 = vld [vmem:[%s1699] sm:$0xf]
        %v3226 = vlaneseq
        %v3227 = vshrl.u32 %v3226, 7
        %v3228 = vsub.s32 1, %v3227
        %v3229 = vrot.slane %v3205, %v3228
        %v3230 = vlaneseq
        %v3231 = vshrl.u32 %v3230, 7
        %v3232 = vsub.s32 1, %v3231
        %v3233 = vrot.slane %v3206, %v3232
        %3235 = vset.pattern.permute.xlu0 0
        %3236 = vperm.xlu0 %3235, %v3225
        %v3237 = vpop.permute.xlu0 %3236
        %v3239 = vmul.f32 %v3229, %v3237
        %v3240 = vmul.f32 %v3233, %v3237
        %v3241 = vadd.f32 %v3223, %v3239
        %v3242 = vadd.f32 %v3224, %v3240
        %v3243 = vld [vmem:[%s1718] sm:$0xf]
        %v3244 = vlaneseq
        %v3245 = vshrl.u32 %v3244, 7
        %v3246 = vsub.s32 2, %v3245
        %v3247 = vrot.slane %v3205, %v3246
        %v3248 = vlaneseq
        %v3249 = vshrl.u32 %v3248, 7
        %v3250 = vsub.s32 2, %v3249
        %v3251 = vrot.slane %v3206, %v3250
        %3253 = vset.pattern.permute.xlu0 0
        %3254 = vperm.xlu0 %3253, %v3243
        %v3255 = vpop.permute.xlu0 %3254
        %v3257 = vmul.f32 %v3247, %v3255
        %v3258 = vmul.f32 %v3251, %v3255
        %v3259 = vadd.f32 %v3241, %v3257
        %v3260 = vadd.f32 %v3242, %v3258
        %v3261 = vld [vmem:[%s1737] sm:$0xf]
        %v3262 = vlaneseq
        %v3263 = vshrl.u32 %v3262, 7
        %v3264 = vsub.s32 3, %v3263
        %v3265 = vrot.slane %v3205, %v3264
        %v3266 = vlaneseq
        %v3267 = vshrl.u32 %v3266, 7
        %v3268 = vsub.s32 3, %v3267
        %v3269 = vrot.slane %v3206, %v3268
        %3271 = vset.pattern.permute.xlu0 0
        %3272 = vperm.xlu0 %3271, %v3261
        %v3273 = vpop.permute.xlu0 %3272
        %v3275 = vmul.f32 %v3265, %v3273
        %v3276 = vmul.f32 %v3269, %v3273
        %v3277 = vadd.f32 %v3259, %v3275
        %v3278 = vadd.f32 %v3260, %v3276
        %3279 = vrot.lane.b32.xlu0 %v2727, 112
        %v3280 = vpop.permute.xlu0 %3279
        %3281 = vrot.lane.b32.xlu0 %v2728, 112
        %v3282 = vpop.permute.xlu0 %3281
        %v3283 = vsel %vm985, %v3280, %v3282
        %v3284 = vsel %vm985, %v3282, %v3280
        %v3285 = vmul.f32 %v3283, %v330
        %v3286 = vmul.f32 %v3284, %v331
        %v3287 = vld [vmem:[%s1764] sm:$0xf]
        %v3288 = vlaneseq
        %v3289 = vshrl.u32 %v3288, 7
        %v3290 = vsub.s32 0, %v3289
        %v3291 = vrot.slane %v3285, %v3290
        %v3292 = vlaneseq
        %v3293 = vshrl.u32 %v3292, 7
        %v3294 = vsub.s32 0, %v3293
        %v3295 = vrot.slane %v3286, %v3294
        %3297 = vset.pattern.permute.xlu0 0
        %3298 = vperm.xlu0 %3297, %v3287
        %v3299 = vpop.permute.xlu0 %3298
        %v3301 = vmul.f32 %v3291, %v3299
        %v3302 = vmul.f32 %v3295, %v3299
        %v3303 = vadd.f32 %v3277, %v3301
        %v3304 = vadd.f32 %v3278, %v3302
        %v3305 = vld [vmem:[%s1783] sm:$0xf]
        %v3306 = vlaneseq
        %v3307 = vshrl.u32 %v3306, 7
        %v3308 = vsub.s32 1, %v3307
        %v3309 = vrot.slane %v3285, %v3308
        %v3310 = vlaneseq
        %v3311 = vshrl.u32 %v3310, 7
        %v3312 = vsub.s32 1, %v3311
        %v3313 = vrot.slane %v3286, %v3312
        %3315 = vset.pattern.permute.xlu0 0
        %3316 = vperm.xlu0 %3315, %v3305
        %v3317 = vpop.permute.xlu0 %3316
        %v3319 = vmul.f32 %v3309, %v3317
        %v3320 = vmul.f32 %v3313, %v3317
        %v3321 = vadd.f32 %v3303, %v3319
        %v3322 = vadd.f32 %v3304, %v3320
        %v3323 = vld [vmem:[%s1802] sm:$0xf]
        %v3324 = vlaneseq
        %v3325 = vshrl.u32 %v3324, 7
        %v3326 = vsub.s32 2, %v3325
        %v3327 = vrot.slane %v3285, %v3326
        %v3328 = vlaneseq
        %v3329 = vshrl.u32 %v3328, 7
        %v3330 = vsub.s32 2, %v3329
        %v3331 = vrot.slane %v3286, %v3330
        %3333 = vset.pattern.permute.xlu0 0
        %3334 = vperm.xlu0 %3333, %v3323
        %v3335 = vpop.permute.xlu0 %3334
        %v3337 = vmul.f32 %v3327, %v3335
        %v3338 = vmul.f32 %v3331, %v3335
        %v3339 = vadd.f32 %v3321, %v3337
        %v3340 = vadd.f32 %v3322, %v3338
        %v3341 = vld [vmem:[%s1821] sm:$0xf]
        %v3342 = vlaneseq
        %v3343 = vshrl.u32 %v3342, 7
        %v3344 = vsub.s32 3, %v3343
        %v3345 = vrot.slane %v3285, %v3344
        %v3346 = vlaneseq
        %v3347 = vshrl.u32 %v3346, 7
        %v3348 = vsub.s32 3, %v3347
        %v3349 = vrot.slane %v3286, %v3348
        %3351 = vset.pattern.permute.xlu0 0
        %3352 = vperm.xlu0 %3351, %v3341
        %v3353 = vpop.permute.xlu0 %3352
        %v3355 = vmul.f32 %v3345, %v3353
        %v3356 = vmul.f32 %v3349, %v3353
        %v3357 = vadd.f32 %v3339, %v3355
        %v3358 = vadd.f32 %v3340, %v3356
        %3359 = vrot.lane.b32.xlu0 %v2727, 111
        %v3360 = vpop.permute.xlu0 %3359
        %3361 = vrot.lane.b32.xlu0 %v2728, 111
        %v3362 = vpop.permute.xlu0 %3361
        %v3363 = vsel %vm1070, %v3360, %v3362
        %v3364 = vsel %vm1070, %v3362, %v3360
        %v3365 = vmul.f32 %v3363, %v350
        %v3366 = vmul.f32 %v3364, %v351
        %v3367 = vld [vmem:[%s1848] sm:$0xf]
        %v3368 = vlaneseq
        %v3369 = vshrl.u32 %v3368, 7
        %v3370 = vsub.s32 0, %v3369
        %v3371 = vrot.slane %v3365, %v3370
        %v3372 = vlaneseq
        %v3373 = vshrl.u32 %v3372, 7
        %v3374 = vsub.s32 0, %v3373
        %v3375 = vrot.slane %v3366, %v3374
        %3377 = vset.pattern.permute.xlu0 0
        %3378 = vperm.xlu0 %3377, %v3367
        %v3379 = vpop.permute.xlu0 %3378
        %v3381 = vmul.f32 %v3371, %v3379
        %v3382 = vmul.f32 %v3375, %v3379
        %v3383 = vadd.f32 %v3357, %v3381
        %v3384 = vadd.f32 %v3358, %v3382
        %v3385 = vld [vmem:[%s1867] sm:$0xf]
        %v3386 = vlaneseq
        %v3387 = vshrl.u32 %v3386, 7
        %v3388 = vsub.s32 1, %v3387
        %v3389 = vrot.slane %v3365, %v3388
        %v3390 = vlaneseq
        %v3391 = vshrl.u32 %v3390, 7
        %v3392 = vsub.s32 1, %v3391
        %v3393 = vrot.slane %v3366, %v3392
        %3395 = vset.pattern.permute.xlu0 0
        %3396 = vperm.xlu0 %3395, %v3385
        %v3397 = vpop.permute.xlu0 %3396
        %v3399 = vmul.f32 %v3389, %v3397
        %v3400 = vmul.f32 %v3393, %v3397
        %v3401 = vadd.f32 %v3383, %v3399
        %v3402 = vadd.f32 %v3384, %v3400
        %v3403 = vld [vmem:[%s1886] sm:$0xf]
        %v3404 = vlaneseq
        %v3405 = vshrl.u32 %v3404, 7
        %v3406 = vsub.s32 2, %v3405
        %v3407 = vrot.slane %v3365, %v3406
        %v3408 = vlaneseq
        %v3409 = vshrl.u32 %v3408, 7
        %v3410 = vsub.s32 2, %v3409
        %v3411 = vrot.slane %v3366, %v3410
        %3413 = vset.pattern.permute.xlu0 0
        %3414 = vperm.xlu0 %3413, %v3403
        %v3415 = vpop.permute.xlu0 %3414
        %v3417 = vmul.f32 %v3407, %v3415
        %v3418 = vmul.f32 %v3411, %v3415
        %v3419 = vadd.f32 %v3401, %v3417
        %v3420 = vadd.f32 %v3402, %v3418
        %v3421 = vld [vmem:[%s1905] sm:$0xf]
        %v3422 = vlaneseq
        %v3423 = vshrl.u32 %v3422, 7
        %v3424 = vsub.s32 3, %v3423
        %v3425 = vrot.slane %v3365, %v3424
        %v3426 = vlaneseq
        %v3427 = vshrl.u32 %v3426, 7
        %v3428 = vsub.s32 3, %v3427
        %v3429 = vrot.slane %v3366, %v3428
        %3431 = vset.pattern.permute.xlu0 0
        %3432 = vperm.xlu0 %3431, %v3421
        %v3433 = vpop.permute.xlu0 %3432
        %v3435 = vmul.f32 %v3425, %v3433
        %v3436 = vmul.f32 %v3429, %v3433
        %v3437 = vadd.f32 %v3419, %v3435
        %v3438 = vadd.f32 %v3420, %v3436
        %v3439 = vadd.f32 %v3437, %v1927
        %v3440 = vadd.f32 %v3438, %v1927
        %v3441 = vsel %vm1158, %v3439, 0.0
        %v3442 = vsel %vm1158, %v3440, 0.0
        %v3443 = vadd.f32 %v3441, %v3442
        %3444 = vadd.xlane.f32.xlu0 %v3443
        %v3445 = vpop.xlane.xlu0 %3444
        %v3446 = vmul.f32 %v3439, %v3439
        %v3447 = vmul.f32 %v3440, %v3440
        %v3448 = vsel %vm1158, %v3446, 0.0
        %v3449 = vsel %vm1158, %v3447, 0.0
        %v3450 = vadd.f32 %v3448, %v3449
        %3451 = vadd.xlane.f32.xlu0 %v3450
        %v3452 = vpop.xlane.xlu0 %3451
        %s3453 = sadd.s32 %s1943, 1
        %v3456 = vcombine.low %v3439, %v3440
        %s3458 = smul.u32 %s3453, 2
        %s3459 = smul.addr %s3458, 4
        %s3460 = scalar_lea.vmem [#allocation2], %s3459
        %3461 = vst [vmem:[%s3460] sm:$0xff] %v3456
        %v3462 = vadd.f32 %v1935, %v3445
        %v3463 = vadd.f32 %v1942, %v3452
        %v3464 = vld [vmem:[#allocation3] sm:$0xf]
        %v3465 = vadd.f32 %v3464, %v3462
        %vm3466 = vcmask 3072
        %3467 = vst.msk [vmem:[#allocation3] sm:$0xf] %vm3466, %v3465
        %s3468 = scalar_lea.vmem [#allocation3], 4
        %v3469 = vld [vmem:[%s3468] sm:$0xf]
        %v3470 = vadd.f32 %v3469, %v3463
        %3471 = vst.msk [vmem:[%s3468] sm:$0xf] %vm3466, %v3470
      $region52: #{_forward_fused.1} parent=47 // pred_fallthru
        _
      %p3472 = scmp.eq.s32.totalorder %s22, 1
      // Predicated region
      $region57: #{_forward_fused.1} parent=47 // pred_check
        %p3473 = pneg %p3472
      $region58: #{_forward_fused.1} parent=47 // pred_check_branch
        %3475 = sbr.rel (%p3473) target = $region60
      $region59: #{_forward_fused.1} parent=47 // pred_region
        %p3476 = scmp.eq.s32.totalorder %s23, 0
        // Predicated region
        $region61: #{_forward_fused.1} parent=59 // pred_check
          %p3477 = pneg %p3476
        $region62: #{_forward_fused.1} parent=59 // pred_check_branch
          %3479 = sbr.rel (%p3477) target = $region64
        $region63: #{_forward_fused.1} parent=59 // pred_region
          %v3480 = vld [vmem:[#allocation3] sm:$0xf]
          %v3481 = vmul.f32 %v3480, 0.001953125
          %s3482 = scalar_lea.vmem [#allocation3], 4
          %v3483 = vld [vmem:[%s3482] sm:$0xf]
          %v3484 = vmul.f32 %v3483, 0.001953125
          %v3485 = vmul.f32 %v3481, %v3481
          %v3486 = vsub.f32 %v3484, %v3485
          %v3487 = vld [vmem:[%s5] sm:$0xf]
          %v3488 = vadd.f32 %v3486, 1e-05
          %v3489 = vrsqrt.pop %v3488
          %v3490 = vmul.f32 %v3487, %v3489
          %vm3491 = vcmask 3072
          %3492 = vst.msk [vmem:[#allocation4] sm:$0xf] %vm3491, %v3490
          %v3493 = vld [vmem:[%s6] sm:$0xf]
          %v3494 = vmul.f32 %v3481, %v3490
          %v3495 = vsub.f32 %v3493, %v3494
          %s3496 = scalar_lea.vmem [#allocation4], 4
          %3497 = vst.msk [vmem:[%s3496] sm:$0xf] %vm3491, %v3495
        $region64: #{_forward_fused.1} parent=59 // pred_fallthru
          _
        %v3498 = vld [vmem:[#allocation4] sm:$0xf]
        %s3499 = scalar_lea.vmem [#allocation4], 4
        %v3500 = vld [vmem:[%s3499] sm:$0xf]
        %v3501 = vld [vmem:[%s293] sm:$0xff]
        %s3502 = smul.u32 %s23, 2
        %s3503 = smul.u32 %s3502, 2
        %s3504 = smul.addr %s3503, 4
        %s3505 = scalar_lea.vmem [#allocation2], %s3504
        %v3506 = vld [vmem:[%s3505] sm:$0xff]
        %3508 = vset.pattern.permute.xlu0 0
        %3509 = vperm.xlu0 %3508, %v3498
        %v3510 = vpop.permute.xlu0 %3509
        %v3512 = vunpack.c.l.s4 839922192
        %v3513 = vunpack.c.0.s8 %v3512
        %v3514 = vlaneseq
        %v3515 = vshrl.u32 %v3514, 7
        %v3516 = vsub.s32 %v3513, %v3515
        %v3517 = vrot.slane %v3510, %v3516
        %v3519 = vmul.f32 %v3506, %v3517
        %3521 = vset.pattern.permute.xlu0 0
        %3522 = vperm.xlu0 %3521, %v3500
        %v3523 = vpop.permute.xlu0 %3522
        %v3525 = vunpack.c.l.s4 839922192
        %v3526 = vunpack.c.0.s8 %v3525
        %v3527 = vlaneseq
        %v3528 = vshrl.u32 %v3527, 7
        %v3529 = vsub.s32 %v3526, %v3528
        %v3530 = vrot.slane %v3523, %v3529
        %v3532 = vadd.f32 %v3519, %v3530
        %v3533 = vadd.f32 %v3532, %v3501
        %3534 = vst [vmem:[%s301] sm:$0xff] %v3533
        %s3535 = scalar_lea.vmem %s293, 8
        %v3536 = vld [vmem:[%s3535] sm:$0xff]
        %s3537 = sadd.s32 %s3502, 1
        %s3538 = smul.u32 %s3537, 2
        %s3539 = smul.addr %s3538, 4
        %s3540 = scalar_lea.vmem [#allocation2], %s3539
        %v3541 = vld [vmem:[%s3540] sm:$0xff]
        %v3542 = vmul.f32 %v3541, %v3517
        %v3543 = vadd.f32 %v3542, %v3530
        %v3544 = vadd.f32 %v3543, %v3536
        %s3545 = scalar_lea.vmem %s301, 8
        %3546 = vst [vmem:[%s3545] sm:$0xff] %v3544
      $region60: #{_forward_fused.1} parent=47 // pred_fallthru
        _
      %s3547 = smul.u32 %s23, %s22
      %s3548 = smul.u32 2, %s3547
      %p3549 = scmp.lt.s32.totalorder %s3548, 1
      %s3550 = scalar_select %p3549, %s3548, 1
      %s3551 = smul.addr %s3550, 2
      %s3552 = smul.addr %s3551, 4
      %s3553 = scalar_lea.vmem %s7, %s3552
      // Predicated region
      $region65: #{_forward_fused.1} parent=47 // pred_check
        %p3554 = pneg %p202
      $region66: #{_forward_fused.1} parent=47 // pred_check_branch
        %3556 = sbr.rel (%p3554) target = $region68
      $region67: #{_forward_fused.1} parent=47 // pred_region
        %s3557 = smul.u32 %s23, %s22
        %s3558 = smul.u32 2, %s3557
      $region68: #{_forward_fused.1} parent=47 // pred_fallthru
        _
    $region48: #{_forward_fused.1} parent=5 // pred_fallthru
      _
    %p3559 = scmp.le.s32.totalorder 2, %s13
    // Predicated region
    $region69: #{_forward_fused.1} parent=5 // pred_check
      %p3560 = pneg %p3559
    $region70: #{_forward_fused.1} parent=5 // pred_check_branch
      %3562 = sbr.rel (%p3560) target = $region72
    $region71: #{_forward_fused.1} parent=5 // pred_region
      %s3563 = ssub.s32 %s13, 2
      // Predicated region
      $region73: #{_forward_fused.1} parent=71 // pred_check
        %p3564 = pneg %p208
      $region74: #{_forward_fused.1} parent=71 // pred_check_branch
        %3566 = sbr.rel (%p3564) target = $region76
      $region75: #{_forward_fused.1} parent=71 // pred_region
        %s3567 = smul.u32 %s25, %s24
        %s3568 = smul.u32 2, %s3567
        %p3569 = scmp.lt.s32.totalorder %s3568, 1
        %s3570 = scalar_select %p3569, %s3568, 1
        %s3571 = smul.addr %s3570, 2
        %s3572 = smul.addr %s3571, 4
        %s3573 = scalar_lea.vmem %s7, %s3572
      $region76: #{_forward_fused.1} parent=71 // pred_fallthru
        _
    $region72: #{_forward_fused.1} parent=5 // pred_fallthru
      _
  $region6: #{_forward_fused.1} parent=0 // loop_footer
    %s17 = sadd.s32 1, %s13
  $region7: #{_forward_fused.1} parent=0 // loop_footer_branch
    %12 = sbr.rel target = $region3
  $region8: #{_forward_fused.1} parent=0 // loop_exit
    _

</llo_original>
